<compile_context>
chip_gen: v7x
topology: tpu7x:2x2x1
jax: 0.10.0
libtpu: 0.0.40
codegen_flags: <defaults>
</compile_context>

<pallas_src>
import jax
import jax.numpy as jnp
from jax import lax
from jax.experimental import pallas as pl
from jax.experimental.pallas import tpu as pltpu

LEAKY_SLOPE = 0.01
IN_EPS = 1e-5


# ------------------------------ kernel helpers ------------------------------

def _lrelu(x):
    return jnp.where(x > 0, x, LEAKY_SLOPE * x)


def _inorm(y):
    # InstanceNorm2d (affine=False, biased var, eps=1e-5); rows = spatial
    # positions, lanes = channels.  One sweep: sum + sum-of-squares.
    n = y.shape[0]
    s = jnp.sum(y, axis=0, keepdims=True)
    ss = jnp.sum(y * y, axis=0, keepdims=True)
    mean = s * (1.0 / n)
    var = jnp.maximum(ss * (1.0 / n) - mean * mean, 0.0)
    return (y - mean) * lax.rsqrt(var + IN_EPS)


def _inorm_grouped(y, groups, channels):
    # Channel c occupies lanes {g*channels + c : g < groups}; fold the lane
    # groups into per-channel stats, then tile back.
    n = y.shape[0] * groups
    s = jnp.sum(y, axis=0, keepdims=True)          # (1, groups*channels)
    ss = jnp.sum(y * y, axis=0, keepdims=True)
    s_c = s[:, 0:channels]
    ss_c = ss[:, 0:channels]
    for g in range(1, groups):
        s_c = s_c + s[:, g * channels:(g + 1) * channels]
        ss_c = ss_c + ss[:, g * channels:(g + 1) * channels]
    mean = s_c * (1.0 / n)
    var = jnp.maximum(ss_c * (1.0 / n) - mean * mean, 0.0)
    inv = lax.rsqrt(var + IN_EPS)
    mean_t = jnp.concatenate([mean] * groups, axis=1)
    inv_t = jnp.concatenate([inv] * groups, axis=1)
    return (y - mean_t) * inv_t


# ------------------------------ fused kernel --------------------------------

def _disc_kernel(p1_ref, w1_ref, b1_ref, w2_ref, b2_ref, w3_ref, b3_ref,
                 w4_ref, b4_ref, wfc_ref, bfc_ref, o_ref):
    f32 = jnp.float32
    bf16 = jnp.bfloat16

    # conv1 (1->32): block-diagonal matmul emitting the conv2 patch matrix.
    # (576, 16) @ (16, 128) -> (576, 128); lane = (kh2, kw2, c1).
    p1 = p1_ref[0].astype(bf16)
    y = jnp.dot(p1, w1_ref[...], preferred_element_type=f32) + b1_ref[...]
    y = _inorm_grouped(_lrelu(y), groups=4, channels=32)          # (576, 128)

    # conv2 (32->64): single patch matmul, K = 4*32 = 128.
    y = jnp.dot(y.astype(bf16), w2_ref[...],
                preferred_element_type=f32) + b2_ref[...]
    y = _inorm(_lrelu(y))                                         # (576, 64)

    # conv3 (64->128): sum of 4 per-tap matmuls over contiguous row blocks.
    yb = y.astype(bf16)
    acc = jnp.dot(yb[0:144], w3_ref[0], preferred_element_type=f32)
    for g in range(1, 4):
        acc = acc + jnp.dot(yb[g * 144:(g + 1) * 144], w3_ref[g],
                            preferred_element_type=f32)
    y = _inorm(_lrelu(acc + b3_ref[...]))                         # (144, 128)

    # conv4 (128->256): same tap-sum form.
    yb = y.astype(bf16)
    acc = jnp.dot(yb[0:36], w4_ref[0], preferred_element_type=f32)
    for g in range(1, 4):
        acc = acc + jnp.dot(yb[g * 36:(g + 1) * 36], w4_ref[g],
                            preferred_element_type=f32)
    y = _inorm(_lrelu(acc + b4_ref[...]))                         # (36, 256)

    # fc(6*6*256 -> 1) + sigmoid as multiply + reduce; NCHW flatten order is
    # already folded into wfc on the host.
    r = jnp.sum(y * wfc_ref[...], axis=0, keepdims=True)          # (1, 256)
    logit = jnp.sum(r, axis=1, keepdims=True) + bfc_ref[...]      # (1, 1)
    o_ref[...] = jax.nn.sigmoid(logit).reshape(1, 1, 1)


# ------------------------------- host prep ----------------------------------

def _space_to_patch_hierarchy(x_nchw):
    # (N, 1, 96, 96) -> (N, 576, 16): rows ordered (kh3, kw3, kh4, kw4, h4, w4),
    # features ordered (kh2, kw2, kh1, kw1).  h = 16*h4+8*kh4+4*kh3+2*kh2+kh1.
    N = x_nchw.shape[0]
    x = x_nchw.reshape(N, 6, 2, 2, 2, 2, 6, 2, 2, 2, 2)
    #            (N, h4, kh4, kh3, kh2, kh1, w4, kw4, kw3, kw2, kw1)
    x = x.transpose(0, 3, 8, 2, 7, 1, 6, 4, 9, 5, 10)
    #            (N, kh3, kw3, kh4, kw4, h4, w4, kh2, kw2, kh1, kw1)
    return x.reshape(N, 576, 16)


def prep_params(params):
    # Static re-layout of the PyTorch-layout weights (done once, at init).
    (w1, b1), (w2, b2), (w3, b3), (w4, b4) = params["convs"]
    w_fc, b_fc = params["fc"]
    w1_mat = w1.reshape(32, 4).T                               # (4, 32)
    w1_blk = jnp.kron(jnp.eye(4, dtype=jnp.float32), w1_mat)   # (16, 128) block-diag
    w2_mat = w2.transpose(2, 3, 1, 0).reshape(128, 64)         # K order (kh,kw,cin)
    w3_t = w3.transpose(2, 3, 1, 0).reshape(4, 64, 128)        # per-tap (cin,cout)
    w4_t = w4.transpose(2, 3, 1, 0).reshape(4, 128, 256)
    wfc = w_fc.reshape(256, 36).T                              # (36, 256), NCHW flatten folded in
    return {
        "w1": w1_blk.astype(jnp.bfloat16), "b1": jnp.tile(b1, 4).reshape(1, 128),
        "w2": w2_mat.astype(jnp.bfloat16), "b2": b2.reshape(1, 64),
        "w3": w3_t.astype(jnp.bfloat16),   "b3": b3.reshape(1, 128),
        "w4": w4_t.astype(jnp.bfloat16),   "b4": b4.reshape(1, 256),
        "wfc": wfc.astype(jnp.float32),    "bfc": b_fc.reshape(1, 1),
    }


@jax.jit
def discriminator_forward(x_nchw, pp):
    N, C, H, W = x_nchw.shape
    assert C == 1 and H == 96 and W == 96, "fc layer fixes the input to 1x96x96"
    p1 = _space_to_patch_hierarchy(x_nchw)                     # (N, 576, 16)

    out = pl.pallas_call(
        _disc_kernel,
        out_shape=jax.ShapeDtypeStruct((N, 1, 1), jnp.float32),
        grid=(N,),
        in_specs=[
            pl.BlockSpec((1, 576, 16), lambda n: (n, 0, 0)),     # p1 (per sample)
            pl.BlockSpec((16, 128), lambda n: (0, 0)),           # w1 (block-diag)
            pl.BlockSpec((1, 128), lambda n: (0, 0)),            # b1 (tiled x4)
            pl.BlockSpec((128, 64), lambda n: (0, 0)),           # w2
            pl.BlockSpec((1, 64), lambda n: (0, 0)),             # b2
            pl.BlockSpec((4, 64, 128), lambda n: (0, 0, 0)),     # w3 per tap
            pl.BlockSpec((1, 128), lambda n: (0, 0)),            # b3
            pl.BlockSpec((4, 128, 256), lambda n: (0, 0, 0)),    # w4 per tap
            pl.BlockSpec((1, 256), lambda n: (0, 0)),            # b4
            pl.BlockSpec((36, 256), lambda n: (0, 0)),           # wfc (permuted)
            pl.BlockSpec((1, 1), lambda n: (0, 0)),              # bfc
        ],
        out_specs=pl.BlockSpec((1, 1, 1), lambda n: (n, 0, 0)),
        compiler_params=pltpu.CompilerParams(
            dimension_semantics=("parallel",)),
    )(p1, pp["w1"], pp["b1"], pp["w2"], pp["b2"], pp["w3"], pp["b3"],
      pp["w4"], pp["b4"], pp["wfc"], pp["bfc"])
    return out.reshape(N, 1)


# --------------------------- reference (pure JAX) ----------------------------

def reference_forward(x_nchw, params):
    x = x_nchw
    for w, b in params["convs"]:
        x = lax.conv_general_dilated(
            x, w, window_strides=(2, 2), padding="VALID",
            dimension_numbers=("NCHW", "OIHW", "NCHW"),
            precision=lax.Precision.HIGHEST)
        x = x + b.reshape(1, -1, 1, 1)
        x = jnp.where(x > 0, x, LEAKY_SLOPE * x)
        mean = jnp.mean(x, axis=(2, 3), keepdims=True)
        var = jnp.mean(jnp.square(x - mean), axis=(2, 3), keepdims=True)
        x = (x - mean) * lax.rsqrt(var + IN_EPS)
    flat = x.reshape(x.shape[0], -1)
    w_fc, b_fc = params["fc"]
    return jax.nn.sigmoid(flat @ w_fc.T + b_fc)


# ------------------------------ deterministic init ---------------------------

def init_params(key):
    def conv_init(k, cout, cin):
        k1, k2 = jax.random.split(k)
        bound = 1.0 / jnp.sqrt(jnp.float32(cin * 4))
        w = jax.random.uniform(k1, (cout, cin, 2, 2), jnp.float32, -bound, bound)
        b = jax.random.uniform(k2, (cout,), jnp.float32, -bound, bound)
        return w, b

    ks = jax.random.split(key, 5)
    convs = [
        conv_init(ks[0], 32, 1),
        conv_init(ks[1], 64, 32),
        conv_init(ks[2], 128, 64),
        conv_init(ks[3], 256, 128),
    ]
    kf1, kf2 = jax.random.split(ks[4])
    d = 6 * 6 * 256
    bound = 1.0 / jnp.sqrt(jnp.float32(d))
    w_fc = jax.random.uniform(kf1, (1, d), jnp.float32, -bound, bound)
    b_fc = jax.random.uniform(kf2, (1,), jnp.float32, -bound, bound)
    return {"convs": convs, "fc": (w_fc, b_fc)}


# ------------------------------------ main -----------------------------------

if __name__ == "__main__":
    # The fc layer (Linear(6*6*256, 1)) fixes the input to 1x96x96
    # (96 -> 48 -> 24 -> 12 -> 6 through the four stride-2 convs).
    key = jax.random.PRNGKey(0)
    k_x, k_p = jax.random.split(key)
    x = jax.random.normal(k_x, (2, 1, 96, 96), jnp.float32)   # NCHW like PyTorch
    params = init_params(k_p)
    prepped = prep_params(params)                              # one-time weight re-layout

    out = jax.block_until_ready(discriminator_forward(x, prepped))
    ref = jax.block_until_ready(reference_forward(x, params))

    assert out.shape == (2, 1), f"bad output shape {out.shape}"
    assert jnp.all(jnp.isfinite(out)), "non-finite output"
    assert jnp.allclose(out, ref, rtol=2e-2, atol=2e-2), (out, ref)
    # nn.Dropout / nn.Softmax are declared in __init__ but unused in forward().
    print("KERNEL_OK")
</pallas_src>

<mosaic_0001>
module attributes {stable_mosaic.version = 11 : i64} {
  func.func @_disc_kernel(%arg0: i32, %arg1: memref<1x576x16xf32, #tpu.memory_space<vmem>>, %arg2: memref<16x128xbf16, #tpu.memory_space<vmem>>, %arg3: memref<1x128xf32, #tpu.memory_space<vmem>>, %arg4: memref<128x64xbf16, #tpu.memory_space<vmem>>, %arg5: memref<1x64xf32, #tpu.memory_space<vmem>>, %arg6: memref<4x64x128xbf16, #tpu.memory_space<vmem>>, %arg7: memref<1x128xf32, #tpu.memory_space<vmem>>, %arg8: memref<4x128x256xbf16, #tpu.memory_space<vmem>>, %arg9: memref<1x256xf32, #tpu.memory_space<vmem>>, %arg10: memref<36x256xf32, #tpu.memory_space<vmem>>, %arg11: memref<1x1xf32, #tpu.memory_space<vmem>>, %arg12: memref<1x1x1xf32, #tpu.memory_space<vmem>>) attributes {dimension_semantics = [#tpu.dimension_semantics<parallel>], iteration_bounds = array<i64: 2>, scalar_prefetch = 0 : i64, scratch_operands = 0 : i64, tpu.core_type = #tpu.core_type<tc>, window_params = [{transform_indices = @transform_0, window_bounds = array<i64: 1, 576, 16>}, {pipeline_mode = #tpu.pipeline_mode<synchronous>, transform_indices = @transform_1, window_bounds = array<i64: 16, 128>}, {pipeline_mode = #tpu.pipeline_mode<synchronous>, transform_indices = @transform_2, window_bounds = array<i64: 1, 128>}, {pipeline_mode = #tpu.pipeline_mode<synchronous>, transform_indices = @transform_3, window_bounds = array<i64: 128, 64>}, {pipeline_mode = #tpu.pipeline_mode<synchronous>, transform_indices = @transform_4, window_bounds = array<i64: 1, 64>}, {pipeline_mode = #tpu.pipeline_mode<synchronous>, transform_indices = @transform_5, window_bounds = array<i64: 4, 64, 128>}, {pipeline_mode = #tpu.pipeline_mode<synchronous>, transform_indices = @transform_6, window_bounds = array<i64: 1, 128>}, {pipeline_mode = #tpu.pipeline_mode<synchronous>, transform_indices = @transform_7, window_bounds = array<i64: 4, 128, 256>}, {pipeline_mode = #tpu.pipeline_mode<synchronous>, transform_indices = @transform_8, window_bounds = array<i64: 1, 256>}, {pipeline_mode = #tpu.pipeline_mode<synchronous>, transform_indices = @transform_9, window_bounds = array<i64: 36, 256>}, {pipeline_mode = #tpu.pipeline_mode<synchronous>, transform_indices = @transform_10, window_bounds = array<i64: 1, 1>}, {transform_indices = @transform_11, window_bounds = array<i64: 1, 1, 1>}]} {
    %c0 = arith.constant 0 : index
    %c0_0 = arith.constant 0 : index
    %c0_1 = arith.constant 0 : index
    %0 = vector.load %arg1[%c0, %c0_0, %c0_1] : memref<1x576x16xf32, #tpu.memory_space<vmem>>, vector<1x576x16xf32>
    %1 = vector.shape_cast %0 : vector<1x576x16xf32> to vector<576x16xf32>
    %2 = arith.truncf %1 : vector<576x16xf32> to vector<576x16xbf16>
    %c0_2 = arith.constant 0 : index
    %c0_3 = arith.constant 0 : index
    %3 = vector.load %arg2[%c0_2, %c0_3] : memref<16x128xbf16, #tpu.memory_space<vmem>>, vector<16x128xbf16>
    %cst = arith.constant dense<0.000000e+00> : vector<576x128xf32>
    %4 = tpu.matmul %2, %3, %cst {dimension_numbers = #tpu.dot_dimension_numbers<[1], [0], [0], [1], [0, 0, 1, 1], [], []>} : vector<576x16xbf16>, vector<16x128xbf16>, vector<576x128xf32> -> vector<576x128xf32>
    %c0_4 = arith.constant 0 : index
    %c0_5 = arith.constant 0 : index
    %5 = vector.load %arg3[%c0_4, %c0_5] : memref<1x128xf32, #tpu.memory_space<vmem>>, vector<1x128xf32>
    %6 = vector.broadcast %5 : vector<1x128xf32> to vector<576x128xf32>
    %7 = arith.addf %4, %6 : vector<576x128xf32>
    %cst_6 = arith.constant 0.000000e+00 : f32
    %8 = vector.broadcast %cst_6 : f32 to vector<576x128xf32>
    %9 = arith.cmpf ogt, %7, %8 : vector<576x128xf32>
    %cst_7 = arith.constant 0.00999999977 : f32
    %10 = vector.broadcast %cst_7 : f32 to vector<576x128xf32>
    %11 = arith.mulf %10, %7 : vector<576x128xf32>
    %12 = arith.select %9, %7, %11 : vector<576x128xi1>, vector<576x128xf32>
    %cst_8 = arith.constant dense<0.000000e+00> : vector<128xf32>
    %13 = vector.multi_reduction <add>, %12, %cst_8 [0] : vector<576x128xf32> to vector<128xf32>
    %14 = vector.shape_cast %13 : vector<128xf32> to vector<1x128xf32>
    %15 = arith.mulf %12, %12 : vector<576x128xf32>
    %cst_9 = arith.constant dense<0.000000e+00> : vector<128xf32>
    %16 = vector.multi_reduction <add>, %15, %cst_9 [0] : vector<576x128xf32> to vector<128xf32>
    %17 = vector.shape_cast %16 : vector<128xf32> to vector<1x128xf32>
    %18 = vector.extract_strided_slice %14 {offsets = [0, 0], sizes = [1, 32], strides = [1, 1]} : vector<1x128xf32> to vector<1x32xf32>
    %19 = vector.extract_strided_slice %17 {offsets = [0, 0], sizes = [1, 32], strides = [1, 1]} : vector<1x128xf32> to vector<1x32xf32>
    %20 = vector.extract_strided_slice %14 {offsets = [0, 32], sizes = [1, 32], strides = [1, 1]} : vector<1x128xf32> to vector<1x32xf32>
    %21 = arith.addf %18, %20 : vector<1x32xf32>
    %22 = vector.extract_strided_slice %17 {offsets = [0, 32], sizes = [1, 32], strides = [1, 1]} : vector<1x128xf32> to vector<1x32xf32>
    %23 = arith.addf %19, %22 : vector<1x32xf32>
    %24 = vector.extract_strided_slice %14 {offsets = [0, 64], sizes = [1, 32], strides = [1, 1]} : vector<1x128xf32> to vector<1x32xf32>
    %25 = arith.addf %21, %24 : vector<1x32xf32>
    %26 = vector.extract_strided_slice %17 {offsets = [0, 64], sizes = [1, 32], strides = [1, 1]} : vector<1x128xf32> to vector<1x32xf32>
    %27 = arith.addf %23, %26 : vector<1x32xf32>
    %28 = vector.extract_strided_slice %14 {offsets = [0, 96], sizes = [1, 32], strides = [1, 1]} : vector<1x128xf32> to vector<1x32xf32>
    %29 = arith.addf %25, %28 : vector<1x32xf32>
    %30 = vector.extract_strided_slice %17 {offsets = [0, 96], sizes = [1, 32], strides = [1, 1]} : vector<1x128xf32> to vector<1x32xf32>
    %31 = arith.addf %27, %30 : vector<1x32xf32>
    %cst_10 = arith.constant 4.34027781E-4 : f32
    %32 = vector.broadcast %cst_10 : f32 to vector<1x32xf32>
    %33 = arith.mulf %29, %32 : vector<1x32xf32>
    %cst_11 = arith.constant 4.34027781E-4 : f32
    %34 = vector.broadcast %cst_11 : f32 to vector<1x32xf32>
    %35 = arith.mulf %31, %34 : vector<1x32xf32>
    %36 = arith.mulf %33, %33 : vector<1x32xf32>
    %37 = arith.subf %35, %36 : vector<1x32xf32>
    %cst_12 = arith.constant 0.000000e+00 : f32
    %38 = vector.broadcast %cst_12 : f32 to vector<1x32xf32>
    %39 = arith.maximumf %37, %38 : vector<1x32xf32>
    %cst_13 = arith.constant 9.99999974E-6 : f32
    %40 = vector.broadcast %cst_13 : f32 to vector<1x32xf32>
    %41 = arith.addf %39, %40 : vector<1x32xf32>
    %42 = math.rsqrt %41 : vector<1x32xf32>
    %43 = tpu.concatenate %33, %33, %33, %33 in 1 : vector<1x32xf32>, vector<1x32xf32>, vector<1x32xf32>, vector<1x32xf32> -> vector<1x128xf32>
    %44 = tpu.concatenate %42, %42, %42, %42 in 1 : vector<1x32xf32>, vector<1x32xf32>, vector<1x32xf32>, vector<1x32xf32> -> vector<1x128xf32>
    %45 = vector.broadcast %43 : vector<1x128xf32> to vector<576x128xf32>
    %46 = arith.subf %12, %45 : vector<576x128xf32>
    %47 = vector.broadcast %44 : vector<1x128xf32> to vector<576x128xf32>
    %48 = arith.mulf %46, %47 : vector<576x128xf32>
    %49 = arith.truncf %48 : vector<576x128xf32> to vector<576x128xbf16>
    %c0_14 = arith.constant 0 : index
    %c0_15 = arith.constant 0 : index
    %50 = vector.load %arg4[%c0_14, %c0_15] : memref<128x64xbf16, #tpu.memory_space<vmem>>, vector<128x64xbf16>
    %cst_16 = arith.constant dense<0.000000e+00> : vector<576x64xf32>
    %51 = tpu.matmul %49, %50, %cst_16 {dimension_numbers = #tpu.dot_dimension_numbers<[1], [0], [0], [1], [0, 0, 1, 1], [], []>} : vector<576x128xbf16>, vector<128x64xbf16>, vector<576x64xf32> -> vector<576x64xf32>
    %c0_17 = arith.constant 0 : index
    %c0_18 = arith.constant 0 : index
    %52 = vector.load %arg5[%c0_17, %c0_18] : memref<1x64xf32, #tpu.memory_space<vmem>>, vector<1x64xf32>
    %53 = vector.broadcast %52 : vector<1x64xf32> to vector<576x64xf32>
    %54 = arith.addf %51, %53 : vector<576x64xf32>
    %cst_19 = arith.constant 0.000000e+00 : f32
    %55 = vector.broadcast %cst_19 : f32 to vector<576x64xf32>
    %56 = arith.cmpf ogt, %54, %55 : vector<576x64xf32>
    %cst_20 = arith.constant 0.00999999977 : f32
    %57 = vector.broadcast %cst_20 : f32 to vector<576x64xf32>
    %58 = arith.mulf %57, %54 : vector<576x64xf32>
    %59 = arith.select %56, %54, %58 : vector<576x64xi1>, vector<576x64xf32>
    %cst_21 = arith.constant dense<0.000000e+00> : vector<64xf32>
    %60 = vector.multi_reduction <add>, %59, %cst_21 [0] : vector<576x64xf32> to vector<64xf32>
    %61 = vector.shape_cast %60 : vector<64xf32> to vector<1x64xf32>
    %62 = arith.mulf %59, %59 : vector<576x64xf32>
    %cst_22 = arith.constant dense<0.000000e+00> : vector<64xf32>
    %63 = vector.multi_reduction <add>, %62, %cst_22 [0] : vector<576x64xf32> to vector<64xf32>
    %64 = vector.shape_cast %63 : vector<64xf32> to vector<1x64xf32>
    %cst_23 = arith.constant 0.00173611112 : f32
    %65 = vector.broadcast %cst_23 : f32 to vector<1x64xf32>
    %66 = arith.mulf %61, %65 : vector<1x64xf32>
    %cst_24 = arith.constant 0.00173611112 : f32
    %67 = vector.broadcast %cst_24 : f32 to vector<1x64xf32>
    %68 = arith.mulf %64, %67 : vector<1x64xf32>
    %69 = arith.mulf %66, %66 : vector<1x64xf32>
    %70 = arith.subf %68, %69 : vector<1x64xf32>
    %cst_25 = arith.constant 0.000000e+00 : f32
    %71 = vector.broadcast %cst_25 : f32 to vector<1x64xf32>
    %72 = arith.maximumf %70, %71 : vector<1x64xf32>
    %73 = vector.broadcast %66 : vector<1x64xf32> to vector<576x64xf32>
    %74 = arith.subf %59, %73 : vector<576x64xf32>
    %cst_26 = arith.constant 9.99999974E-6 : f32
    %75 = vector.broadcast %cst_26 : f32 to vector<1x64xf32>
    %76 = arith.addf %72, %75 : vector<1x64xf32>
    %77 = math.rsqrt %76 : vector<1x64xf32>
    %78 = vector.broadcast %77 : vector<1x64xf32> to vector<576x64xf32>
    %79 = arith.mulf %74, %78 : vector<576x64xf32>
    %80 = arith.truncf %79 : vector<576x64xf32> to vector<576x64xbf16>
    %81 = vector.extract_strided_slice %80 {offsets = [0, 0], sizes = [144, 64], strides = [1, 1]} : vector<576x64xbf16> to vector<144x64xbf16>
    %c0_27 = arith.constant 0 : index
    %c0_28 = arith.constant 0 : index
    %c0_29 = arith.constant 0 : index
    %82 = vector.load %arg6[%c0_27, %c0_28, %c0_29] : memref<4x64x128xbf16, #tpu.memory_space<vmem>>, vector<1x64x128xbf16>
    %83 = vector.shape_cast %82 : vector<1x64x128xbf16> to vector<64x128xbf16>
    %cst_30 = arith.constant dense<0.000000e+00> : vector<144x128xf32>
    %84 = tpu.matmul %81, %83, %cst_30 {dimension_numbers = #tpu.dot_dimension_numbers<[1], [0], [0], [1], [0, 0, 1, 1], [], []>} : vector<144x64xbf16>, vector<64x128xbf16>, vector<144x128xf32> -> vector<144x128xf32>
    %85 = vector.extract_strided_slice %80 {offsets = [144, 0], sizes = [144, 64], strides = [1, 1]} : vector<576x64xbf16> to vector<144x64xbf16>
    %c1 = arith.constant 1 : index
    %c0_31 = arith.constant 0 : index
    %c0_32 = arith.constant 0 : index
    %86 = vector.load %arg6[%c1, %c0_31, %c0_32] : memref<4x64x128xbf16, #tpu.memory_space<vmem>>, vector<1x64x128xbf16>
    %87 = vector.shape_cast %86 : vector<1x64x128xbf16> to vector<64x128xbf16>
    %cst_33 = arith.constant dense<0.000000e+00> : vector<144x128xf32>
    %88 = tpu.matmul %85, %87, %cst_33 {dimension_numbers = #tpu.dot_dimension_numbers<[1], [0], [0], [1], [0, 0, 1, 1], [], []>} : vector<144x64xbf16>, vector<64x128xbf16>, vector<144x128xf32> -> vector<144x128xf32>
    %89 = arith.addf %84, %88 : vector<144x128xf32>
    %90 = vector.extract_strided_slice %80 {offsets = [288, 0], sizes = [144, 64], strides = [1, 1]} : vector<576x64xbf16> to vector<144x64xbf16>
    %c2 = arith.constant 2 : index
    %c0_34 = arith.constant 0 : index
    %c0_35 = arith.constant 0 : index
    %91 = vector.load %arg6[%c2, %c0_34, %c0_35] : memref<4x64x128xbf16, #tpu.memory_space<vmem>>, vector<1x64x128xbf16>
    %92 = vector.shape_cast %91 : vector<1x64x128xbf16> to vector<64x128xbf16>
    %cst_36 = arith.constant dense<0.000000e+00> : vector<144x128xf32>
    %93 = tpu.matmul %90, %92, %cst_36 {dimension_numbers = #tpu.dot_dimension_numbers<[1], [0], [0], [1], [0, 0, 1, 1], [], []>} : vector<144x64xbf16>, vector<64x128xbf16>, vector<144x128xf32> -> vector<144x128xf32>
    %94 = arith.addf %89, %93 : vector<144x128xf32>
    %95 = vector.extract_strided_slice %80 {offsets = [432, 0], sizes = [144, 64], strides = [1, 1]} : vector<576x64xbf16> to vector<144x64xbf16>
    %c3 = arith.constant 3 : index
    %c0_37 = arith.constant 0 : index
    %c0_38 = arith.constant 0 : index
    %96 = vector.load %arg6[%c3, %c0_37, %c0_38] : memref<4x64x128xbf16, #tpu.memory_space<vmem>>, vector<1x64x128xbf16>
    %97 = vector.shape_cast %96 : vector<1x64x128xbf16> to vector<64x128xbf16>
    %cst_39 = arith.constant dense<0.000000e+00> : vector<144x128xf32>
    %98 = tpu.matmul %95, %97, %cst_39 {dimension_numbers = #tpu.dot_dimension_numbers<[1], [0], [0], [1], [0, 0, 1, 1], [], []>} : vector<144x64xbf16>, vector<64x128xbf16>, vector<144x128xf32> -> vector<144x128xf32>
    %99 = arith.addf %94, %98 : vector<144x128xf32>
    %c0_40 = arith.constant 0 : index
    %c0_41 = arith.constant 0 : index
    %100 = vector.load %arg7[%c0_40, %c0_41] : memref<1x128xf32, #tpu.memory_space<vmem>>, vector<1x128xf32>
    %101 = vector.broadcast %100 : vector<1x128xf32> to vector<144x128xf32>
    %102 = arith.addf %99, %101 : vector<144x128xf32>
    %cst_42 = arith.constant 0.000000e+00 : f32
    %103 = vector.broadcast %cst_42 : f32 to vector<144x128xf32>
    %104 = arith.cmpf ogt, %102, %103 : vector<144x128xf32>
    %cst_43 = arith.constant 0.00999999977 : f32
    %105 = vector.broadcast %cst_43 : f32 to vector<144x128xf32>
    %106 = arith.mulf %105, %102 : vector<144x128xf32>
    %107 = arith.select %104, %102, %106 : vector<144x128xi1>, vector<144x128xf32>
    %cst_44 = arith.constant dense<0.000000e+00> : vector<128xf32>
    %108 = vector.multi_reduction <add>, %107, %cst_44 [0] : vector<144x128xf32> to vector<128xf32>
    %109 = vector.shape_cast %108 : vector<128xf32> to vector<1x128xf32>
    %110 = arith.mulf %107, %107 : vector<144x128xf32>
    %cst_45 = arith.constant dense<0.000000e+00> : vector<128xf32>
    %111 = vector.multi_reduction <add>, %110, %cst_45 [0] : vector<144x128xf32> to vector<128xf32>
    %112 = vector.shape_cast %111 : vector<128xf32> to vector<1x128xf32>
    %cst_46 = arith.constant 0.0069444445 : f32
    %113 = vector.broadcast %cst_46 : f32 to vector<1x128xf32>
    %114 = arith.mulf %109, %113 : vector<1x128xf32>
    %cst_47 = arith.constant 0.0069444445 : f32
    %115 = vector.broadcast %cst_47 : f32 to vector<1x128xf32>
    %116 = arith.mulf %112, %115 : vector<1x128xf32>
    %117 = arith.mulf %114, %114 : vector<1x128xf32>
    %118 = arith.subf %116, %117 : vector<1x128xf32>
    %cst_48 = arith.constant 0.000000e+00 : f32
    %119 = vector.broadcast %cst_48 : f32 to vector<1x128xf32>
    %120 = arith.maximumf %118, %119 : vector<1x128xf32>
    %121 = vector.broadcast %114 : vector<1x128xf32> to vector<144x128xf32>
    %122 = arith.subf %107, %121 : vector<144x128xf32>
    %cst_49 = arith.constant 9.99999974E-6 : f32
    %123 = vector.broadcast %cst_49 : f32 to vector<1x128xf32>
    %124 = arith.addf %120, %123 : vector<1x128xf32>
    %125 = math.rsqrt %124 : vector<1x128xf32>
    %126 = vector.broadcast %125 : vector<1x128xf32> to vector<144x128xf32>
    %127 = arith.mulf %122, %126 : vector<144x128xf32>
    %128 = arith.truncf %127 : vector<144x128xf32> to vector<144x128xbf16>
    %129 = vector.extract_strided_slice %128 {offsets = [0, 0], sizes = [36, 128], strides = [1, 1]} : vector<144x128xbf16> to vector<36x128xbf16>
    %c0_50 = arith.constant 0 : index
    %c0_51 = arith.constant 0 : index
    %c0_52 = arith.constant 0 : index
    %130 = vector.load %arg8[%c0_50, %c0_51, %c0_52] : memref<4x128x256xbf16, #tpu.memory_space<vmem>>, vector<1x128x256xbf16>
    %131 = vector.shape_cast %130 : vector<1x128x256xbf16> to vector<128x256xbf16>
    %cst_53 = arith.constant dense<0.000000e+00> : vector<36x256xf32>
    %132 = tpu.matmul %129, %131, %cst_53 {dimension_numbers = #tpu.dot_dimension_numbers<[1], [0], [0], [1], [0, 0, 1, 1], [], []>} : vector<36x128xbf16>, vector<128x256xbf16>, vector<36x256xf32> -> vector<36x256xf32>
    %133 = vector.extract_strided_slice %128 {offsets = [36, 0], sizes = [36, 128], strides = [1, 1]} : vector<144x128xbf16> to vector<36x128xbf16>
    %c1_54 = arith.constant 1 : index
    %c0_55 = arith.constant 0 : index
    %c0_56 = arith.constant 0 : index
    %134 = vector.load %arg8[%c1_54, %c0_55, %c0_56] : memref<4x128x256xbf16, #tpu.memory_space<vmem>>, vector<1x128x256xbf16>
    %135 = vector.shape_cast %134 : vector<1x128x256xbf16> to vector<128x256xbf16>
    %cst_57 = arith.constant dense<0.000000e+00> : vector<36x256xf32>
    %136 = tpu.matmul %133, %135, %cst_57 {dimension_numbers = #tpu.dot_dimension_numbers<[1], [0], [0], [1], [0, 0, 1, 1], [], []>} : vector<36x128xbf16>, vector<128x256xbf16>, vector<36x256xf32> -> vector<36x256xf32>
    %137 = arith.addf %132, %136 : vector<36x256xf32>
    %138 = vector.extract_strided_slice %128 {offsets = [72, 0], sizes = [36, 128], strides = [1, 1]} : vector<144x128xbf16> to vector<36x128xbf16>
    %c2_58 = arith.constant 2 : index
    %c0_59 = arith.constant 0 : index
    %c0_60 = arith.constant 0 : index
    %139 = vector.load %arg8[%c2_58, %c0_59, %c0_60] : memref<4x128x256xbf16, #tpu.memory_space<vmem>>, vector<1x128x256xbf16>
    %140 = vector.shape_cast %139 : vector<1x128x256xbf16> to vector<128x256xbf16>
    %cst_61 = arith.constant dense<0.000000e+00> : vector<36x256xf32>
    %141 = tpu.matmul %138, %140, %cst_61 {dimension_numbers = #tpu.dot_dimension_numbers<[1], [0], [0], [1], [0, 0, 1, 1], [], []>} : vector<36x128xbf16>, vector<128x256xbf16>, vector<36x256xf32> -> vector<36x256xf32>
    %142 = arith.addf %137, %141 : vector<36x256xf32>
    %143 = vector.extract_strided_slice %128 {offsets = [108, 0], sizes = [36, 128], strides = [1, 1]} : vector<144x128xbf16> to vector<36x128xbf16>
    %c3_62 = arith.constant 3 : index
    %c0_63 = arith.constant 0 : index
    %c0_64 = arith.constant 0 : index
    %144 = vector.load %arg8[%c3_62, %c0_63, %c0_64] : memref<4x128x256xbf16, #tpu.memory_space<vmem>>, vector<1x128x256xbf16>
    %145 = vector.shape_cast %144 : vector<1x128x256xbf16> to vector<128x256xbf16>
    %cst_65 = arith.constant dense<0.000000e+00> : vector<36x256xf32>
    %146 = tpu.matmul %143, %145, %cst_65 {dimension_numbers = #tpu.dot_dimension_numbers<[1], [0], [0], [1], [0, 0, 1, 1], [], []>} : vector<36x128xbf16>, vector<128x256xbf16>, vector<36x256xf32> -> vector<36x256xf32>
    %147 = arith.addf %142, %146 : vector<36x256xf32>
    %c0_66 = arith.constant 0 : index
    %c0_67 = arith.constant 0 : index
    %148 = vector.load %arg9[%c0_66, %c0_67] : memref<1x256xf32, #tpu.memory_space<vmem>>, vector<1x256xf32>
    %149 = vector.broadcast %148 : vector<1x256xf32> to vector<36x256xf32>
    %150 = arith.addf %147, %149 : vector<36x256xf32>
    %cst_68 = arith.constant 0.000000e+00 : f32
    %151 = vector.broadcast %cst_68 : f32 to vector<36x256xf32>
    %152 = arith.cmpf ogt, %150, %151 : vector<36x256xf32>
    %cst_69 = arith.constant 0.00999999977 : f32
    %153 = vector.broadcast %cst_69 : f32 to vector<36x256xf32>
    %154 = arith.mulf %153, %150 : vector<36x256xf32>
    %155 = arith.select %152, %150, %154 : vector<36x256xi1>, vector<36x256xf32>
    %cst_70 = arith.constant dense<0.000000e+00> : vector<256xf32>
    %156 = vector.multi_reduction <add>, %155, %cst_70 [0] : vector<36x256xf32> to vector<256xf32>
    %157 = vector.shape_cast %156 : vector<256xf32> to vector<1x256xf32>
    %158 = arith.mulf %155, %155 : vector<36x256xf32>
    %cst_71 = arith.constant dense<0.000000e+00> : vector<256xf32>
    %159 = vector.multi_reduction <add>, %158, %cst_71 [0] : vector<36x256xf32> to vector<256xf32>
    %160 = vector.shape_cast %159 : vector<256xf32> to vector<1x256xf32>
    %cst_72 = arith.constant 0.027777778 : f32
    %161 = vector.broadcast %cst_72 : f32 to vector<1x256xf32>
    %162 = arith.mulf %157, %161 : vector<1x256xf32>
    %cst_73 = arith.constant 0.027777778 : f32
    %163 = vector.broadcast %cst_73 : f32 to vector<1x256xf32>
    %164 = arith.mulf %160, %163 : vector<1x256xf32>
    %165 = arith.mulf %162, %162 : vector<1x256xf32>
    %166 = arith.subf %164, %165 : vector<1x256xf32>
    %cst_74 = arith.constant 0.000000e+00 : f32
    %167 = vector.broadcast %cst_74 : f32 to vector<1x256xf32>
    %168 = arith.maximumf %166, %167 : vector<1x256xf32>
    %169 = vector.broadcast %162 : vector<1x256xf32> to vector<36x256xf32>
    %170 = arith.subf %155, %169 : vector<36x256xf32>
    %cst_75 = arith.constant 9.99999974E-6 : f32
    %171 = vector.broadcast %cst_75 : f32 to vector<1x256xf32>
    %172 = arith.addf %168, %171 : vector<1x256xf32>
    %173 = math.rsqrt %172 : vector<1x256xf32>
    %174 = vector.broadcast %173 : vector<1x256xf32> to vector<36x256xf32>
    %175 = arith.mulf %170, %174 : vector<36x256xf32>
    %c0_76 = arith.constant 0 : index
    %c0_77 = arith.constant 0 : index
    %176 = vector.load %arg10[%c0_76, %c0_77] : memref<36x256xf32, #tpu.memory_space<vmem>>, vector<36x256xf32>
    %177 = arith.mulf %175, %176 : vector<36x256xf32>
    %cst_78 = arith.constant dense<0.000000e+00> : vector<256xf32>
    %178 = vector.multi_reduction <add>, %177, %cst_78 [0] : vector<36x256xf32> to vector<256xf32>
    %179 = vector.shape_cast %178 : vector<256xf32> to vector<1x256xf32>
    %cst_79 = arith.constant dense<0.000000e+00> : vector<1xf32>
    %180 = vector.multi_reduction <add>, %179, %cst_79 [1] : vector<1x256xf32> to vector<1xf32>
    %181 = vector.shape_cast %180 : vector<1xf32> to vector<1x1xf32>
    %c0_80 = arith.constant 0 : index
    %c0_81 = arith.constant 0 : index
    %182 = vector.load %arg11[%c0_80, %c0_81] : memref<1x1xf32, #tpu.memory_space<vmem>>, vector<1x1xf32>
    %183 = arith.addf %181, %182 : vector<1x1xf32>
    %184 = arith.negf %183 : vector<1x1xf32>
    %185 = math.exp %184 : vector<1x1xf32>
    %cst_82 = arith.constant 1.000000e+00 : f32
    %186 = vector.broadcast %cst_82 : f32 to vector<1x1xf32>
    %187 = arith.addf %186, %185 : vector<1x1xf32>
    %188 = arith.divf %186, %187 : vector<1x1xf32>
    %189 = vector.shape_cast %188 : vector<1x1xf32> to vector<1x1x1xf32>
    %c0_83 = arith.constant 0 : index
    %c0_84 = arith.constant 0 : index
    %c0_85 = arith.constant 0 : index
    %190 = vector.load %arg12[%c0_83, %c0_84, %c0_85] : memref<1x1x1xf32, #tpu.memory_space<vmem>>, vector<1x1x1xf32>
    tpu.vector_store %arg12[%c0_83, %c0_84, %c0_85], %189 {strides = array<i32>} : memref<1x1x1xf32, #tpu.memory_space<vmem>>, vector<1x1x1xf32>,
    return
  }
  func.func @transform_0(%arg0: i32) -> (i32, i32, i32) {
    %c0_i32 = arith.constant 0 : i32
    %c0_i32_0 = arith.constant 0 : i32
    %c0_i32_1 = arith.constant 0 : i32
    return %arg0, %c0_i32, %c0_i32_0 : i32, i32, i32
  }
  func.func @transform_1(%arg0: i32) -> (i32, i32) {
    %c0_i32 = arith.constant 0 : i32
    %c0_i32_0 = arith.constant 0 : i32
    %c0_i32_1 = arith.constant 0 : i32
    return %c0_i32, %c0_i32_0 : i32, i32
  }
  func.func @transform_2(%arg0: i32) -> (i32, i32) {
    %c0_i32 = arith.constant 0 : i32
    %c0_i32_0 = arith.constant 0 : i32
    %c0_i32_1 = arith.constant 0 : i32
    return %c0_i32, %c0_i32_0 : i32, i32
  }
  func.func @transform_3(%arg0: i32) -> (i32, i32) {
    %c0_i32 = arith.constant 0 : i32
    %c0_i32_0 = arith.constant 0 : i32
    %c0_i32_1 = arith.constant 0 : i32
    return %c0_i32, %c0_i32_0 : i32, i32
  }
  func.func @transform_4(%arg0: i32) -> (i32, i32) {
    %c0_i32 = arith.constant 0 : i32
    %c0_i32_0 = arith.constant 0 : i32
    %c0_i32_1 = arith.constant 0 : i32
    return %c0_i32, %c0_i32_0 : i32, i32
  }
  func.func @transform_5(%arg0: i32) -> (i32, i32, i32) {
    %c0_i32 = arith.constant 0 : i32
    %c0_i32_0 = arith.constant 0 : i32
    %c0_i32_1 = arith.constant 0 : i32
    %c0_i32_2 = arith.constant 0 : i32
    return %c0_i32, %c0_i32_0, %c0_i32_1 : i32, i32, i32
  }
  func.func @transform_6(%arg0: i32) -> (i32, i32) {
    %c0_i32 = arith.constant 0 : i32
    %c0_i32_0 = arith.constant 0 : i32
    %c0_i32_1 = arith.constant 0 : i32
    return %c0_i32, %c0_i32_0 : i32, i32
  }
  func.func @transform_7(%arg0: i32) -> (i32, i32, i32) {
    %c0_i32 = arith.constant 0 : i32
    %c0_i32_0 = arith.constant 0 : i32
    %c0_i32_1 = arith.constant 0 : i32
    %c0_i32_2 = arith.constant 0 : i32
    return %c0_i32, %c0_i32_0, %c0_i32_1 : i32, i32, i32
  }
  func.func @transform_8(%arg0: i32) -> (i32, i32) {
    %c0_i32 = arith.constant 0 : i32
    %c0_i32_0 = arith.constant 0 : i32
    %c0_i32_1 = arith.constant 0 : i32
    return %c0_i32, %c0_i32_0 : i32, i32
  }
  func.func @transform_9(%arg0: i32) -> (i32, i32) {
    %c0_i32 = arith.constant 0 : i32
    %c0_i32_0 = arith.constant 0 : i32
    %c0_i32_1 = arith.constant 0 : i32
    return %c0_i32, %c0_i32_0 : i32, i32
  }
  func.func @transform_10(%arg0: i32) -> (i32, i32) {
    %c0_i32 = arith.constant 0 : i32
    %c0_i32_0 = arith.constant 0 : i32
    %c0_i32_1 = arith.constant 0 : i32
    return %c0_i32, %c0_i32_0 : i32, i32
  }
  func.func @transform_11(%arg0: i32) -> (i32, i32, i32) {
    %c0_i32 = arith.constant 0 : i32
    %c0_i32_0 = arith.constant 0 : i32
    %c0_i32_1 = arith.constant 0 : i32
    return %arg0, %c0_i32, %c0_i32_0 : i32, i32, i32
  }
}

</mosaic_0001>

<llo_original>
// kernel: discriminator_forward.1
$region0: #{discriminator_forward.1}
  #allocation0 [shape = 'u32[]', space=smem, size = 0x4, offset = 0x4, fixed_abs, tag = 'smem constant byte address 0x4 - core index']
  #allocation1 [shape = 'u32[144,128]{1,0:T(1,128)}', space=vmem, size = 0x12000, scoped, tag = 'internal scratch']
  #allocation2 [shape = 'f32[1,1]{1,0:T(1,128)S(1)}', space=vmem, size = 0x200, scoped, tag = 'scoped memory for discriminator_forward.1']
  %s0 = inlined_call_operand.vmem [shape: f32[2,576,16], index: 0, kind: input, shape index: {}]
  %s1 = inlined_call_operand.vmem [shape: bf16[16,128], index: 1, kind: input, shape index: {}]
  %s2 = inlined_call_operand.vmem [shape: f32[1,128], index: 2, kind: input, shape index: {}]
  %s3 = inlined_call_operand.vmem [shape: bf16[128,64], index: 3, kind: input, shape index: {}]
  %s4 = inlined_call_operand.vmem [shape: f32[1,64], index: 4, kind: input, shape index: {}]
  %s5 = inlined_call_operand.vmem [shape: bf16[4,64,128], index: 5, kind: input, shape index: {}]
  %s6 = inlined_call_operand.vmem [shape: f32[1,128], index: 6, kind: input, shape index: {}]
  %s7 = inlined_call_operand.vmem [shape: bf16[4,128,256], index: 7, kind: input, shape index: {}]
  %s8 = inlined_call_operand.vmem [shape: f32[1,256], index: 8, kind: input, shape index: {}]
  %s9 = inlined_call_operand.vmem [shape: f32[36,256], index: 9, kind: input, shape index: {}]
  %s10 = inlined_call_operand.<no memory space> [shape: f32[1,1], index: 10, kind: input, shape index: {}]
  %s11 = inlined_call_operand.vmem [shape: f32[2,1,1], index: 11, kind: output, shape index: {}]
  %s12 = sld [smem:[#allocation0]]
  $region77: #{discriminator_forward.1} parent=0
    _
  %s14 = ssub.s32 1, %s12
  %s15 = scalar_select 0, %s14, %s12
  %v16 = vstv %s10
  %17 = vst [vmem:[#allocation2] sm:$0x1] %v16
  loop: start=0, step=1, limit=4
  $region2: #{discriminator_forward.1} parent=0 // loop_pre_header
    _
  $region3: #{discriminator_forward.1} parent=0 // loop_header
    %s19 = sphi 0, %s23
    %p20 = scmp.ge.s32.totalorder %s19, 4
    %s29 = sphi 0, %s31
    %s32 = sphi 0, %s29
    %s33 = sphi 0, %s32
    %s49 = sphi 0, %s33
    %s53 = sphi 0, %s53
    %s55 = sphi 0, %s53
    %s56 = sphi 0, %s55
    %s70 = sphi 0, %s56
    %s74 = sphi 0, %s74
    %s76 = sphi 0, %s74
    %s77 = sphi 0, %s76
    %s91 = sphi 0, %s77
    %s95 = sphi 0, %s95
    %s97 = sphi 0, %s95
    %s98 = sphi 0, %s97
    %s112 = sphi 0, %s98
    %s116 = sphi 0, %s116
    %s118 = sphi 0, %s116
    %s119 = sphi 0, %s118
    %s133 = sphi 0, %s119
    %s137 = sphi 0, %s137
    %s139 = sphi 0, %s137
    %s140 = sphi 0, %s139
    %s154 = sphi 0, %s140
    %s158 = sphi 0, %s158
    %s160 = sphi 0, %s158
    %s161 = sphi 0, %s160
    %s175 = sphi 0, %s161
    %s179 = sphi 0, %s179
    %s181 = sphi 0, %s179
    %s182 = sphi 0, %s181
    %s196 = sphi 0, %s182
    %s200 = sphi 0, %s200
    %s202 = sphi 0, %s200
    %s203 = sphi 0, %s202
    %s217 = sphi 0, %s203
    %s221 = sphi 0, %s221
    %s223 = sphi 0, %s221
    %s224 = sphi 0, %s223
    %s238 = sphi 0, %s224
    %s242 = sphi 0, %s242
    %s244 = sphi 0, %s242
    %s245 = sphi 0, %s244
    %s259 = sphi 0, %s245
    %s265 = sphi 0, %s267
    %s268 = sphi 0, %s265
    %s269 = sphi 0, %s268
    %s285 = sphi 0, %s269
  $region4: #{discriminator_forward.1} parent=0 // loop_header_branch
    %22 = sbr.rel (%p20) target = $region8
  $region5: #{discriminator_forward.1} parent=0 // loop_body
    %s24 = ssub.s32 %s19, 1
    %s25 = ssub.s32 %s19, 2
    %s26 = sadd.s32 %s19, 1
    %s27 = ssub.s32 %s19, %s26
    %p28 = scmp.eq.s32.totalorder %s27, 0
    %s30 = sadd.s32 %s29, 1
    %s31 = scalar_select %p28, %s29, %s30
    %p34 = pneg %p28
    %p35 = scmp.eq.s32.totalorder %s19, 1
    %p36 = por %p34, %p35
    %p37 = scmp.ne.s32.totalorder %s29, %s32
    %p38 = scmp.eq.s32.totalorder %s19, 0
    %p39 = por %p37, %p38
    %p40 = scmp.ne.s32.totalorder %s29, %s32
    %p41 = scmp.eq.s32.totalorder %s24, 1
    %p42 = por %p40, %p41
    %p43 = scmp.ne.s32.totalorder %s32, %s33
    %p44 = scmp.eq.s32.totalorder %s24, 0
    %p45 = por %p43, %p44
    %p46 = scmp.ne.s32.totalorder %s32, %s33
    %p47 = scmp.eq.s32.totalorder %s25, 1
    %p48 = por %p46, %p47
    %p50 = scmp.ne.s32.totalorder %s33, %s49
    %p51 = scmp.eq.s32.totalorder %s25, 0
    %p52 = por %p50, %p51
    %s54 = sadd.s32 %s53, 1
    %p57 = scmp.eq.s32.totalorder %s19, 1
    %p58 = scmp.ne.s32.totalorder %s53, %s55
    %p59 = scmp.eq.s32.totalorder %s19, 0
    %p60 = por %p58, %p59
    %p61 = scmp.ne.s32.totalorder %s53, %s55
    %p62 = scmp.eq.s32.totalorder %s24, 1
    %p63 = por %p61, %p62
    %p64 = scmp.ne.s32.totalorder %s55, %s56
    %p65 = scmp.eq.s32.totalorder %s24, 0
    %p66 = por %p64, %p65
    %p67 = scmp.ne.s32.totalorder %s55, %s56
    %p68 = scmp.eq.s32.totalorder %s25, 1
    %p69 = por %p67, %p68
    %p71 = scmp.ne.s32.totalorder %s56, %s70
    %p72 = scmp.eq.s32.totalorder %s25, 0
    %p73 = por %p71, %p72
    %s75 = sadd.s32 %s74, 1
    %p78 = scmp.eq.s32.totalorder %s19, 1
    %p79 = scmp.ne.s32.totalorder %s74, %s76
    %p80 = scmp.eq.s32.totalorder %s19, 0
    %p81 = por %p79, %p80
    %p82 = scmp.ne.s32.totalorder %s74, %s76
    %p83 = scmp.eq.s32.totalorder %s24, 1
    %p84 = por %p82, %p83
    %p85 = scmp.ne.s32.totalorder %s76, %s77
    %p86 = scmp.eq.s32.totalorder %s24, 0
    %p87 = por %p85, %p86
    %p88 = scmp.ne.s32.totalorder %s76, %s77
    %p89 = scmp.eq.s32.totalorder %s25, 1
    %p90 = por %p88, %p89
    %p92 = scmp.ne.s32.totalorder %s77, %s91
    %p93 = scmp.eq.s32.totalorder %s25, 0
    %p94 = por %p92, %p93
    %s96 = sadd.s32 %s95, 1
    %p99 = scmp.eq.s32.totalorder %s19, 1
    %p100 = scmp.ne.s32.totalorder %s95, %s97
    %p101 = scmp.eq.s32.totalorder %s19, 0
    %p102 = por %p100, %p101
    %p103 = scmp.ne.s32.totalorder %s95, %s97
    %p104 = scmp.eq.s32.totalorder %s24, 1
    %p105 = por %p103, %p104
    %p106 = scmp.ne.s32.totalorder %s97, %s98
    %p107 = scmp.eq.s32.totalorder %s24, 0
    %p108 = por %p106, %p107
    %p109 = scmp.ne.s32.totalorder %s97, %s98
    %p110 = scmp.eq.s32.totalorder %s25, 1
    %p111 = por %p109, %p110
    %p113 = scmp.ne.s32.totalorder %s98, %s112
    %p114 = scmp.eq.s32.totalorder %s25, 0
    %p115 = por %p113, %p114
    %s117 = sadd.s32 %s116, 1
    %p120 = scmp.eq.s32.totalorder %s19, 1
    %p121 = scmp.ne.s32.totalorder %s116, %s118
    %p122 = scmp.eq.s32.totalorder %s19, 0
    %p123 = por %p121, %p122
    %p124 = scmp.ne.s32.totalorder %s116, %s118
    %p125 = scmp.eq.s32.totalorder %s24, 1
    %p126 = por %p124, %p125
    %p127 = scmp.ne.s32.totalorder %s118, %s119
    %p128 = scmp.eq.s32.totalorder %s24, 0
    %p129 = por %p127, %p128
    %p130 = scmp.ne.s32.totalorder %s118, %s119
    %p131 = scmp.eq.s32.totalorder %s25, 1
    %p132 = por %p130, %p131
    %p134 = scmp.ne.s32.totalorder %s119, %s133
    %p135 = scmp.eq.s32.totalorder %s25, 0
    %p136 = por %p134, %p135
    %s138 = sadd.s32 %s137, 1
    %p141 = scmp.eq.s32.totalorder %s19, 1
    %p142 = scmp.ne.s32.totalorder %s137, %s139
    %p143 = scmp.eq.s32.totalorder %s19, 0
    %p144 = por %p142, %p143
    %p145 = scmp.ne.s32.totalorder %s137, %s139
    %p146 = scmp.eq.s32.totalorder %s24, 1
    %p147 = por %p145, %p146
    %p148 = scmp.ne.s32.totalorder %s139, %s140
    %p149 = scmp.eq.s32.totalorder %s24, 0
    %p150 = por %p148, %p149
    %p151 = scmp.ne.s32.totalorder %s139, %s140
    %p152 = scmp.eq.s32.totalorder %s25, 1
    %p153 = por %p151, %p152
    %p155 = scmp.ne.s32.totalorder %s140, %s154
    %p156 = scmp.eq.s32.totalorder %s25, 0
    %p157 = por %p155, %p156
    %s159 = sadd.s32 %s158, 1
    %p162 = scmp.eq.s32.totalorder %s19, 1
    %p163 = scmp.ne.s32.totalorder %s158, %s160
    %p164 = scmp.eq.s32.totalorder %s19, 0
    %p165 = por %p163, %p164
    %p166 = scmp.ne.s32.totalorder %s158, %s160
    %p167 = scmp.eq.s32.totalorder %s24, 1
    %p168 = por %p166, %p167
    %p169 = scmp.ne.s32.totalorder %s160, %s161
    %p170 = scmp.eq.s32.totalorder %s24, 0
    %p171 = por %p169, %p170
    %p172 = scmp.ne.s32.totalorder %s160, %s161
    %p173 = scmp.eq.s32.totalorder %s25, 1
    %p174 = por %p172, %p173
    %p176 = scmp.ne.s32.totalorder %s161, %s175
    %p177 = scmp.eq.s32.totalorder %s25, 0
    %p178 = por %p176, %p177
    %s180 = sadd.s32 %s179, 1
    %p183 = scmp.eq.s32.totalorder %s19, 1
    %p184 = scmp.ne.s32.totalorder %s179, %s181
    %p185 = scmp.eq.s32.totalorder %s19, 0
    %p186 = por %p184, %p185
    %p187 = scmp.ne.s32.totalorder %s179, %s181
    %p188 = scmp.eq.s32.totalorder %s24, 1
    %p189 = por %p187, %p188
    %p190 = scmp.ne.s32.totalorder %s181, %s182
    %p191 = scmp.eq.s32.totalorder %s24, 0
    %p192 = por %p190, %p191
    %p193 = scmp.ne.s32.totalorder %s181, %s182
    %p194 = scmp.eq.s32.totalorder %s25, 1
    %p195 = por %p193, %p194
    %p197 = scmp.ne.s32.totalorder %s182, %s196
    %p198 = scmp.eq.s32.totalorder %s25, 0
    %p199 = por %p197, %p198
    %s201 = sadd.s32 %s200, 1
    %p204 = scmp.eq.s32.totalorder %s19, 1
    %p205 = scmp.ne.s32.totalorder %s200, %s202
    %p206 = scmp.eq.s32.totalorder %s19, 0
    %p207 = por %p205, %p206
    %p208 = scmp.ne.s32.totalorder %s200, %s202
    %p209 = scmp.eq.s32.totalorder %s24, 1
    %p210 = por %p208, %p209
    %p211 = scmp.ne.s32.totalorder %s202, %s203
    %p212 = scmp.eq.s32.totalorder %s24, 0
    %p213 = por %p211, %p212
    %p214 = scmp.ne.s32.totalorder %s202, %s203
    %p215 = scmp.eq.s32.totalorder %s25, 1
    %p216 = por %p214, %p215
    %p218 = scmp.ne.s32.totalorder %s203, %s217
    %p219 = scmp.eq.s32.totalorder %s25, 0
    %p220 = por %p218, %p219
    %s222 = sadd.s32 %s221, 1
    %p225 = scmp.eq.s32.totalorder %s19, 1
    %p226 = scmp.ne.s32.totalorder %s221, %s223
    %p227 = scmp.eq.s32.totalorder %s19, 0
    %p228 = por %p226, %p227
    %p229 = scmp.ne.s32.totalorder %s221, %s223
    %p230 = scmp.eq.s32.totalorder %s24, 1
    %p231 = por %p229, %p230
    %p232 = scmp.ne.s32.totalorder %s223, %s224
    %p233 = scmp.eq.s32.totalorder %s24, 0
    %p234 = por %p232, %p233
    %p235 = scmp.ne.s32.totalorder %s223, %s224
    %p236 = scmp.eq.s32.totalorder %s25, 1
    %p237 = por %p235, %p236
    %p239 = scmp.ne.s32.totalorder %s224, %s238
    %p240 = scmp.eq.s32.totalorder %s25, 0
    %p241 = por %p239, %p240
    %s243 = sadd.s32 %s242, 1
    %p246 = scmp.eq.s32.totalorder %s19, 1
    %p247 = scmp.ne.s32.totalorder %s242, %s244
    %p248 = scmp.eq.s32.totalorder %s19, 0
    %p249 = por %p247, %p248
    %p250 = scmp.ne.s32.totalorder %s242, %s244
    %p251 = scmp.eq.s32.totalorder %s24, 1
    %p252 = por %p250, %p251
    %p253 = scmp.ne.s32.totalorder %s244, %s245
    %p254 = scmp.eq.s32.totalorder %s24, 0
    %p255 = por %p253, %p254
    %p256 = scmp.ne.s32.totalorder %s244, %s245
    %p257 = scmp.eq.s32.totalorder %s25, 1
    %p258 = por %p256, %p257
    %p260 = scmp.ne.s32.totalorder %s245, %s259
    %p261 = scmp.eq.s32.totalorder %s25, 0
    %p262 = por %p260, %p261
    %s263 = ssub.s32 %s19, %s26
    %p264 = scmp.eq.s32.totalorder %s263, 0
    %s266 = sadd.s32 %s265, 1
    %s267 = scalar_select %p264, %s265, %s266
    %p270 = pneg %p264
    %p271 = scmp.eq.s32.totalorder %s19, 1
    %p272 = por %p270, %p271
    %p273 = scmp.ne.s32.totalorder %s265, %s268
    %p274 = scmp.eq.s32.totalorder %s19, 0
    %p275 = por %p273, %p274
    %p276 = scmp.ne.s32.totalorder %s265, %s268
    %p277 = scmp.eq.s32.totalorder %s24, 1
    %p278 = por %p276, %p277
    %p279 = scmp.ne.s32.totalorder %s268, %s269
    %p280 = scmp.eq.s32.totalorder %s24, 0
    %p281 = por %p279, %p280
    %p282 = scmp.ne.s32.totalorder %s268, %s269
    %p283 = scmp.eq.s32.totalorder %s25, 1
    %p284 = por %p282, %p283
    %p286 = scmp.ne.s32.totalorder %s269, %s285
    %p287 = scmp.eq.s32.totalorder %s25, 0
    %p288 = por %p286, %p287
    %p289 = scmp.le.s32.totalorder 1, %s19
    %p290 = scmp.lt.s32.totalorder %s19, 3
    %p291 = pnand %p289, %p290
    %p292 = pneg %p291
    // Predicated region
    $region9: #{discriminator_forward.1} parent=5 // pred_check
      _
    $region10: #{discriminator_forward.1} parent=5 // pred_check_branch
      %294 = sbr.rel (%p291) target = $region12
    $region11: #{discriminator_forward.1} parent=5 // pred_region
      %s295 = ssub.s32 %s19, 1
      // Predicated region
      $region13: #{discriminator_forward.1} parent=11 // pred_check
        %p296 = pneg %p66
      $region14: #{discriminator_forward.1} parent=11 // pred_check_branch
        %298 = sbr.rel (%p296) target = $region16
      $region15: #{discriminator_forward.1} parent=11 // pred_region
        _
      $region16: #{discriminator_forward.1} parent=11 // pred_fallthru
        _
      // Predicated region
      $region17: #{discriminator_forward.1} parent=11 // pred_check
        %p299 = pneg %p87
      $region18: #{discriminator_forward.1} parent=11 // pred_check_branch
        %301 = sbr.rel (%p299) target = $region20
      $region19: #{discriminator_forward.1} parent=11 // pred_region
        _
      $region20: #{discriminator_forward.1} parent=11 // pred_fallthru
        _
      // Predicated region
      $region21: #{discriminator_forward.1} parent=11 // pred_check
        %p302 = pneg %p108
      $region22: #{discriminator_forward.1} parent=11 // pred_check_branch
        %304 = sbr.rel (%p302) target = $region24
      $region23: #{discriminator_forward.1} parent=11 // pred_region
        _
      $region24: #{discriminator_forward.1} parent=11 // pred_fallthru
        _
      // Predicated region
      $region25: #{discriminator_forward.1} parent=11 // pred_check
        %p305 = pneg %p129
      $region26: #{discriminator_forward.1} parent=11 // pred_check_branch
        %307 = sbr.rel (%p305) target = $region28
      $region27: #{discriminator_forward.1} parent=11 // pred_region
        _
      $region28: #{discriminator_forward.1} parent=11 // pred_fallthru
        _
      // Predicated region
      $region29: #{discriminator_forward.1} parent=11 // pred_check
        %p308 = pneg %p150
      $region30: #{discriminator_forward.1} parent=11 // pred_check_branch
        %310 = sbr.rel (%p308) target = $region32
      $region31: #{discriminator_forward.1} parent=11 // pred_region
        _
      $region32: #{discriminator_forward.1} parent=11 // pred_fallthru
        _
      // Predicated region
      $region33: #{discriminator_forward.1} parent=11 // pred_check
        %p311 = pneg %p171
      $region34: #{discriminator_forward.1} parent=11 // pred_check_branch
        %313 = sbr.rel (%p311) target = $region36
      $region35: #{discriminator_forward.1} parent=11 // pred_region
        _
      $region36: #{discriminator_forward.1} parent=11 // pred_fallthru
        _
      // Predicated region
      $region37: #{discriminator_forward.1} parent=11 // pred_check
        %p314 = pneg %p192
      $region38: #{discriminator_forward.1} parent=11 // pred_check_branch
        %316 = sbr.rel (%p314) target = $region40
      $region39: #{discriminator_forward.1} parent=11 // pred_region
        _
      $region40: #{discriminator_forward.1} parent=11 // pred_fallthru
        _
      // Predicated region
      $region41: #{discriminator_forward.1} parent=11 // pred_check
        %p317 = pneg %p213
      $region42: #{discriminator_forward.1} parent=11 // pred_check_branch
        %319 = sbr.rel (%p317) target = $region44
      $region43: #{discriminator_forward.1} parent=11 // pred_region
        _
      $region44: #{discriminator_forward.1} parent=11 // pred_fallthru
        _
      // Predicated region
      $region45: #{discriminator_forward.1} parent=11 // pred_check
        %p320 = pneg %p234
      $region46: #{discriminator_forward.1} parent=11 // pred_check_branch
        %322 = sbr.rel (%p320) target = $region48
      $region47: #{discriminator_forward.1} parent=11 // pred_region
        _
      $region48: #{discriminator_forward.1} parent=11 // pred_fallthru
        _
      // Predicated region
      $region49: #{discriminator_forward.1} parent=11 // pred_check
        %p323 = pneg %p255
      $region50: #{discriminator_forward.1} parent=11 // pred_check_branch
        %325 = sbr.rel (%p323) target = $region52
      $region51: #{discriminator_forward.1} parent=11 // pred_region
        _
      $region52: #{discriminator_forward.1} parent=11 // pred_fallthru
        _
    $region12: #{discriminator_forward.1} parent=5 // pred_fallthru
      _
    %p326 = scmp.lt.s32.totalorder %s19, 2
    // Predicated region
    $region53: #{discriminator_forward.1} parent=5 // pred_check
      %p327 = pneg %p326
    $region54: #{discriminator_forward.1} parent=5 // pred_check_branch
      %329 = sbr.rel (%p327) target = $region56
    $region55: #{discriminator_forward.1} parent=5 // pred_region
      // Predicated region
      $region57: #{discriminator_forward.1} parent=55 // pred_check
        %p330 = pneg %p39
      $region58: #{discriminator_forward.1} parent=55 // pred_check_branch
        %332 = sbr.rel (%p330) target = $region60
      $region59: #{discriminator_forward.1} parent=55 // pred_region
        %p333 = scmp.lt.s32.totalorder %s19, 1
        %s334 = scalar_select %p333, %s19, 1
        %s335 = smul.addr %s334, 72
        %s336 = smul.addr %s335, 8
        %s337 = scalar_lea.vmem %s0, %s336
      $region60: #{discriminator_forward.1} parent=55 // pred_fallthru
        _
    $region56: #{discriminator_forward.1} parent=5 // pred_fallthru
      _
    %p338 = scmp.le.s32.totalorder 1, %s19
    %p339 = scmp.lt.s32.totalorder %s19, 3
    %p340 = pnand %p338, %p339
    %p341 = pneg %p340
    // Predicated region
    $region61: #{discriminator_forward.1} parent=5 // pred_check
      _
    $region62: #{discriminator_forward.1} parent=5 // pred_check_branch
      %343 = sbr.rel (%p340) target = $region64
    $region63: #{discriminator_forward.1} parent=5 // pred_region
      %s344 = ssub.s32 %s19, 1
      %p345 = scmp.lt.s32.totalorder %s24, 1
      %s346 = scalar_select %p345, %s24, 1
      %s347 = smul.addr %s346, 72
      %s348 = smul.addr %s347, 8
      %s349 = scalar_lea.vmem %s0, %s348
      %p350 = pneg %p45
      %p351 = pneg %p42
      %p352 = pneg %p66
      %p353 = pneg %p63
      %p354 = pneg %p87
      %p355 = pneg %p84
      %p356 = pneg %p108
      %p357 = pneg %p105
      %p358 = pneg %p129
      %p359 = pneg %p126
      %p360 = pneg %p150
      %p361 = pneg %p147
      %p362 = pneg %p171
      %p363 = pneg %p168
      %p364 = pneg %p192
      %p365 = pneg %p189
      %p366 = pneg %p213
      %p367 = pneg %p210
      %p368 = pneg %p234
      %p369 = pneg %p231
      %p370 = pneg %p255
      %p371 = pneg %p252
      %p372 = pneg %p281
      %p373 = pneg %p278
      %p374 = scmp.lt.s32.totalorder %s24, 1
      %s375 = scalar_select %p374, %s24, 1
      %s376 = scalar_lea.vmem %s11, %s375
      %p377 = scmp.lt.s32.totalorder %s24, 1
      %s378 = scalar_select %p377, %s24, 1
      %s379 = smul.addr %s378, 72
      %s380 = smul.addr %s379, 8
      %s381 = scalar_lea.vmem %s0, %s380
      %p382 = scmp.lt.s32.totalorder %s24, 1
      %s383 = scalar_select %p382, %s24, 1
      %s384 = scalar_lea.vmem %s11, %s383
      %v386 = vld [vmem:[%s381] sm:$0xff]
      %v387 = vld [vmem:[%s381 + $0x8] sm:$0xff]
      %v388 = vld [vmem:[%s381 + $0x10] sm:$0xff]
      %v389 = vld [vmem:[%s381 + $0x18] sm:$0xff]
      %v390 = vld [vmem:[%s381 + $0x20] sm:$0xff]
      %v391 = vld [vmem:[%s381 + $0x28] sm:$0xff]
      %v392 = vld [vmem:[%s381 + $0x30] sm:$0xff]
      %v393 = vld [vmem:[%s381 + $0x38] sm:$0xff]
      %v394 = vld [vmem:[%s381 + $0x40] sm:$0xff]
      %v395 = vld [vmem:[%s381 + $0x48] sm:$0xff]
      %v396 = vld [vmem:[%s381 + $0x50] sm:$0xff]
      %v397 = vld [vmem:[%s381 + $0x58] sm:$0xff]
      %v398 = vld [vmem:[%s381 + $0x60] sm:$0xff]
      %v399 = vld [vmem:[%s381 + $0x68] sm:$0xff]
      %v400 = vld [vmem:[%s381 + $0x70] sm:$0xff]
      %v401 = vld [vmem:[%s381 + $0x78] sm:$0xff]
      %v402 = vld [vmem:[%s381 + $0x80] sm:$0xff]
      %v403 = vld [vmem:[%s381 + $0x88] sm:$0xff]
      %v404 = vld [vmem:[%s381 + $0x90] sm:$0xff]
      %v405 = vld [vmem:[%s381 + $0x98] sm:$0xff]
      %v406 = vld [vmem:[%s381 + $0xa0] sm:$0xff]
      %v407 = vld [vmem:[%s381 + $0xa8] sm:$0xff]
      %v408 = vld [vmem:[%s381 + $0xb0] sm:$0xff]
      %v409 = vld [vmem:[%s381 + $0xb8] sm:$0xff]
      %v410 = vld [vmem:[%s381 + $0xc0] sm:$0xff]
      %v411 = vld [vmem:[%s381 + $0xc8] sm:$0xff]
      %v412 = vld [vmem:[%s381 + $0xd0] sm:$0xff]
      %v413 = vld [vmem:[%s381 + $0xd8] sm:$0xff]
      %v414 = vld [vmem:[%s381 + $0xe0] sm:$0xff]
      %v415 = vld [vmem:[%s381 + $0xe8] sm:$0xff]
      %v416 = vld [vmem:[%s381 + $0xf0] sm:$0xff]
      %v417 = vld [vmem:[%s381 + $0xf8] sm:$0xff]
      %v418 = vld [vmem:[%s381 + $0x100] sm:$0xff]
      %v419 = vld [vmem:[%s381 + $0x108] sm:$0xff]
      %v420 = vld [vmem:[%s381 + $0x110] sm:$0xff]
      %v421 = vld [vmem:[%s381 + $0x118] sm:$0xff]
      %v422 = vld [vmem:[%s381 + $0x120] sm:$0xff]
      %v423 = vld [vmem:[%s381 + $0x128] sm:$0xff]
      %v424 = vld [vmem:[%s381 + $0x130] sm:$0xff]
      %v425 = vld [vmem:[%s381 + $0x138] sm:$0xff]
      %v426 = vld [vmem:[%s381 + $0x140] sm:$0xff]
      %v427 = vld [vmem:[%s381 + $0x148] sm:$0xff]
      %v428 = vld [vmem:[%s381 + $0x150] sm:$0xff]
      %v429 = vld [vmem:[%s381 + $0x158] sm:$0xff]
      %v430 = vld [vmem:[%s381 + $0x160] sm:$0xff]
      %v431 = vld [vmem:[%s381 + $0x168] sm:$0xff]
      %v432 = vld [vmem:[%s381 + $0x170] sm:$0xff]
      %v433 = vld [vmem:[%s381 + $0x178] sm:$0xff]
      %v434 = vld [vmem:[%s381 + $0x180] sm:$0xff]
      %v435 = vld [vmem:[%s381 + $0x188] sm:$0xff]
      %v436 = vld [vmem:[%s381 + $0x190] sm:$0xff]
      %v437 = vld [vmem:[%s381 + $0x198] sm:$0xff]
      %v438 = vld [vmem:[%s381 + $0x1a0] sm:$0xff]
      %v439 = vld [vmem:[%s381 + $0x1a8] sm:$0xff]
      %v440 = vld [vmem:[%s381 + $0x1b0] sm:$0xff]
      %v441 = vld [vmem:[%s381 + $0x1b8] sm:$0xff]
      %v442 = vld [vmem:[%s381 + $0x1c0] sm:$0xff]
      %v443 = vld [vmem:[%s381 + $0x1c8] sm:$0xff]
      %v444 = vld [vmem:[%s381 + $0x1d0] sm:$0xff]
      %v445 = vld [vmem:[%s381 + $0x1d8] sm:$0xff]
      %v446 = vld [vmem:[%s381 + $0x1e0] sm:$0xff]
      %v447 = vld [vmem:[%s381 + $0x1e8] sm:$0xff]
      %v448 = vld [vmem:[%s381 + $0x1f0] sm:$0xff]
      %v449 = vld [vmem:[%s381 + $0x1f8] sm:$0xff]
      %v450 = vld [vmem:[%s381 + $0x200] sm:$0xff]
      %v451 = vld [vmem:[%s381 + $0x208] sm:$0xff]
      %v452 = vld [vmem:[%s381 + $0x210] sm:$0xff]
      %v453 = vld [vmem:[%s381 + $0x218] sm:$0xff]
      %v454 = vld [vmem:[%s381 + $0x220] sm:$0xff]
      %v455 = vld [vmem:[%s381 + $0x228] sm:$0xff]
      %v456 = vld [vmem:[%s381 + $0x230] sm:$0xff]
      %v457 = vld [vmem:[%s381 + $0x238] sm:$0xff]
      %v458 = vpack.c.bf16 %v387, %v386
      %v459 = vpack.c.bf16 %v389, %v388
      %v460 = vpack.c.bf16 %v391, %v390
      %v461 = vpack.c.bf16 %v393, %v392
      %v462 = vpack.c.bf16 %v395, %v394
      %v463 = vpack.c.bf16 %v397, %v396
      %v464 = vpack.c.bf16 %v399, %v398
      %v465 = vpack.c.bf16 %v401, %v400
      %v466 = vpack.c.bf16 %v403, %v402
      %v467 = vpack.c.bf16 %v405, %v404
      %v468 = vpack.c.bf16 %v407, %v406
      %v469 = vpack.c.bf16 %v409, %v408
      %v470 = vpack.c.bf16 %v411, %v410
      %v471 = vpack.c.bf16 %v413, %v412
      %v472 = vpack.c.bf16 %v415, %v414
      %v473 = vpack.c.bf16 %v417, %v416
      %v474 = vpack.c.bf16 %v419, %v418
      %v475 = vpack.c.bf16 %v421, %v420
      %v476 = vpack.c.bf16 %v423, %v422
      %v477 = vpack.c.bf16 %v425, %v424
      %v478 = vpack.c.bf16 %v427, %v426
      %v479 = vpack.c.bf16 %v429, %v428
      %v480 = vpack.c.bf16 %v431, %v430
      %v481 = vpack.c.bf16 %v433, %v432
      %v482 = vpack.c.bf16 %v435, %v434
      %v483 = vpack.c.bf16 %v437, %v436
      %v484 = vpack.c.bf16 %v439, %v438
      %v485 = vpack.c.bf16 %v441, %v440
      %v486 = vpack.c.bf16 %v443, %v442
      %v487 = vpack.c.bf16 %v445, %v444
      %v488 = vpack.c.bf16 %v447, %v446
      %v489 = vpack.c.bf16 %v449, %v448
      %v490 = vpack.c.bf16 %v451, %v450
      %v491 = vpack.c.bf16 %v453, %v452
      %v492 = vpack.c.bf16 %v455, %v454
      %v493 = vpack.c.bf16 %v457, %v456
      %v494 = vld [vmem:[%s1] sm:$0xf]
      %v495 = vld [vmem:[%s1 + $0x4] sm:$0xf]
      %v496 = vld [vmem:[%s2] sm:$0x1]
      %v498 = vlaneseq
      %v499 = vshrl.u32 %v498, 7
      %v500 = vsub.s32 0, %v499
      %v501 = vrot.slane %v496, %v500
      %v505 = vunpack.c.l.b16 %v494
      %v506 = vunpack.c.l.b16 %v495
      %v507 = vpack.c.b16 %v506, %v505
      %vm509 = vcmask 130048
      %v511 = vsel %vm509, %v458, 0
      %v514 = vsel %vm509, %v459, 0
      %v517 = vsel %vm509, %v460, 0
      %v520 = vsel %vm509, %v461, 0
      %v523 = vsel %vm509, %v462, 0
      %v526 = vsel %vm509, %v463, 0
      %v529 = vsel %vm509, %v464, 0
      %v532 = vsel %vm509, %v465, 0
      %v535 = vsel %vm509, %v466, 0
      %v538 = vsel %vm509, %v467, 0
      %v541 = vsel %vm509, %v468, 0
      %v544 = vsel %vm509, %v469, 0
      %v547 = vsel %vm509, %v470, 0
      %v550 = vsel %vm509, %v471, 0
      %v553 = vsel %vm509, %v472, 0
      %v556 = vsel %vm509, %v473, 0
      %v559 = vsel %vm509, %v474, 0
      %v562 = vsel %vm509, %v475, 0
      %v565 = vsel %vm509, %v476, 0
      %v568 = vsel %vm509, %v477, 0
      %v571 = vsel %vm509, %v478, 0
      %v574 = vsel %vm509, %v479, 0
      %v577 = vsel %vm509, %v480, 0
      %v580 = vsel %vm509, %v481, 0
      %v583 = vsel %vm509, %v482, 0
      %v586 = vsel %vm509, %v483, 0
      %v589 = vsel %vm509, %v484, 0
      %v592 = vsel %vm509, %v485, 0
      %v595 = vsel %vm509, %v486, 0
      %v598 = vsel %vm509, %v487, 0
      %v601 = vsel %vm509, %v488, 0
      %v604 = vsel %vm509, %v489, 0
      %v607 = vsel %vm509, %v490, 0
      %v610 = vsel %vm509, %v491, 0
      %v613 = vsel %vm509, %v492, 0
      %v616 = vsel %vm509, %v493, 0
      %618 = vmatprep.subr.bf16.mxu0 0
      %619 = vmatpush1.bf16.msra.mxu0 %v507
      %620 = vmatprep.subr.bf16.mxu0 0
      %621 = vmatpush1.bf16.msra.mxu0 0
      %622 = vmatprep.subr.bf16.mxu0 0
      %623 = vmatpush1.bf16.msra.mxu0 0
      %624 = vmatprep.subr.bf16.mxu0 0
      %625 = vmatpush1.bf16.msra.mxu0 0
      %626 = vmatprep.subr.bf16.mxu0 0
      %627 = vmatpush1.bf16.msra.mxu0 0
      %628 = vmatprep.subr.bf16.mxu0 0
      %629 = vmatpush1.bf16.msra.mxu0 0
      %630 = vmatprep.subr.bf16.mxu0 0
      %631 = vmatpush1.bf16.msra.mxu0 0
      %632 = vmatprep.subr.bf16.mxu0 0
      %633 = vmatpush1.bf16.msra.mxu0 0
      %634 = vmatprep.subr.bf16.mxu0 0
      %635 = vmatpush1.bf16.msra.mxu0 0
      %636 = vmatprep.subr.bf16.mxu0 0
      %637 = vmatpush1.bf16.msra.mxu0 0
      %638 = vmatprep.subr.bf16.mxu0 0
      %639 = vmatpush1.bf16.msra.mxu0 0
      %640 = vmatprep.subr.bf16.mxu0 0
      %641 = vmatpush1.bf16.msra.mxu0 0
      %642 = vmatprep.subr.bf16.mxu0 0
      %643 = vmatpush1.bf16.msra.mxu0 0
      %644 = vmatprep.subr.bf16.mxu0 0
      %645 = vmatpush1.bf16.msra.mxu0 0
      %646 = vmatprep.subr.bf16.mxu0 0
      %647 = vmatpush1.bf16.msra.mxu0 0
      %648 = vmatprep.subr.bf16.mxu0 0
      %649 = vmatpush1.bf16.msra.mxu0 0
      %650 = vmatprep.mubr.bf16.mxu0 0
      %651 = vmatmul.mubr.bf16.gmra.mrb[0].mxu0 %v511
      %v652 = vpop.f32.mrb[0].mxu0
      %v653 = vadd.f32 %v501, %v652
      %v654 = vpop.f32.mrb[0].mxu0
      %v655 = vpop.f32.mrb[0].mxu0
      %v656 = vadd.f32 %v501, %v655
      %v657 = vpop.f32.mrb[0].mxu0
      %658 = vmatprep.mubr.bf16.mxu0 0
      %659 = vmatmul.mubr.bf16.gmra.mrb[0].mxu0 %v514
      %v660 = vpop.f32.mrb[0].mxu0
      %v661 = vadd.f32 %v501, %v660
      %v662 = vpop.f32.mrb[0].mxu0
      %v663 = vpop.f32.mrb[0].mxu0
      %v664 = vadd.f32 %v501, %v663
      %v665 = vpop.f32.mrb[0].mxu0
      %666 = vmatprep.mubr.bf16.mxu0 0
      %667 = vmatmul.mubr.bf16.gmra.mrb[0].mxu0 %v517
      %v668 = vpop.f32.mrb[0].mxu0
      %v669 = vadd.f32 %v501, %v668
      %v670 = vpop.f32.mrb[0].mxu0
      %v671 = vpop.f32.mrb[0].mxu0
      %v672 = vadd.f32 %v501, %v671
      %v673 = vpop.f32.mrb[0].mxu0
      %674 = vmatprep.mubr.bf16.mxu0 0
      %675 = vmatmul.mubr.bf16.gmra.mrb[0].mxu0 %v520
      %v676 = vpop.f32.mrb[0].mxu0
      %v677 = vadd.f32 %v501, %v676
      %v678 = vpop.f32.mrb[0].mxu0
      %v679 = vpop.f32.mrb[0].mxu0
      %v680 = vadd.f32 %v501, %v679
      %v681 = vpop.f32.mrb[0].mxu0
      %682 = vmatprep.mubr.bf16.mxu0 0
      %683 = vmatmul.mubr.bf16.gmra.mrb[0].mxu0 %v523
      %v684 = vpop.f32.mrb[0].mxu0
      %v685 = vadd.f32 %v501, %v684
      %v686 = vpop.f32.mrb[0].mxu0
      %v687 = vpop.f32.mrb[0].mxu0
      %v688 = vadd.f32 %v501, %v687
      %v689 = vpop.f32.mrb[0].mxu0
      %690 = vmatprep.mubr.bf16.mxu0 0
      %691 = vmatmul.mubr.bf16.gmra.mrb[0].mxu0 %v526
      %v692 = vpop.f32.mrb[0].mxu0
      %v693 = vadd.f32 %v501, %v692
      %v694 = vpop.f32.mrb[0].mxu0
      %v695 = vpop.f32.mrb[0].mxu0
      %v696 = vadd.f32 %v501, %v695
      %v697 = vpop.f32.mrb[0].mxu0
      %698 = vmatprep.mubr.bf16.mxu0 0
      %699 = vmatmul.mubr.bf16.gmra.mrb[0].mxu0 %v529
      %v700 = vpop.f32.mrb[0].mxu0
      %v701 = vadd.f32 %v501, %v700
      %v702 = vpop.f32.mrb[0].mxu0
      %v703 = vpop.f32.mrb[0].mxu0
      %v704 = vadd.f32 %v501, %v703
      %v705 = vpop.f32.mrb[0].mxu0
      %706 = vmatprep.mubr.bf16.mxu0 0
      %707 = vmatmul.mubr.bf16.gmra.mrb[0].mxu0 %v532
      %v708 = vpop.f32.mrb[0].mxu0
      %v709 = vadd.f32 %v501, %v708
      %v710 = vpop.f32.mrb[0].mxu0
      %v711 = vpop.f32.mrb[0].mxu0
      %v712 = vadd.f32 %v501, %v711
      %v713 = vpop.f32.mrb[0].mxu0
      %714 = vmatprep.mubr.bf16.mxu0 0
      %715 = vmatmul.mubr.bf16.gmra.mrb[0].mxu0 %v535
      %v716 = vpop.f32.mrb[0].mxu0
      %v717 = vadd.f32 %v501, %v716
      %v718 = vpop.f32.mrb[0].mxu0
      %v719 = vpop.f32.mrb[0].mxu0
      %v720 = vadd.f32 %v501, %v719
      %v721 = vpop.f32.mrb[0].mxu0
      %722 = vmatprep.mubr.bf16.mxu0 0
      %723 = vmatmul.mubr.bf16.gmra.mrb[0].mxu0 %v538
      %v724 = vpop.f32.mrb[0].mxu0
      %v725 = vadd.f32 %v501, %v724
      %v726 = vpop.f32.mrb[0].mxu0
      %v727 = vpop.f32.mrb[0].mxu0
      %v728 = vadd.f32 %v501, %v727
      %v729 = vpop.f32.mrb[0].mxu0
      %730 = vmatprep.mubr.bf16.mxu0 0
      %731 = vmatmul.mubr.bf16.gmra.mrb[0].mxu0 %v541
      %v732 = vpop.f32.mrb[0].mxu0
      %v733 = vadd.f32 %v501, %v732
      %v734 = vpop.f32.mrb[0].mxu0
      %v735 = vpop.f32.mrb[0].mxu0
      %v736 = vadd.f32 %v501, %v735
      %v737 = vpop.f32.mrb[0].mxu0
      %738 = vmatprep.mubr.bf16.mxu0 0
      %739 = vmatmul.mubr.bf16.gmra.mrb[0].mxu0 %v544
      %v740 = vpop.f32.mrb[0].mxu0
      %v741 = vadd.f32 %v501, %v740
      %v742 = vpop.f32.mrb[0].mxu0
      %v743 = vpop.f32.mrb[0].mxu0
      %v744 = vadd.f32 %v501, %v743
      %v745 = vpop.f32.mrb[0].mxu0
      %746 = vmatprep.mubr.bf16.mxu0 0
      %747 = vmatmul.mubr.bf16.gmra.mrb[0].mxu0 %v547
      %v748 = vpop.f32.mrb[0].mxu0
      %v749 = vadd.f32 %v501, %v748
      %v750 = vpop.f32.mrb[0].mxu0
      %v751 = vpop.f32.mrb[0].mxu0
      %v752 = vadd.f32 %v501, %v751
      %v753 = vpop.f32.mrb[0].mxu0
      %754 = vmatprep.mubr.bf16.mxu0 0
      %755 = vmatmul.mubr.bf16.gmra.mrb[0].mxu0 %v550
      %v756 = vpop.f32.mrb[0].mxu0
      %v757 = vadd.f32 %v501, %v756
      %v758 = vpop.f32.mrb[0].mxu0
      %v759 = vpop.f32.mrb[0].mxu0
      %v760 = vadd.f32 %v501, %v759
      %v761 = vpop.f32.mrb[0].mxu0
      %762 = vmatprep.mubr.bf16.mxu0 0
      %763 = vmatmul.mubr.bf16.gmra.mrb[0].mxu0 %v553
      %v764 = vpop.f32.mrb[0].mxu0
      %v765 = vadd.f32 %v501, %v764
      %v766 = vpop.f32.mrb[0].mxu0
      %v767 = vpop.f32.mrb[0].mxu0
      %v768 = vadd.f32 %v501, %v767
      %v769 = vpop.f32.mrb[0].mxu0
      %770 = vmatprep.mubr.bf16.mxu0 0
      %771 = vmatmul.mubr.bf16.gmra.mrb[0].mxu0 %v556
      %v772 = vpop.f32.mrb[0].mxu0
      %v773 = vadd.f32 %v501, %v772
      %v774 = vpop.f32.mrb[0].mxu0
      %v775 = vpop.f32.mrb[0].mxu0
      %v776 = vadd.f32 %v501, %v775
      %v777 = vpop.f32.mrb[0].mxu0
      %778 = vmatprep.mubr.bf16.mxu0 0
      %779 = vmatmul.mubr.bf16.gmra.mrb[0].mxu0 %v559
      %v780 = vpop.f32.mrb[0].mxu0
      %v781 = vadd.f32 %v501, %v780
      %v782 = vpop.f32.mrb[0].mxu0
      %v783 = vpop.f32.mrb[0].mxu0
      %v784 = vadd.f32 %v501, %v783
      %v785 = vpop.f32.mrb[0].mxu0
      %786 = vmatprep.mubr.bf16.mxu0 0
      %787 = vmatmul.mubr.bf16.gmra.mrb[0].mxu0 %v562
      %v788 = vpop.f32.mrb[0].mxu0
      %v789 = vadd.f32 %v501, %v788
      %v790 = vpop.f32.mrb[0].mxu0
      %v791 = vpop.f32.mrb[0].mxu0
      %v792 = vadd.f32 %v501, %v791
      %v793 = vpop.f32.mrb[0].mxu0
      %794 = vmatprep.mubr.bf16.mxu0 0
      %795 = vmatmul.mubr.bf16.gmra.mrb[0].mxu0 %v565
      %v796 = vpop.f32.mrb[0].mxu0
      %v797 = vadd.f32 %v501, %v796
      %v798 = vpop.f32.mrb[0].mxu0
      %v799 = vpop.f32.mrb[0].mxu0
      %v800 = vadd.f32 %v501, %v799
      %v801 = vpop.f32.mrb[0].mxu0
      %802 = vmatprep.mubr.bf16.mxu0 0
      %803 = vmatmul.mubr.bf16.gmra.mrb[0].mxu0 %v568
      %v804 = vpop.f32.mrb[0].mxu0
      %v805 = vadd.f32 %v501, %v804
      %v806 = vpop.f32.mrb[0].mxu0
      %v807 = vpop.f32.mrb[0].mxu0
      %v808 = vadd.f32 %v501, %v807
      %v809 = vpop.f32.mrb[0].mxu0
      %810 = vmatprep.mubr.bf16.mxu0 0
      %811 = vmatmul.mubr.bf16.gmra.mrb[0].mxu0 %v571
      %v812 = vpop.f32.mrb[0].mxu0
      %v813 = vadd.f32 %v501, %v812
      %v814 = vpop.f32.mrb[0].mxu0
      %v815 = vpop.f32.mrb[0].mxu0
      %v816 = vadd.f32 %v501, %v815
      %v817 = vpop.f32.mrb[0].mxu0
      %818 = vmatprep.mubr.bf16.mxu0 0
      %819 = vmatmul.mubr.bf16.gmra.mrb[0].mxu0 %v574
      %v820 = vpop.f32.mrb[0].mxu0
      %v821 = vadd.f32 %v501, %v820
      %v822 = vpop.f32.mrb[0].mxu0
      %v823 = vpop.f32.mrb[0].mxu0
      %v824 = vadd.f32 %v501, %v823
      %v825 = vpop.f32.mrb[0].mxu0
      %826 = vmatprep.mubr.bf16.mxu0 0
      %827 = vmatmul.mubr.bf16.gmra.mrb[0].mxu0 %v577
      %v828 = vpop.f32.mrb[0].mxu0
      %v829 = vadd.f32 %v501, %v828
      %v830 = vpop.f32.mrb[0].mxu0
      %v831 = vpop.f32.mrb[0].mxu0
      %v832 = vadd.f32 %v501, %v831
      %v833 = vpop.f32.mrb[0].mxu0
      %834 = vmatprep.mubr.bf16.mxu0 0
      %835 = vmatmul.mubr.bf16.gmra.mrb[0].mxu0 %v580
      %v836 = vpop.f32.mrb[0].mxu0
      %v837 = vadd.f32 %v501, %v836
      %v838 = vpop.f32.mrb[0].mxu0
      %v839 = vpop.f32.mrb[0].mxu0
      %v840 = vadd.f32 %v501, %v839
      %v841 = vpop.f32.mrb[0].mxu0
      %842 = vmatprep.mubr.bf16.mxu0 0
      %843 = vmatmul.mubr.bf16.gmra.mrb[0].mxu0 %v583
      %v844 = vpop.f32.mrb[0].mxu0
      %v845 = vadd.f32 %v501, %v844
      %v846 = vpop.f32.mrb[0].mxu0
      %v847 = vpop.f32.mrb[0].mxu0
      %v848 = vadd.f32 %v501, %v847
      %v849 = vpop.f32.mrb[0].mxu0
      %850 = vmatprep.mubr.bf16.mxu0 0
      %851 = vmatmul.mubr.bf16.gmra.mrb[0].mxu0 %v586
      %v852 = vpop.f32.mrb[0].mxu0
      %v853 = vadd.f32 %v501, %v852
      %v854 = vpop.f32.mrb[0].mxu0
      %v855 = vpop.f32.mrb[0].mxu0
      %v856 = vadd.f32 %v501, %v855
      %v857 = vpop.f32.mrb[0].mxu0
      %858 = vmatprep.mubr.bf16.mxu0 0
      %859 = vmatmul.mubr.bf16.gmra.mrb[0].mxu0 %v589
      %v860 = vpop.f32.mrb[0].mxu0
      %v861 = vadd.f32 %v501, %v860
      %v862 = vpop.f32.mrb[0].mxu0
      %v863 = vpop.f32.mrb[0].mxu0
      %v864 = vadd.f32 %v501, %v863
      %v865 = vpop.f32.mrb[0].mxu0
      %866 = vmatprep.mubr.bf16.mxu0 0
      %867 = vmatmul.mubr.bf16.gmra.mrb[0].mxu0 %v592
      %v868 = vpop.f32.mrb[0].mxu0
      %v869 = vadd.f32 %v501, %v868
      %v870 = vpop.f32.mrb[0].mxu0
      %v871 = vpop.f32.mrb[0].mxu0
      %v872 = vadd.f32 %v501, %v871
      %v873 = vpop.f32.mrb[0].mxu0
      %874 = vmatprep.mubr.bf16.mxu0 0
      %875 = vmatmul.mubr.bf16.gmra.mrb[0].mxu0 %v595
      %v876 = vpop.f32.mrb[0].mxu0
      %v877 = vadd.f32 %v501, %v876
      %v878 = vpop.f32.mrb[0].mxu0
      %v879 = vpop.f32.mrb[0].mxu0
      %v880 = vadd.f32 %v501, %v879
      %v881 = vpop.f32.mrb[0].mxu0
      %882 = vmatprep.mubr.bf16.mxu0 0
      %883 = vmatmul.mubr.bf16.gmra.mrb[0].mxu0 %v598
      %v884 = vpop.f32.mrb[0].mxu0
      %v885 = vadd.f32 %v501, %v884
      %v886 = vpop.f32.mrb[0].mxu0
      %v887 = vpop.f32.mrb[0].mxu0
      %v888 = vadd.f32 %v501, %v887
      %v889 = vpop.f32.mrb[0].mxu0
      %890 = vmatprep.mubr.bf16.mxu0 0
      %891 = vmatmul.mubr.bf16.gmra.mrb[0].mxu0 %v601
      %v892 = vpop.f32.mrb[0].mxu0
      %v893 = vadd.f32 %v501, %v892
      %v894 = vpop.f32.mrb[0].mxu0
      %v895 = vpop.f32.mrb[0].mxu0
      %v896 = vadd.f32 %v501, %v895
      %v897 = vpop.f32.mrb[0].mxu0
      %898 = vmatprep.mubr.bf16.mxu0 0
      %899 = vmatmul.mubr.bf16.gmra.mrb[0].mxu0 %v604
      %v900 = vpop.f32.mrb[0].mxu0
      %v901 = vadd.f32 %v501, %v900
      %v902 = vpop.f32.mrb[0].mxu0
      %v903 = vpop.f32.mrb[0].mxu0
      %v904 = vadd.f32 %v501, %v903
      %v905 = vpop.f32.mrb[0].mxu0
      %906 = vmatprep.mubr.bf16.mxu0 0
      %907 = vmatmul.mubr.bf16.gmra.mrb[0].mxu0 %v607
      %v908 = vpop.f32.mrb[0].mxu0
      %v909 = vadd.f32 %v501, %v908
      %v910 = vpop.f32.mrb[0].mxu0
      %v911 = vpop.f32.mrb[0].mxu0
      %v912 = vadd.f32 %v501, %v911
      %v913 = vpop.f32.mrb[0].mxu0
      %914 = vmatprep.mubr.bf16.mxu0 0
      %915 = vmatmul.mubr.bf16.gmra.mrb[0].mxu0 %v610
      %v916 = vpop.f32.mrb[0].mxu0
      %v917 = vadd.f32 %v501, %v916
      %v918 = vpop.f32.mrb[0].mxu0
      %v919 = vpop.f32.mrb[0].mxu0
      %v920 = vadd.f32 %v501, %v919
      %v921 = vpop.f32.mrb[0].mxu0
      %922 = vmatprep.mubr.bf16.mxu0 0
      %923 = vmatmul.mubr.bf16.gmra.mrb[0].mxu0 %v613
      %v924 = vpop.f32.mrb[0].mxu0
      %v925 = vadd.f32 %v501, %v924
      %v926 = vpop.f32.mrb[0].mxu0
      %v927 = vpop.f32.mrb[0].mxu0
      %v928 = vadd.f32 %v501, %v927
      %v929 = vpop.f32.mrb[0].mxu0
      %930 = vmatprep.mubr.bf16.mxu0 0
      %931 = vmatmul.mubr.bf16.gmra.mrb[0].mxu0 %v616
      %v932 = vpop.f32.mrb[0].mxu0
      %v933 = vadd.f32 %v501, %v932
      %v934 = vpop.f32.mrb[0].mxu0
      %v935 = vpop.f32.mrb[0].mxu0
      %v936 = vadd.f32 %v501, %v935
      %v937 = vpop.f32.mrb[0].mxu0
      %938 = vdwg.mxu0
      %vm939 = vcmp.gt.f32.partialorder %v653, 0.0
      %vm940 = vcmp.gt.f32.partialorder %v656, 0.0
      %vm941 = vcmp.gt.f32.partialorder %v661, 0.0
      %vm942 = vcmp.gt.f32.partialorder %v664, 0.0
      %vm943 = vcmp.gt.f32.partialorder %v669, 0.0
      %vm944 = vcmp.gt.f32.partialorder %v672, 0.0
      %vm945 = vcmp.gt.f32.partialorder %v677, 0.0
      %vm946 = vcmp.gt.f32.partialorder %v680, 0.0
      %vm947 = vcmp.gt.f32.partialorder %v685, 0.0
      %vm948 = vcmp.gt.f32.partialorder %v688, 0.0
      %vm949 = vcmp.gt.f32.partialorder %v693, 0.0
      %vm950 = vcmp.gt.f32.partialorder %v696, 0.0
      %vm951 = vcmp.gt.f32.partialorder %v701, 0.0
      %vm952 = vcmp.gt.f32.partialorder %v704, 0.0
      %vm953 = vcmp.gt.f32.partialorder %v709, 0.0
      %vm954 = vcmp.gt.f32.partialorder %v712, 0.0
      %vm955 = vcmp.gt.f32.partialorder %v717, 0.0
      %vm956 = vcmp.gt.f32.partialorder %v720, 0.0
      %vm957 = vcmp.gt.f32.partialorder %v725, 0.0
      %vm958 = vcmp.gt.f32.partialorder %v728, 0.0
      %vm959 = vcmp.gt.f32.partialorder %v733, 0.0
      %vm960 = vcmp.gt.f32.partialorder %v736, 0.0
      %vm961 = vcmp.gt.f32.partialorder %v741, 0.0
      %vm962 = vcmp.gt.f32.partialorder %v744, 0.0
      %vm963 = vcmp.gt.f32.partialorder %v749, 0.0
      %vm964 = vcmp.gt.f32.partialorder %v752, 0.0
      %vm965 = vcmp.gt.f32.partialorder %v757, 0.0
      %vm966 = vcmp.gt.f32.partialorder %v760, 0.0
      %vm967 = vcmp.gt.f32.partialorder %v765, 0.0
      %vm968 = vcmp.gt.f32.partialorder %v768, 0.0
      %vm969 = vcmp.gt.f32.partialorder %v773, 0.0
      %vm970 = vcmp.gt.f32.partialorder %v776, 0.0
      %vm971 = vcmp.gt.f32.partialorder %v781, 0.0
      %vm972 = vcmp.gt.f32.partialorder %v784, 0.0
      %vm973 = vcmp.gt.f32.partialorder %v789, 0.0
      %vm974 = vcmp.gt.f32.partialorder %v792, 0.0
      %vm975 = vcmp.gt.f32.partialorder %v797, 0.0
      %vm976 = vcmp.gt.f32.partialorder %v800, 0.0
      %vm977 = vcmp.gt.f32.partialorder %v805, 0.0
      %vm978 = vcmp.gt.f32.partialorder %v808, 0.0
      %vm979 = vcmp.gt.f32.partialorder %v813, 0.0
      %vm980 = vcmp.gt.f32.partialorder %v816, 0.0
      %vm981 = vcmp.gt.f32.partialorder %v821, 0.0
      %vm982 = vcmp.gt.f32.partialorder %v824, 0.0
      %vm983 = vcmp.gt.f32.partialorder %v829, 0.0
      %vm984 = vcmp.gt.f32.partialorder %v832, 0.0
      %vm985 = vcmp.gt.f32.partialorder %v837, 0.0
      %vm986 = vcmp.gt.f32.partialorder %v840, 0.0
      %vm987 = vcmp.gt.f32.partialorder %v845, 0.0
      %vm988 = vcmp.gt.f32.partialorder %v848, 0.0
      %vm989 = vcmp.gt.f32.partialorder %v853, 0.0
      %vm990 = vcmp.gt.f32.partialorder %v856, 0.0
      %vm991 = vcmp.gt.f32.partialorder %v861, 0.0
      %vm992 = vcmp.gt.f32.partialorder %v864, 0.0
      %vm993 = vcmp.gt.f32.partialorder %v869, 0.0
      %vm994 = vcmp.gt.f32.partialorder %v872, 0.0
      %vm995 = vcmp.gt.f32.partialorder %v877, 0.0
      %vm996 = vcmp.gt.f32.partialorder %v880, 0.0
      %vm997 = vcmp.gt.f32.partialorder %v885, 0.0
      %vm998 = vcmp.gt.f32.partialorder %v888, 0.0
      %vm999 = vcmp.gt.f32.partialorder %v893, 0.0
      %vm1000 = vcmp.gt.f32.partialorder %v896, 0.0
      %vm1001 = vcmp.gt.f32.partialorder %v901, 0.0
      %vm1002 = vcmp.gt.f32.partialorder %v904, 0.0
      %vm1003 = vcmp.gt.f32.partialorder %v909, 0.0
      %vm1004 = vcmp.gt.f32.partialorder %v912, 0.0
      %vm1005 = vcmp.gt.f32.partialorder %v917, 0.0
      %vm1006 = vcmp.gt.f32.partialorder %v920, 0.0
      %vm1007 = vcmp.gt.f32.partialorder %v925, 0.0
      %vm1008 = vcmp.gt.f32.partialorder %v928, 0.0
      %vm1009 = vcmp.gt.f32.partialorder %v933, 0.0
      %vm1010 = vcmp.gt.f32.partialorder %v936, 0.0
      %v1011 = vmul.f32 %v653, 0.01
      %v1012 = vmul.f32 %v656, 0.01
      %v1013 = vmul.f32 %v661, 0.01
      %v1014 = vmul.f32 %v664, 0.01
      %v1015 = vmul.f32 %v669, 0.01
      %v1016 = vmul.f32 %v672, 0.01
      %v1017 = vmul.f32 %v677, 0.01
      %v1018 = vmul.f32 %v680, 0.01
      %v1019 = vmul.f32 %v685, 0.01
      %v1020 = vmul.f32 %v688, 0.01
      %v1021 = vmul.f32 %v693, 0.01
      %v1022 = vmul.f32 %v696, 0.01
      %v1023 = vmul.f32 %v701, 0.01
      %v1024 = vmul.f32 %v704, 0.01
      %v1025 = vmul.f32 %v709, 0.01
      %v1026 = vmul.f32 %v712, 0.01
      %v1027 = vmul.f32 %v717, 0.01
      %v1028 = vmul.f32 %v720, 0.01
      %v1029 = vmul.f32 %v725, 0.01
      %v1030 = vmul.f32 %v728, 0.01
      %v1031 = vmul.f32 %v733, 0.01
      %v1032 = vmul.f32 %v736, 0.01
      %v1033 = vmul.f32 %v741, 0.01
      %v1034 = vmul.f32 %v744, 0.01
      %v1035 = vmul.f32 %v749, 0.01
      %v1036 = vmul.f32 %v752, 0.01
      %v1037 = vmul.f32 %v757, 0.01
      %v1038 = vmul.f32 %v760, 0.01
      %v1039 = vmul.f32 %v765, 0.01
      %v1040 = vmul.f32 %v768, 0.01
      %v1041 = vmul.f32 %v773, 0.01
      %v1042 = vmul.f32 %v776, 0.01
      %v1043 = vmul.f32 %v781, 0.01
      %v1044 = vmul.f32 %v784, 0.01
      %v1045 = vmul.f32 %v789, 0.01
      %v1046 = vmul.f32 %v792, 0.01
      %v1047 = vmul.f32 %v797, 0.01
      %v1048 = vmul.f32 %v800, 0.01
      %v1049 = vmul.f32 %v805, 0.01
      %v1050 = vmul.f32 %v808, 0.01
      %v1051 = vmul.f32 %v813, 0.01
      %v1052 = vmul.f32 %v816, 0.01
      %v1053 = vmul.f32 %v821, 0.01
      %v1054 = vmul.f32 %v824, 0.01
      %v1055 = vmul.f32 %v829, 0.01
      %v1056 = vmul.f32 %v832, 0.01
      %v1057 = vmul.f32 %v837, 0.01
      %v1058 = vmul.f32 %v840, 0.01
      %v1059 = vmul.f32 %v845, 0.01
      %v1060 = vmul.f32 %v848, 0.01
      %v1061 = vmul.f32 %v853, 0.01
      %v1062 = vmul.f32 %v856, 0.01
      %v1063 = vmul.f32 %v861, 0.01
      %v1064 = vmul.f32 %v864, 0.01
      %v1065 = vmul.f32 %v869, 0.01
      %v1066 = vmul.f32 %v872, 0.01
      %v1067 = vmul.f32 %v877, 0.01
      %v1068 = vmul.f32 %v880, 0.01
      %v1069 = vmul.f32 %v885, 0.01
      %v1070 = vmul.f32 %v888, 0.01
      %v1071 = vmul.f32 %v893, 0.01
      %v1072 = vmul.f32 %v896, 0.01
      %v1073 = vmul.f32 %v901, 0.01
      %v1074 = vmul.f32 %v904, 0.01
      %v1075 = vmul.f32 %v909, 0.01
      %v1076 = vmul.f32 %v912, 0.01
      %v1077 = vmul.f32 %v917, 0.01
      %v1078 = vmul.f32 %v920, 0.01
      %v1079 = vmul.f32 %v925, 0.01
      %v1080 = vmul.f32 %v928, 0.01
      %v1081 = vmul.f32 %v933, 0.01
      %v1082 = vmul.f32 %v936, 0.01
      %v1083 = vsel %vm939, %v653, %v1011
      %v1084 = vsel %vm940, %v656, %v1012
      %v1085 = vsel %vm941, %v661, %v1013
      %v1086 = vsel %vm942, %v664, %v1014
      %v1087 = vsel %vm943, %v669, %v1015
      %v1088 = vsel %vm944, %v672, %v1016
      %v1089 = vsel %vm945, %v677, %v1017
      %v1090 = vsel %vm946, %v680, %v1018
      %v1091 = vsel %vm947, %v685, %v1019
      %v1092 = vsel %vm948, %v688, %v1020
      %v1093 = vsel %vm949, %v693, %v1021
      %v1094 = vsel %vm950, %v696, %v1022
      %v1095 = vsel %vm951, %v701, %v1023
      %v1096 = vsel %vm952, %v704, %v1024
      %v1097 = vsel %vm953, %v709, %v1025
      %v1098 = vsel %vm954, %v712, %v1026
      %v1099 = vsel %vm955, %v717, %v1027
      %v1100 = vsel %vm956, %v720, %v1028
      %v1101 = vsel %vm957, %v725, %v1029
      %v1102 = vsel %vm958, %v728, %v1030
      %v1103 = vsel %vm959, %v733, %v1031
      %v1104 = vsel %vm960, %v736, %v1032
      %v1105 = vsel %vm961, %v741, %v1033
      %v1106 = vsel %vm962, %v744, %v1034
      %v1107 = vsel %vm963, %v749, %v1035
      %v1108 = vsel %vm964, %v752, %v1036
      %v1109 = vsel %vm965, %v757, %v1037
      %v1110 = vsel %vm966, %v760, %v1038
      %v1111 = vsel %vm967, %v765, %v1039
      %v1112 = vsel %vm968, %v768, %v1040
      %v1113 = vsel %vm969, %v773, %v1041
      %v1114 = vsel %vm970, %v776, %v1042
      %v1115 = vsel %vm971, %v781, %v1043
      %v1116 = vsel %vm972, %v784, %v1044
      %v1117 = vsel %vm973, %v789, %v1045
      %v1118 = vsel %vm974, %v792, %v1046
      %v1119 = vsel %vm975, %v797, %v1047
      %v1120 = vsel %vm976, %v800, %v1048
      %v1121 = vsel %vm977, %v805, %v1049
      %v1122 = vsel %vm978, %v808, %v1050
      %v1123 = vsel %vm979, %v813, %v1051
      %v1124 = vsel %vm980, %v816, %v1052
      %v1125 = vsel %vm981, %v821, %v1053
      %v1126 = vsel %vm982, %v824, %v1054
      %v1127 = vsel %vm983, %v829, %v1055
      %v1128 = vsel %vm984, %v832, %v1056
      %v1129 = vsel %vm985, %v837, %v1057
      %v1130 = vsel %vm986, %v840, %v1058
      %v1131 = vsel %vm987, %v845, %v1059
      %v1132 = vsel %vm988, %v848, %v1060
      %v1133 = vsel %vm989, %v853, %v1061
      %v1134 = vsel %vm990, %v856, %v1062
      %v1135 = vsel %vm991, %v861, %v1063
      %v1136 = vsel %vm992, %v864, %v1064
      %v1137 = vsel %vm993, %v869, %v1065
      %v1138 = vsel %vm994, %v872, %v1066
      %v1139 = vsel %vm995, %v877, %v1067
      %v1140 = vsel %vm996, %v880, %v1068
      %v1141 = vsel %vm997, %v885, %v1069
      %v1142 = vsel %vm998, %v888, %v1070
      %v1143 = vsel %vm999, %v893, %v1071
      %v1144 = vsel %vm1000, %v896, %v1072
      %v1145 = vsel %vm1001, %v901, %v1073
      %v1146 = vsel %vm1002, %v904, %v1074
      %v1147 = vsel %vm1003, %v909, %v1075
      %v1148 = vsel %vm1004, %v912, %v1076
      %v1149 = vsel %vm1005, %v917, %v1077
      %v1150 = vsel %vm1006, %v920, %v1078
      %v1151 = vsel %vm1007, %v925, %v1079
      %v1152 = vsel %vm1008, %v928, %v1080
      %v1153 = vsel %vm1009, %v933, %v1081
      %v1154 = vsel %vm1010, %v936, %v1082
      %v1155 = vadd.f32 %v1083, %v1084
      %v1156 = vadd.f32 %v1155, %v1085
      %v1157 = vadd.f32 %v1156, %v1086
      %v1158 = vadd.f32 %v1157, %v1087
      %v1159 = vadd.f32 %v1158, %v1088
      %v1160 = vadd.f32 %v1159, %v1089
      %v1161 = vadd.f32 %v1160, %v1090
      %v1162 = vadd.f32 %v1161, %v1091
      %v1163 = vadd.f32 %v1162, %v1092
      %v1164 = vadd.f32 %v1163, %v1093
      %v1165 = vadd.f32 %v1164, %v1094
      %v1166 = vadd.f32 %v1165, %v1095
      %v1167 = vadd.f32 %v1166, %v1096
      %v1168 = vadd.f32 %v1167, %v1097
      %v1169 = vadd.f32 %v1168, %v1098
      %v1170 = vadd.f32 %v1169, %v1099
      %v1171 = vadd.f32 %v1170, %v1100
      %v1172 = vadd.f32 %v1171, %v1101
      %v1173 = vadd.f32 %v1172, %v1102
      %v1174 = vadd.f32 %v1173, %v1103
      %v1175 = vadd.f32 %v1174, %v1104
      %v1176 = vadd.f32 %v1175, %v1105
      %v1177 = vadd.f32 %v1176, %v1106
      %v1178 = vadd.f32 %v1177, %v1107
      %v1179 = vadd.f32 %v1178, %v1108
      %v1180 = vadd.f32 %v1179, %v1109
      %v1181 = vadd.f32 %v1180, %v1110
      %v1182 = vadd.f32 %v1181, %v1111
      %v1183 = vadd.f32 %v1182, %v1112
      %v1184 = vadd.f32 %v1183, %v1113
      %v1185 = vadd.f32 %v1184, %v1114
      %v1186 = vadd.f32 %v1185, %v1115
      %v1187 = vadd.f32 %v1186, %v1116
      %v1188 = vadd.f32 %v1187, %v1117
      %v1189 = vadd.f32 %v1188, %v1118
      %v1190 = vadd.f32 %v1189, %v1119
      %v1191 = vadd.f32 %v1190, %v1120
      %v1192 = vadd.f32 %v1191, %v1121
      %v1193 = vadd.f32 %v1192, %v1122
      %v1194 = vadd.f32 %v1193, %v1123
      %v1195 = vadd.f32 %v1194, %v1124
      %v1196 = vadd.f32 %v1195, %v1125
      %v1197 = vadd.f32 %v1196, %v1126
      %v1198 = vadd.f32 %v1197, %v1127
      %v1199 = vadd.f32 %v1198, %v1128
      %v1200 = vadd.f32 %v1199, %v1129
      %v1201 = vadd.f32 %v1200, %v1130
      %v1202 = vadd.f32 %v1201, %v1131
      %v1203 = vadd.f32 %v1202, %v1132
      %v1204 = vadd.f32 %v1203, %v1133
      %v1205 = vadd.f32 %v1204, %v1134
      %v1206 = vadd.f32 %v1205, %v1135
      %v1207 = vadd.f32 %v1206, %v1136
      %v1208 = vadd.f32 %v1207, %v1137
      %v1209 = vadd.f32 %v1208, %v1138
      %v1210 = vadd.f32 %v1209, %v1139
      %v1211 = vadd.f32 %v1210, %v1140
      %v1212 = vadd.f32 %v1211, %v1141
      %v1213 = vadd.f32 %v1212, %v1142
      %v1214 = vadd.f32 %v1213, %v1143
      %v1215 = vadd.f32 %v1214, %v1144
      %v1216 = vadd.f32 %v1215, %v1145
      %v1217 = vadd.f32 %v1216, %v1146
      %v1218 = vadd.f32 %v1217, %v1147
      %v1219 = vadd.f32 %v1218, %v1148
      %v1220 = vadd.f32 %v1219, %v1149
      %v1221 = vadd.f32 %v1220, %v1150
      %v1222 = vadd.f32 %v1221, %v1151
      %v1223 = vadd.f32 %v1222, %v1152
      %v1224 = vadd.f32 %v1223, %v1153
      %v1225 = vadd.f32 %v1224, %v1154
      %v1226 = vrot.slane %v1225, 4
      %v1227 = vadd.f32 %v1225, %v1226
      %v1228 = vrot.slane %v1227, 2
      %v1229 = vadd.f32 %v1227, %v1228
      %v1230 = vrot.slane %v1229, 1
      %v1231 = vadd.f32 %v1229, %v1230
      %v1232 = vmul.f32 %v1083, %v1083
      %v1233 = vmul.f32 %v1084, %v1084
      %v1234 = vmul.f32 %v1085, %v1085
      %v1235 = vmul.f32 %v1086, %v1086
      %v1236 = vmul.f32 %v1087, %v1087
      %v1237 = vmul.f32 %v1088, %v1088
      %v1238 = vmul.f32 %v1089, %v1089
      %v1239 = vmul.f32 %v1090, %v1090
      %v1240 = vmul.f32 %v1091, %v1091
      %v1241 = vmul.f32 %v1092, %v1092
      %v1242 = vmul.f32 %v1093, %v1093
      %v1243 = vmul.f32 %v1094, %v1094
      %v1244 = vmul.f32 %v1095, %v1095
      %v1245 = vmul.f32 %v1096, %v1096
      %v1246 = vmul.f32 %v1097, %v1097
      %v1247 = vmul.f32 %v1098, %v1098
      %v1248 = vmul.f32 %v1099, %v1099
      %v1249 = vmul.f32 %v1100, %v1100
      %v1250 = vmul.f32 %v1101, %v1101
      %v1251 = vmul.f32 %v1102, %v1102
      %v1252 = vmul.f32 %v1103, %v1103
      %v1253 = vmul.f32 %v1104, %v1104
      %v1254 = vmul.f32 %v1105, %v1105
      %v1255 = vmul.f32 %v1106, %v1106
      %v1256 = vmul.f32 %v1107, %v1107
      %v1257 = vmul.f32 %v1108, %v1108
      %v1258 = vmul.f32 %v1109, %v1109
      %v1259 = vmul.f32 %v1110, %v1110
      %v1260 = vmul.f32 %v1111, %v1111
      %v1261 = vmul.f32 %v1112, %v1112
      %v1262 = vmul.f32 %v1113, %v1113
      %v1263 = vmul.f32 %v1114, %v1114
      %v1264 = vmul.f32 %v1115, %v1115
      %v1265 = vmul.f32 %v1116, %v1116
      %v1266 = vmul.f32 %v1117, %v1117
      %v1267 = vmul.f32 %v1118, %v1118
      %v1268 = vmul.f32 %v1119, %v1119
      %v1269 = vmul.f32 %v1120, %v1120
      %v1270 = vmul.f32 %v1121, %v1121
      %v1271 = vmul.f32 %v1122, %v1122
      %v1272 = vmul.f32 %v1123, %v1123
      %v1273 = vmul.f32 %v1124, %v1124
      %v1274 = vmul.f32 %v1125, %v1125
      %v1275 = vmul.f32 %v1126, %v1126
      %v1276 = vmul.f32 %v1127, %v1127
      %v1277 = vmul.f32 %v1128, %v1128
      %v1278 = vmul.f32 %v1129, %v1129
      %v1279 = vmul.f32 %v1130, %v1130
      %v1280 = vmul.f32 %v1131, %v1131
      %v1281 = vmul.f32 %v1132, %v1132
      %v1282 = vmul.f32 %v1133, %v1133
      %v1283 = vmul.f32 %v1134, %v1134
      %v1284 = vmul.f32 %v1135, %v1135
      %v1285 = vmul.f32 %v1136, %v1136
      %v1286 = vmul.f32 %v1137, %v1137
      %v1287 = vmul.f32 %v1138, %v1138
      %v1288 = vmul.f32 %v1139, %v1139
      %v1289 = vmul.f32 %v1140, %v1140
      %v1290 = vmul.f32 %v1141, %v1141
      %v1291 = vmul.f32 %v1142, %v1142
      %v1292 = vmul.f32 %v1143, %v1143
      %v1293 = vmul.f32 %v1144, %v1144
      %v1294 = vmul.f32 %v1145, %v1145
      %v1295 = vmul.f32 %v1146, %v1146
      %v1296 = vmul.f32 %v1147, %v1147
      %v1297 = vmul.f32 %v1148, %v1148
      %v1298 = vmul.f32 %v1149, %v1149
      %v1299 = vmul.f32 %v1150, %v1150
      %v1300 = vmul.f32 %v1151, %v1151
      %v1301 = vmul.f32 %v1152, %v1152
      %v1302 = vmul.f32 %v1153, %v1153
      %v1303 = vmul.f32 %v1154, %v1154
      %v1304 = vadd.f32 %v1232, %v1233
      %v1305 = vadd.f32 %v1304, %v1234
      %v1306 = vadd.f32 %v1305, %v1235
      %v1307 = vadd.f32 %v1306, %v1236
      %v1308 = vadd.f32 %v1307, %v1237
      %v1309 = vadd.f32 %v1308, %v1238
      %v1310 = vadd.f32 %v1309, %v1239
      %v1311 = vadd.f32 %v1310, %v1240
      %v1312 = vadd.f32 %v1311, %v1241
      %v1313 = vadd.f32 %v1312, %v1242
      %v1314 = vadd.f32 %v1313, %v1243
      %v1315 = vadd.f32 %v1314, %v1244
      %v1316 = vadd.f32 %v1315, %v1245
      %v1317 = vadd.f32 %v1316, %v1246
      %v1318 = vadd.f32 %v1317, %v1247
      %v1319 = vadd.f32 %v1318, %v1248
      %v1320 = vadd.f32 %v1319, %v1249
      %v1321 = vadd.f32 %v1320, %v1250
      %v1322 = vadd.f32 %v1321, %v1251
      %v1323 = vadd.f32 %v1322, %v1252
      %v1324 = vadd.f32 %v1323, %v1253
      %v1325 = vadd.f32 %v1324, %v1254
      %v1326 = vadd.f32 %v1325, %v1255
      %v1327 = vadd.f32 %v1326, %v1256
      %v1328 = vadd.f32 %v1327, %v1257
      %v1329 = vadd.f32 %v1328, %v1258
      %v1330 = vadd.f32 %v1329, %v1259
      %v1331 = vadd.f32 %v1330, %v1260
      %v1332 = vadd.f32 %v1331, %v1261
      %v1333 = vadd.f32 %v1332, %v1262
      %v1334 = vadd.f32 %v1333, %v1263
      %v1335 = vadd.f32 %v1334, %v1264
      %v1336 = vadd.f32 %v1335, %v1265
      %v1337 = vadd.f32 %v1336, %v1266
      %v1338 = vadd.f32 %v1337, %v1267
      %v1339 = vadd.f32 %v1338, %v1268
      %v1340 = vadd.f32 %v1339, %v1269
      %v1341 = vadd.f32 %v1340, %v1270
      %v1342 = vadd.f32 %v1341, %v1271
      %v1343 = vadd.f32 %v1342, %v1272
      %v1344 = vadd.f32 %v1343, %v1273
      %v1345 = vadd.f32 %v1344, %v1274
      %v1346 = vadd.f32 %v1345, %v1275
      %v1347 = vadd.f32 %v1346, %v1276
      %v1348 = vadd.f32 %v1347, %v1277
      %v1349 = vadd.f32 %v1348, %v1278
      %v1350 = vadd.f32 %v1349, %v1279
      %v1351 = vadd.f32 %v1350, %v1280
      %v1352 = vadd.f32 %v1351, %v1281
      %v1353 = vadd.f32 %v1352, %v1282
      %v1354 = vadd.f32 %v1353, %v1283
      %v1355 = vadd.f32 %v1354, %v1284
      %v1356 = vadd.f32 %v1355, %v1285
      %v1357 = vadd.f32 %v1356, %v1286
      %v1358 = vadd.f32 %v1357, %v1287
      %v1359 = vadd.f32 %v1358, %v1288
      %v1360 = vadd.f32 %v1359, %v1289
      %v1361 = vadd.f32 %v1360, %v1290
      %v1362 = vadd.f32 %v1361, %v1291
      %v1363 = vadd.f32 %v1362, %v1292
      %v1364 = vadd.f32 %v1363, %v1293
      %v1365 = vadd.f32 %v1364, %v1294
      %v1366 = vadd.f32 %v1365, %v1295
      %v1367 = vadd.f32 %v1366, %v1296
      %v1368 = vadd.f32 %v1367, %v1297
      %v1369 = vadd.f32 %v1368, %v1298
      %v1370 = vadd.f32 %v1369, %v1299
      %v1371 = vadd.f32 %v1370, %v1300
      %v1372 = vadd.f32 %v1371, %v1301
      %v1373 = vadd.f32 %v1372, %v1302
      %v1374 = vadd.f32 %v1373, %v1303
      %v1375 = vrot.slane %v1374, 4
      %v1376 = vadd.f32 %v1374, %v1375
      %v1377 = vrot.slane %v1376, 2
      %v1378 = vadd.f32 %v1376, %v1377
      %v1379 = vrot.slane %v1378, 1
      %v1380 = vadd.f32 %v1378, %v1379
      %1382 = vrot.lane.b32.xlu0 %v1231, 96
      %v1383 = vpop.permute.xlu0 %1382
      %v1385 = vadd.f32 %v1231, %v1383
      %1387 = vrot.lane.b32.xlu0 %v1380, 96
      %v1388 = vpop.permute.xlu0 %1387
      %v1390 = vadd.f32 %v1380, %v1388
      %1391 = vrot.lane.b32.xlu0 %v1231, 64
      %v1392 = vpop.permute.xlu0 %1391
      %v1394 = vadd.f32 %v1385, %v1392
      %1395 = vrot.lane.b32.xlu0 %v1380, 64
      %v1396 = vpop.permute.xlu0 %1395
      %v1398 = vadd.f32 %v1390, %v1396
      %1399 = vrot.lane.b32.xlu0 %v1231, 32
      %v1400 = vpop.permute.xlu0 %1399
      %v1402 = vadd.f32 %v1394, %v1400
      %1403 = vrot.lane.b32.xlu0 %v1380, 32
      %v1404 = vpop.permute.xlu0 %1403
      %v1406 = vadd.f32 %v1398, %v1404
      %v1407 = vmul.f32 %v1402, 0.00043402778
      %v1408 = vmul.f32 %v1406, 0.00043402778
      %v1409 = vmul.f32 %v1407, %v1407
      %v1410 = vsub.f32 %v1408, %v1409
      %v1411 = vmax.f32 %v1410, 0.0
      %v1412 = vadd.f32 %v1411, 1e-05
      %v1413 = vrsqrt.pop %v1412
      %1415 = vrot.lane.b32.xlu0 %v1407, 32
      %v1416 = vpop.permute.xlu0 %1415
      %1418 = vrot.lane.b32.xlu0 %v1407, 64
      %v1419 = vpop.permute.xlu0 %1418
      %1421 = vrot.lane.b32.xlu0 %v1407, 96
      %v1422 = vpop.permute.xlu0 %1421
      %vm1424 = vcmask 261120
      %v1425 = vsel %vm1424, %v1407, %v1416
      %vm1426 = vcmask 523264
      %v1427 = vsel %vm1426, %v1425, %v1419
      %vm1428 = vcmask 785408
      %v1429 = vsel %vm1428, %v1427, %v1422
      %1431 = vrot.lane.b32.xlu0 %v1413, 32
      %v1432 = vpop.permute.xlu0 %1431
      %1434 = vrot.lane.b32.xlu0 %v1413, 64
      %v1435 = vpop.permute.xlu0 %1434
      %1437 = vrot.lane.b32.xlu0 %v1413, 96
      %v1438 = vpop.permute.xlu0 %1437
      %v1440 = vsel %vm1424, %v1413, %v1432
      %v1441 = vsel %vm1426, %v1440, %v1435
      %v1442 = vsel %vm1428, %v1441, %v1438
      %v1443 = vlaneseq
      %v1444 = vshrl.u32 %v1443, 7
      %v1445 = vsub.s32 0, %v1444
      %v1446 = vrot.slane %v1429, %v1445
      %v1447 = vsub.f32 %v1083, %v1446
      %v1448 = vsub.f32 %v1084, %v1446
      %v1449 = vsub.f32 %v1085, %v1446
      %v1450 = vsub.f32 %v1086, %v1446
      %v1451 = vsub.f32 %v1087, %v1446
      %v1452 = vsub.f32 %v1088, %v1446
      %v1453 = vsub.f32 %v1089, %v1446
      %v1454 = vsub.f32 %v1090, %v1446
      %v1455 = vsub.f32 %v1091, %v1446
      %v1456 = vsub.f32 %v1092, %v1446
      %v1457 = vsub.f32 %v1093, %v1446
      %v1458 = vsub.f32 %v1094, %v1446
      %v1459 = vsub.f32 %v1095, %v1446
      %v1460 = vsub.f32 %v1096, %v1446
      %v1461 = vsub.f32 %v1097, %v1446
      %v1462 = vsub.f32 %v1098, %v1446
      %v1463 = vsub.f32 %v1099, %v1446
      %v1464 = vsub.f32 %v1100, %v1446
      %v1465 = vsub.f32 %v1101, %v1446
      %v1466 = vsub.f32 %v1102, %v1446
      %v1467 = vsub.f32 %v1103, %v1446
      %v1468 = vsub.f32 %v1104, %v1446
      %v1469 = vsub.f32 %v1105, %v1446
      %v1470 = vsub.f32 %v1106, %v1446
      %v1471 = vsub.f32 %v1107, %v1446
      %v1472 = vsub.f32 %v1108, %v1446
      %v1473 = vsub.f32 %v1109, %v1446
      %v1474 = vsub.f32 %v1110, %v1446
      %v1475 = vsub.f32 %v1111, %v1446
      %v1476 = vsub.f32 %v1112, %v1446
      %v1477 = vsub.f32 %v1113, %v1446
      %v1478 = vsub.f32 %v1114, %v1446
      %v1479 = vsub.f32 %v1115, %v1446
      %v1480 = vsub.f32 %v1116, %v1446
      %v1481 = vsub.f32 %v1117, %v1446
      %v1482 = vsub.f32 %v1118, %v1446
      %v1483 = vsub.f32 %v1119, %v1446
      %v1484 = vsub.f32 %v1120, %v1446
      %v1485 = vsub.f32 %v1121, %v1446
      %v1486 = vsub.f32 %v1122, %v1446
      %v1487 = vsub.f32 %v1123, %v1446
      %v1488 = vsub.f32 %v1124, %v1446
      %v1489 = vsub.f32 %v1125, %v1446
      %v1490 = vsub.f32 %v1126, %v1446
      %v1491 = vsub.f32 %v1127, %v1446
      %v1492 = vsub.f32 %v1128, %v1446
      %v1493 = vsub.f32 %v1129, %v1446
      %v1494 = vsub.f32 %v1130, %v1446
      %v1495 = vsub.f32 %v1131, %v1446
      %v1496 = vsub.f32 %v1132, %v1446
      %v1497 = vsub.f32 %v1133, %v1446
      %v1498 = vsub.f32 %v1134, %v1446
      %v1499 = vsub.f32 %v1135, %v1446
      %v1500 = vsub.f32 %v1136, %v1446
      %v1501 = vsub.f32 %v1137, %v1446
      %v1502 = vsub.f32 %v1138, %v1446
      %v1503 = vsub.f32 %v1139, %v1446
      %v1504 = vsub.f32 %v1140, %v1446
      %v1505 = vsub.f32 %v1141, %v1446
      %v1506 = vsub.f32 %v1142, %v1446
      %v1507 = vsub.f32 %v1143, %v1446
      %v1508 = vsub.f32 %v1144, %v1446
      %v1509 = vsub.f32 %v1145, %v1446
      %v1510 = vsub.f32 %v1146, %v1446
      %v1511 = vsub.f32 %v1147, %v1446
      %v1512 = vsub.f32 %v1148, %v1446
      %v1513 = vsub.f32 %v1149, %v1446
      %v1514 = vsub.f32 %v1150, %v1446
      %v1515 = vsub.f32 %v1151, %v1446
      %v1516 = vsub.f32 %v1152, %v1446
      %v1517 = vsub.f32 %v1153, %v1446
      %v1518 = vsub.f32 %v1154, %v1446
      %v1519 = vlaneseq
      %v1520 = vshrl.u32 %v1519, 7
      %v1521 = vsub.s32 0, %v1520
      %v1522 = vrot.slane %v1442, %v1521
      %v1523 = vmul.f32 %v1447, %v1522
      %v1524 = vmul.f32 %v1448, %v1522
      %v1525 = vmul.f32 %v1449, %v1522
      %v1526 = vmul.f32 %v1450, %v1522
      %v1527 = vmul.f32 %v1451, %v1522
      %v1528 = vmul.f32 %v1452, %v1522
      %v1529 = vmul.f32 %v1453, %v1522
      %v1530 = vmul.f32 %v1454, %v1522
      %v1531 = vmul.f32 %v1455, %v1522
      %v1532 = vmul.f32 %v1456, %v1522
      %v1533 = vmul.f32 %v1457, %v1522
      %v1534 = vmul.f32 %v1458, %v1522
      %v1535 = vmul.f32 %v1459, %v1522
      %v1536 = vmul.f32 %v1460, %v1522
      %v1537 = vmul.f32 %v1461, %v1522
      %v1538 = vmul.f32 %v1462, %v1522
      %v1539 = vmul.f32 %v1463, %v1522
      %v1540 = vmul.f32 %v1464, %v1522
      %v1541 = vmul.f32 %v1465, %v1522
      %v1542 = vmul.f32 %v1466, %v1522
      %v1543 = vmul.f32 %v1467, %v1522
      %v1544 = vmul.f32 %v1468, %v1522
      %v1545 = vmul.f32 %v1469, %v1522
      %v1546 = vmul.f32 %v1470, %v1522
      %v1547 = vmul.f32 %v1471, %v1522
      %v1548 = vmul.f32 %v1472, %v1522
      %v1549 = vmul.f32 %v1473, %v1522
      %v1550 = vmul.f32 %v1474, %v1522
      %v1551 = vmul.f32 %v1475, %v1522
      %v1552 = vmul.f32 %v1476, %v1522
      %v1553 = vmul.f32 %v1477, %v1522
      %v1554 = vmul.f32 %v1478, %v1522
      %v1555 = vmul.f32 %v1479, %v1522
      %v1556 = vmul.f32 %v1480, %v1522
      %v1557 = vmul.f32 %v1481, %v1522
      %v1558 = vmul.f32 %v1482, %v1522
      %v1559 = vmul.f32 %v1483, %v1522
      %v1560 = vmul.f32 %v1484, %v1522
      %v1561 = vmul.f32 %v1485, %v1522
      %v1562 = vmul.f32 %v1486, %v1522
      %v1563 = vmul.f32 %v1487, %v1522
      %v1564 = vmul.f32 %v1488, %v1522
      %v1565 = vmul.f32 %v1489, %v1522
      %v1566 = vmul.f32 %v1490, %v1522
      %v1567 = vmul.f32 %v1491, %v1522
      %v1568 = vmul.f32 %v1492, %v1522
      %v1569 = vmul.f32 %v1493, %v1522
      %v1570 = vmul.f32 %v1494, %v1522
      %v1571 = vmul.f32 %v1495, %v1522
      %v1572 = vmul.f32 %v1496, %v1522
      %v1573 = vmul.f32 %v1497, %v1522
      %v1574 = vmul.f32 %v1498, %v1522
      %v1575 = vmul.f32 %v1499, %v1522
      %v1576 = vmul.f32 %v1500, %v1522
      %v1577 = vmul.f32 %v1501, %v1522
      %v1578 = vmul.f32 %v1502, %v1522
      %v1579 = vmul.f32 %v1503, %v1522
      %v1580 = vmul.f32 %v1504, %v1522
      %v1581 = vmul.f32 %v1505, %v1522
      %v1582 = vmul.f32 %v1506, %v1522
      %v1583 = vmul.f32 %v1507, %v1522
      %v1584 = vmul.f32 %v1508, %v1522
      %v1585 = vmul.f32 %v1509, %v1522
      %v1586 = vmul.f32 %v1510, %v1522
      %v1587 = vmul.f32 %v1511, %v1522
      %v1588 = vmul.f32 %v1512, %v1522
      %v1589 = vmul.f32 %v1513, %v1522
      %v1590 = vmul.f32 %v1514, %v1522
      %v1591 = vmul.f32 %v1515, %v1522
      %v1592 = vmul.f32 %v1516, %v1522
      %v1593 = vmul.f32 %v1517, %v1522
      %v1594 = vmul.f32 %v1518, %v1522
      %v1595 = vpack.c.bf16 %v1524, %v1523
      %v1596 = vpack.c.bf16 %v1526, %v1525
      %v1597 = vpack.c.bf16 %v1528, %v1527
      %v1598 = vpack.c.bf16 %v1530, %v1529
      %v1599 = vpack.c.bf16 %v1532, %v1531
      %v1600 = vpack.c.bf16 %v1534, %v1533
      %v1601 = vpack.c.bf16 %v1536, %v1535
      %v1602 = vpack.c.bf16 %v1538, %v1537
      %v1603 = vpack.c.bf16 %v1540, %v1539
      %v1604 = vpack.c.bf16 %v1542, %v1541
      %v1605 = vpack.c.bf16 %v1544, %v1543
      %v1606 = vpack.c.bf16 %v1546, %v1545
      %v1607 = vpack.c.bf16 %v1548, %v1547
      %v1608 = vpack.c.bf16 %v1550, %v1549
      %v1609 = vpack.c.bf16 %v1552, %v1551
      %v1610 = vpack.c.bf16 %v1554, %v1553
      %v1611 = vpack.c.bf16 %v1556, %v1555
      %v1612 = vpack.c.bf16 %v1558, %v1557
      %v1613 = vpack.c.bf16 %v1560, %v1559
      %v1614 = vpack.c.bf16 %v1562, %v1561
      %v1615 = vpack.c.bf16 %v1564, %v1563
      %v1616 = vpack.c.bf16 %v1566, %v1565
      %v1617 = vpack.c.bf16 %v1568, %v1567
      %v1618 = vpack.c.bf16 %v1570, %v1569
      %v1619 = vpack.c.bf16 %v1572, %v1571
      %v1620 = vpack.c.bf16 %v1574, %v1573
      %v1621 = vpack.c.bf16 %v1576, %v1575
      %v1622 = vpack.c.bf16 %v1578, %v1577
      %v1623 = vpack.c.bf16 %v1580, %v1579
      %v1624 = vpack.c.bf16 %v1582, %v1581
      %v1625 = vpack.c.bf16 %v1584, %v1583
      %v1626 = vpack.c.bf16 %v1586, %v1585
      %v1627 = vpack.c.bf16 %v1588, %v1587
      %v1628 = vpack.c.bf16 %v1590, %v1589
      %v1629 = vpack.c.bf16 %v1592, %v1591
      %v1630 = vpack.c.bf16 %v1594, %v1593
      %v1631 = vld [vmem:[%s3] sm:$0xf]
      %v1632 = vld [vmem:[%s3 + $0x4] sm:$0xf]
      %v1633 = vld [vmem:[%s3 + $0x8] sm:$0xf]
      %v1634 = vld [vmem:[%s3 + $0xc] sm:$0xf]
      %v1635 = vld [vmem:[%s3 + $0x10] sm:$0xf]
      %v1636 = vld [vmem:[%s3 + $0x14] sm:$0xf]
      %v1637 = vld [vmem:[%s3 + $0x18] sm:$0xf]
      %v1638 = vld [vmem:[%s3 + $0x1c] sm:$0xf]
      %v1639 = vld [vmem:[%s3 + $0x20] sm:$0xf]
      %v1640 = vld [vmem:[%s3 + $0x24] sm:$0xf]
      %v1641 = vld [vmem:[%s3 + $0x28] sm:$0xf]
      %v1642 = vld [vmem:[%s3 + $0x2c] sm:$0xf]
      %v1643 = vld [vmem:[%s3 + $0x30] sm:$0xf]
      %v1644 = vld [vmem:[%s3 + $0x34] sm:$0xf]
      %v1645 = vld [vmem:[%s3 + $0x38] sm:$0xf]
      %v1646 = vld [vmem:[%s3 + $0x3c] sm:$0xf]
      %v1647 = vld [vmem:[%s4] sm:$0x1]
      %v1649 = vlaneseq
      %v1650 = vshrl.u32 %v1649, 7
      %v1651 = vsub.s32 0, %v1650
      %v1652 = vrot.slane %v1647, %v1651
      %v1670 = vunpack.c.l.b16 %v1631
      %v1671 = vunpack.c.l.b16 %v1632
      %v1672 = vunpack.c.l.b16 %v1633
      %v1673 = vunpack.c.l.b16 %v1634
      %v1674 = vunpack.c.l.b16 %v1635
      %v1675 = vunpack.c.l.b16 %v1636
      %v1676 = vunpack.c.l.b16 %v1637
      %v1677 = vunpack.c.l.b16 %v1638
      %v1678 = vunpack.c.l.b16 %v1639
      %v1679 = vunpack.c.l.b16 %v1640
      %v1680 = vunpack.c.l.b16 %v1641
      %v1681 = vunpack.c.l.b16 %v1642
      %v1682 = vunpack.c.l.b16 %v1643
      %v1683 = vunpack.c.l.b16 %v1644
      %v1684 = vunpack.c.l.b16 %v1645
      %v1685 = vunpack.c.l.b16 %v1646
      %v1686 = vpack.c.b16 %v1671, %v1670
      %v1687 = vpack.c.b16 %v1673, %v1672
      %v1688 = vpack.c.b16 %v1675, %v1674
      %v1689 = vpack.c.b16 %v1677, %v1676
      %v1690 = vpack.c.b16 %v1679, %v1678
      %v1691 = vpack.c.b16 %v1681, %v1680
      %v1692 = vpack.c.b16 %v1683, %v1682
      %v1693 = vpack.c.b16 %v1685, %v1684
      %1702 = vmatprep.subr.bf16.mxu0 0
      %1703 = vmatpush1.bf16.msra.mxu0 %v1686
      %1704 = vmatprep.subr.bf16.mxu0 0
      %1705 = vmatpush1.bf16.msra.mxu0 %v1687
      %1706 = vmatprep.subr.bf16.mxu0 0
      %1707 = vmatpush1.bf16.msra.mxu0 %v1688
      %1708 = vmatprep.subr.bf16.mxu0 0
      %1709 = vmatpush1.bf16.msra.mxu0 %v1689
      %1710 = vmatprep.subr.bf16.mxu0 0
      %1711 = vmatpush1.bf16.msra.mxu0 %v1690
      %1712 = vmatprep.subr.bf16.mxu0 0
      %1713 = vmatpush1.bf16.msra.mxu0 %v1691
      %1714 = vmatprep.subr.bf16.mxu0 0
      %1715 = vmatpush1.bf16.msra.mxu0 %v1692
      %1716 = vmatprep.subr.bf16.mxu0 0
      %1717 = vmatpush1.bf16.msra.mxu0 %v1693
      %1718 = vmatprep.subr.bf16.mxu0 0
      %1719 = vmatpush1.bf16.msra.mxu0 0
      %1720 = vmatprep.subr.bf16.mxu0 0
      %1721 = vmatpush1.bf16.msra.mxu0 0
      %1722 = vmatprep.subr.bf16.mxu0 0
      %1723 = vmatpush1.bf16.msra.mxu0 0
      %1724 = vmatprep.subr.bf16.mxu0 0
      %1725 = vmatpush1.bf16.msra.mxu0 0
      %1726 = vmatprep.subr.bf16.mxu0 0
      %1727 = vmatpush1.bf16.msra.mxu0 0
      %1728 = vmatprep.subr.bf16.mxu0 0
      %1729 = vmatpush1.bf16.msra.mxu0 0
      %1730 = vmatprep.subr.bf16.mxu0 0
      %1731 = vmatpush1.bf16.msra.mxu0 0
      %1732 = vmatprep.subr.bf16.mxu0 0
      %1733 = vmatpush1.bf16.msra.mxu0 0
      %1734 = vmatprep.mubr.bf16.mxu0 0
      %1735 = vmatmul.mubr.bf16.gmra.mrb[0].mxu0 %v1595
      %v1736 = vpop.f32.mrb[0].mxu0
      %v1737 = vadd.f32 %v1652, %v1736
      %v1738 = vpop.f32.mrb[0].mxu0
      %v1739 = vpop.f32.mrb[0].mxu0
      %v1740 = vadd.f32 %v1652, %v1739
      %v1741 = vpop.f32.mrb[0].mxu0
      %1742 = vmatprep.mubr.bf16.mxu0 0
      %1743 = vmatmul.mubr.bf16.gmra.mrb[0].mxu0 %v1596
      %v1744 = vpop.f32.mrb[0].mxu0
      %v1745 = vadd.f32 %v1652, %v1744
      %v1746 = vpop.f32.mrb[0].mxu0
      %v1747 = vpop.f32.mrb[0].mxu0
      %v1748 = vadd.f32 %v1652, %v1747
      %v1749 = vpop.f32.mrb[0].mxu0
      %1750 = vmatprep.mubr.bf16.mxu0 0
      %1751 = vmatmul.mubr.bf16.gmra.mrb[0].mxu0 %v1597
      %v1752 = vpop.f32.mrb[0].mxu0
      %v1753 = vadd.f32 %v1652, %v1752
      %v1754 = vpop.f32.mrb[0].mxu0
      %v1755 = vpop.f32.mrb[0].mxu0
      %v1756 = vadd.f32 %v1652, %v1755
      %v1757 = vpop.f32.mrb[0].mxu0
      %1758 = vmatprep.mubr.bf16.mxu0 0
      %1759 = vmatmul.mubr.bf16.gmra.mrb[0].mxu0 %v1598
      %v1760 = vpop.f32.mrb[0].mxu0
      %v1761 = vadd.f32 %v1652, %v1760
      %v1762 = vpop.f32.mrb[0].mxu0
      %v1763 = vpop.f32.mrb[0].mxu0
      %v1764 = vadd.f32 %v1652, %v1763
      %v1765 = vpop.f32.mrb[0].mxu0
      %1766 = vmatprep.mubr.bf16.mxu0 0
      %1767 = vmatmul.mubr.bf16.gmra.mrb[0].mxu0 %v1599
      %v1768 = vpop.f32.mrb[0].mxu0
      %v1769 = vadd.f32 %v1652, %v1768
      %v1770 = vpop.f32.mrb[0].mxu0
      %v1771 = vpop.f32.mrb[0].mxu0
      %v1772 = vadd.f32 %v1652, %v1771
      %v1773 = vpop.f32.mrb[0].mxu0
      %1774 = vmatprep.mubr.bf16.mxu0 0
      %1775 = vmatmul.mubr.bf16.gmra.mrb[0].mxu0 %v1600
      %v1776 = vpop.f32.mrb[0].mxu0
      %v1777 = vadd.f32 %v1652, %v1776
      %v1778 = vpop.f32.mrb[0].mxu0
      %v1779 = vpop.f32.mrb[0].mxu0
      %v1780 = vadd.f32 %v1652, %v1779
      %v1781 = vpop.f32.mrb[0].mxu0
      %1782 = vmatprep.mubr.bf16.mxu0 0
      %1783 = vmatmul.mubr.bf16.gmra.mrb[0].mxu0 %v1601
      %v1784 = vpop.f32.mrb[0].mxu0
      %v1785 = vadd.f32 %v1652, %v1784
      %v1786 = vpop.f32.mrb[0].mxu0
      %v1787 = vpop.f32.mrb[0].mxu0
      %v1788 = vadd.f32 %v1652, %v1787
      %v1789 = vpop.f32.mrb[0].mxu0
      %1790 = vmatprep.mubr.bf16.mxu0 0
      %1791 = vmatmul.mubr.bf16.gmra.mrb[0].mxu0 %v1602
      %v1792 = vpop.f32.mrb[0].mxu0
      %v1793 = vadd.f32 %v1652, %v1792
      %v1794 = vpop.f32.mrb[0].mxu0
      %v1795 = vpop.f32.mrb[0].mxu0
      %v1796 = vadd.f32 %v1652, %v1795
      %v1797 = vpop.f32.mrb[0].mxu0
      %1798 = vmatprep.mubr.bf16.mxu0 0
      %1799 = vmatmul.mubr.bf16.gmra.mrb[0].mxu0 %v1603
      %v1800 = vpop.f32.mrb[0].mxu0
      %v1801 = vadd.f32 %v1652, %v1800
      %v1802 = vpop.f32.mrb[0].mxu0
      %v1803 = vpop.f32.mrb[0].mxu0
      %v1804 = vadd.f32 %v1652, %v1803
      %v1805 = vpop.f32.mrb[0].mxu0
      %1806 = vmatprep.mubr.bf16.mxu0 0
      %1807 = vmatmul.mubr.bf16.gmra.mrb[0].mxu0 %v1604
      %v1808 = vpop.f32.mrb[0].mxu0
      %v1809 = vadd.f32 %v1652, %v1808
      %v1810 = vpop.f32.mrb[0].mxu0
      %v1811 = vpop.f32.mrb[0].mxu0
      %v1812 = vadd.f32 %v1652, %v1811
      %v1813 = vpop.f32.mrb[0].mxu0
      %1814 = vmatprep.mubr.bf16.mxu0 0
      %1815 = vmatmul.mubr.bf16.gmra.mrb[0].mxu0 %v1605
      %v1816 = vpop.f32.mrb[0].mxu0
      %v1817 = vadd.f32 %v1652, %v1816
      %v1818 = vpop.f32.mrb[0].mxu0
      %v1819 = vpop.f32.mrb[0].mxu0
      %v1820 = vadd.f32 %v1652, %v1819
      %v1821 = vpop.f32.mrb[0].mxu0
      %1822 = vmatprep.mubr.bf16.mxu0 0
      %1823 = vmatmul.mubr.bf16.gmra.mrb[0].mxu0 %v1606
      %v1824 = vpop.f32.mrb[0].mxu0
      %v1825 = vadd.f32 %v1652, %v1824
      %v1826 = vpop.f32.mrb[0].mxu0
      %v1827 = vpop.f32.mrb[0].mxu0
      %v1828 = vadd.f32 %v1652, %v1827
      %v1829 = vpop.f32.mrb[0].mxu0
      %1830 = vmatprep.mubr.bf16.mxu0 0
      %1831 = vmatmul.mubr.bf16.gmra.mrb[0].mxu0 %v1607
      %v1832 = vpop.f32.mrb[0].mxu0
      %v1833 = vadd.f32 %v1652, %v1832
      %v1834 = vpop.f32.mrb[0].mxu0
      %v1835 = vpop.f32.mrb[0].mxu0
      %v1836 = vadd.f32 %v1652, %v1835
      %v1837 = vpop.f32.mrb[0].mxu0
      %1838 = vmatprep.mubr.bf16.mxu0 0
      %1839 = vmatmul.mubr.bf16.gmra.mrb[0].mxu0 %v1608
      %v1840 = vpop.f32.mrb[0].mxu0
      %v1841 = vadd.f32 %v1652, %v1840
      %v1842 = vpop.f32.mrb[0].mxu0
      %v1843 = vpop.f32.mrb[0].mxu0
      %v1844 = vadd.f32 %v1652, %v1843
      %v1845 = vpop.f32.mrb[0].mxu0
      %1846 = vmatprep.mubr.bf16.mxu0 0
      %1847 = vmatmul.mubr.bf16.gmra.mrb[0].mxu0 %v1609
      %v1848 = vpop.f32.mrb[0].mxu0
      %v1849 = vadd.f32 %v1652, %v1848
      %v1850 = vpop.f32.mrb[0].mxu0
      %v1851 = vpop.f32.mrb[0].mxu0
      %v1852 = vadd.f32 %v1652, %v1851
      %v1853 = vpop.f32.mrb[0].mxu0
      %1854 = vmatprep.mubr.bf16.mxu0 0
      %1855 = vmatmul.mubr.bf16.gmra.mrb[0].mxu0 %v1610
      %v1856 = vpop.f32.mrb[0].mxu0
      %v1857 = vadd.f32 %v1652, %v1856
      %v1858 = vpop.f32.mrb[0].mxu0
      %v1859 = vpop.f32.mrb[0].mxu0
      %v1860 = vadd.f32 %v1652, %v1859
      %v1861 = vpop.f32.mrb[0].mxu0
      %1862 = vmatprep.mubr.bf16.mxu0 0
      %1863 = vmatmul.mubr.bf16.gmra.mrb[0].mxu0 %v1611
      %v1864 = vpop.f32.mrb[0].mxu0
      %v1865 = vadd.f32 %v1652, %v1864
      %v1866 = vpop.f32.mrb[0].mxu0
      %v1867 = vpop.f32.mrb[0].mxu0
      %v1868 = vadd.f32 %v1652, %v1867
      %v1869 = vpop.f32.mrb[0].mxu0
      %1870 = vmatprep.mubr.bf16.mxu0 0
      %1871 = vmatmul.mubr.bf16.gmra.mrb[0].mxu0 %v1612
      %v1872 = vpop.f32.mrb[0].mxu0
      %v1873 = vadd.f32 %v1652, %v1872
      %v1874 = vpop.f32.mrb[0].mxu0
      %v1875 = vpop.f32.mrb[0].mxu0
      %v1876 = vadd.f32 %v1652, %v1875
      %v1877 = vpop.f32.mrb[0].mxu0
      %1878 = vmatprep.mubr.bf16.mxu0 0
      %1879 = vmatmul.mubr.bf16.gmra.mrb[0].mxu0 %v1613
      %v1880 = vpop.f32.mrb[0].mxu0
      %v1881 = vadd.f32 %v1652, %v1880
      %v1882 = vpop.f32.mrb[0].mxu0
      %v1883 = vpop.f32.mrb[0].mxu0
      %v1884 = vadd.f32 %v1652, %v1883
      %v1885 = vpop.f32.mrb[0].mxu0
      %1886 = vmatprep.mubr.bf16.mxu0 0
      %1887 = vmatmul.mubr.bf16.gmra.mrb[0].mxu0 %v1614
      %v1888 = vpop.f32.mrb[0].mxu0
      %v1889 = vadd.f32 %v1652, %v1888
      %v1890 = vpop.f32.mrb[0].mxu0
      %v1891 = vpop.f32.mrb[0].mxu0
      %v1892 = vadd.f32 %v1652, %v1891
      %v1893 = vpop.f32.mrb[0].mxu0
      %1894 = vmatprep.mubr.bf16.mxu0 0
      %1895 = vmatmul.mubr.bf16.gmra.mrb[0].mxu0 %v1615
      %v1896 = vpop.f32.mrb[0].mxu0
      %v1897 = vadd.f32 %v1652, %v1896
      %v1898 = vpop.f32.mrb[0].mxu0
      %v1899 = vpop.f32.mrb[0].mxu0
      %v1900 = vadd.f32 %v1652, %v1899
      %v1901 = vpop.f32.mrb[0].mxu0
      %1902 = vmatprep.mubr.bf16.mxu0 0
      %1903 = vmatmul.mubr.bf16.gmra.mrb[0].mxu0 %v1616
      %v1904 = vpop.f32.mrb[0].mxu0
      %v1905 = vadd.f32 %v1652, %v1904
      %v1906 = vpop.f32.mrb[0].mxu0
      %v1907 = vpop.f32.mrb[0].mxu0
      %v1908 = vadd.f32 %v1652, %v1907
      %v1909 = vpop.f32.mrb[0].mxu0
      %1910 = vmatprep.mubr.bf16.mxu0 0
      %1911 = vmatmul.mubr.bf16.gmra.mrb[0].mxu0 %v1617
      %v1912 = vpop.f32.mrb[0].mxu0
      %v1913 = vadd.f32 %v1652, %v1912
      %v1914 = vpop.f32.mrb[0].mxu0
      %v1915 = vpop.f32.mrb[0].mxu0
      %v1916 = vadd.f32 %v1652, %v1915
      %v1917 = vpop.f32.mrb[0].mxu0
      %1918 = vmatprep.mubr.bf16.mxu0 0
      %1919 = vmatmul.mubr.bf16.gmra.mrb[0].mxu0 %v1618
      %v1920 = vpop.f32.mrb[0].mxu0
      %v1921 = vadd.f32 %v1652, %v1920
      %v1922 = vpop.f32.mrb[0].mxu0
      %v1923 = vpop.f32.mrb[0].mxu0
      %v1924 = vadd.f32 %v1652, %v1923
      %v1925 = vpop.f32.mrb[0].mxu0
      %1926 = vmatprep.mubr.bf16.mxu0 0
      %1927 = vmatmul.mubr.bf16.gmra.mrb[0].mxu0 %v1619
      %v1928 = vpop.f32.mrb[0].mxu0
      %v1929 = vadd.f32 %v1652, %v1928
      %v1930 = vpop.f32.mrb[0].mxu0
      %v1931 = vpop.f32.mrb[0].mxu0
      %v1932 = vadd.f32 %v1652, %v1931
      %v1933 = vpop.f32.mrb[0].mxu0
      %1934 = vmatprep.mubr.bf16.mxu0 0
      %1935 = vmatmul.mubr.bf16.gmra.mrb[0].mxu0 %v1620
      %v1936 = vpop.f32.mrb[0].mxu0
      %v1937 = vadd.f32 %v1652, %v1936
      %v1938 = vpop.f32.mrb[0].mxu0
      %v1939 = vpop.f32.mrb[0].mxu0
      %v1940 = vadd.f32 %v1652, %v1939
      %v1941 = vpop.f32.mrb[0].mxu0
      %1942 = vmatprep.mubr.bf16.mxu0 0
      %1943 = vmatmul.mubr.bf16.gmra.mrb[0].mxu0 %v1621
      %v1944 = vpop.f32.mrb[0].mxu0
      %v1945 = vadd.f32 %v1652, %v1944
      %v1946 = vpop.f32.mrb[0].mxu0
      %v1947 = vpop.f32.mrb[0].mxu0
      %v1948 = vadd.f32 %v1652, %v1947
      %v1949 = vpop.f32.mrb[0].mxu0
      %1950 = vmatprep.mubr.bf16.mxu0 0
      %1951 = vmatmul.mubr.bf16.gmra.mrb[0].mxu0 %v1622
      %v1952 = vpop.f32.mrb[0].mxu0
      %v1953 = vadd.f32 %v1652, %v1952
      %v1954 = vpop.f32.mrb[0].mxu0
      %v1955 = vpop.f32.mrb[0].mxu0
      %v1956 = vadd.f32 %v1652, %v1955
      %v1957 = vpop.f32.mrb[0].mxu0
      %1958 = vmatprep.mubr.bf16.mxu0 0
      %1959 = vmatmul.mubr.bf16.gmra.mrb[0].mxu0 %v1623
      %v1960 = vpop.f32.mrb[0].mxu0
      %v1961 = vadd.f32 %v1652, %v1960
      %v1962 = vpop.f32.mrb[0].mxu0
      %v1963 = vpop.f32.mrb[0].mxu0
      %v1964 = vadd.f32 %v1652, %v1963
      %v1965 = vpop.f32.mrb[0].mxu0
      %1966 = vmatprep.mubr.bf16.mxu0 0
      %1967 = vmatmul.mubr.bf16.gmra.mrb[0].mxu0 %v1624
      %v1968 = vpop.f32.mrb[0].mxu0
      %v1969 = vadd.f32 %v1652, %v1968
      %v1970 = vpop.f32.mrb[0].mxu0
      %v1971 = vpop.f32.mrb[0].mxu0
      %v1972 = vadd.f32 %v1652, %v1971
      %v1973 = vpop.f32.mrb[0].mxu0
      %1974 = vmatprep.mubr.bf16.mxu0 0
      %1975 = vmatmul.mubr.bf16.gmra.mrb[0].mxu0 %v1625
      %v1976 = vpop.f32.mrb[0].mxu0
      %v1977 = vadd.f32 %v1652, %v1976
      %v1978 = vpop.f32.mrb[0].mxu0
      %v1979 = vpop.f32.mrb[0].mxu0
      %v1980 = vadd.f32 %v1652, %v1979
      %v1981 = vpop.f32.mrb[0].mxu0
      %1982 = vmatprep.mubr.bf16.mxu0 0
      %1983 = vmatmul.mubr.bf16.gmra.mrb[0].mxu0 %v1626
      %v1984 = vpop.f32.mrb[0].mxu0
      %v1985 = vadd.f32 %v1652, %v1984
      %v1986 = vpop.f32.mrb[0].mxu0
      %v1987 = vpop.f32.mrb[0].mxu0
      %v1988 = vadd.f32 %v1652, %v1987
      %v1989 = vpop.f32.mrb[0].mxu0
      %1990 = vmatprep.mubr.bf16.mxu0 0
      %1991 = vmatmul.mubr.bf16.gmra.mrb[0].mxu0 %v1627
      %v1992 = vpop.f32.mrb[0].mxu0
      %v1993 = vadd.f32 %v1652, %v1992
      %v1994 = vpop.f32.mrb[0].mxu0
      %v1995 = vpop.f32.mrb[0].mxu0
      %v1996 = vadd.f32 %v1652, %v1995
      %v1997 = vpop.f32.mrb[0].mxu0
      %1998 = vmatprep.mubr.bf16.mxu0 0
      %1999 = vmatmul.mubr.bf16.gmra.mrb[0].mxu0 %v1628
      %v2000 = vpop.f32.mrb[0].mxu0
      %v2001 = vadd.f32 %v1652, %v2000
      %v2002 = vpop.f32.mrb[0].mxu0
      %v2003 = vpop.f32.mrb[0].mxu0
      %v2004 = vadd.f32 %v1652, %v2003
      %v2005 = vpop.f32.mrb[0].mxu0
      %2006 = vmatprep.mubr.bf16.mxu0 0
      %2007 = vmatmul.mubr.bf16.gmra.mrb[0].mxu0 %v1629
      %v2008 = vpop.f32.mrb[0].mxu0
      %v2009 = vadd.f32 %v1652, %v2008
      %v2010 = vpop.f32.mrb[0].mxu0
      %v2011 = vpop.f32.mrb[0].mxu0
      %v2012 = vadd.f32 %v1652, %v2011
      %v2013 = vpop.f32.mrb[0].mxu0
      %2014 = vmatprep.mubr.bf16.mxu0 0
      %2015 = vmatmul.mubr.bf16.gmra.mrb[0].mxu0 %v1630
      %v2016 = vpop.f32.mrb[0].mxu0
      %v2017 = vadd.f32 %v1652, %v2016
      %v2018 = vpop.f32.mrb[0].mxu0
      %v2019 = vpop.f32.mrb[0].mxu0
      %v2020 = vadd.f32 %v1652, %v2019
      %v2021 = vpop.f32.mrb[0].mxu0
      %2022 = vdwg.mxu0
      %vm2023 = vcmp.gt.f32.partialorder %v1737, 0.0
      %vm2024 = vcmp.gt.f32.partialorder %v1740, 0.0
      %vm2025 = vcmp.gt.f32.partialorder %v1745, 0.0
      %vm2026 = vcmp.gt.f32.partialorder %v1748, 0.0
      %vm2027 = vcmp.gt.f32.partialorder %v1753, 0.0
      %vm2028 = vcmp.gt.f32.partialorder %v1756, 0.0
      %vm2029 = vcmp.gt.f32.partialorder %v1761, 0.0
      %vm2030 = vcmp.gt.f32.partialorder %v1764, 0.0
      %vm2031 = vcmp.gt.f32.partialorder %v1769, 0.0
      %vm2032 = vcmp.gt.f32.partialorder %v1772, 0.0
      %vm2033 = vcmp.gt.f32.partialorder %v1777, 0.0
      %vm2034 = vcmp.gt.f32.partialorder %v1780, 0.0
      %vm2035 = vcmp.gt.f32.partialorder %v1785, 0.0
      %vm2036 = vcmp.gt.f32.partialorder %v1788, 0.0
      %vm2037 = vcmp.gt.f32.partialorder %v1793, 0.0
      %vm2038 = vcmp.gt.f32.partialorder %v1796, 0.0
      %vm2039 = vcmp.gt.f32.partialorder %v1801, 0.0
      %vm2040 = vcmp.gt.f32.partialorder %v1804, 0.0
      %vm2041 = vcmp.gt.f32.partialorder %v1809, 0.0
      %vm2042 = vcmp.gt.f32.partialorder %v1812, 0.0
      %vm2043 = vcmp.gt.f32.partialorder %v1817, 0.0
      %vm2044 = vcmp.gt.f32.partialorder %v1820, 0.0
      %vm2045 = vcmp.gt.f32.partialorder %v1825, 0.0
      %vm2046 = vcmp.gt.f32.partialorder %v1828, 0.0
      %vm2047 = vcmp.gt.f32.partialorder %v1833, 0.0
      %vm2048 = vcmp.gt.f32.partialorder %v1836, 0.0
      %vm2049 = vcmp.gt.f32.partialorder %v1841, 0.0
      %vm2050 = vcmp.gt.f32.partialorder %v1844, 0.0
      %vm2051 = vcmp.gt.f32.partialorder %v1849, 0.0
      %vm2052 = vcmp.gt.f32.partialorder %v1852, 0.0
      %vm2053 = vcmp.gt.f32.partialorder %v1857, 0.0
      %vm2054 = vcmp.gt.f32.partialorder %v1860, 0.0
      %vm2055 = vcmp.gt.f32.partialorder %v1865, 0.0
      %vm2056 = vcmp.gt.f32.partialorder %v1868, 0.0
      %vm2057 = vcmp.gt.f32.partialorder %v1873, 0.0
      %vm2058 = vcmp.gt.f32.partialorder %v1876, 0.0
      %vm2059 = vcmp.gt.f32.partialorder %v1881, 0.0
      %vm2060 = vcmp.gt.f32.partialorder %v1884, 0.0
      %vm2061 = vcmp.gt.f32.partialorder %v1889, 0.0
      %vm2062 = vcmp.gt.f32.partialorder %v1892, 0.0
      %vm2063 = vcmp.gt.f32.partialorder %v1897, 0.0
      %vm2064 = vcmp.gt.f32.partialorder %v1900, 0.0
      %vm2065 = vcmp.gt.f32.partialorder %v1905, 0.0
      %vm2066 = vcmp.gt.f32.partialorder %v1908, 0.0
      %vm2067 = vcmp.gt.f32.partialorder %v1913, 0.0
      %vm2068 = vcmp.gt.f32.partialorder %v1916, 0.0
      %vm2069 = vcmp.gt.f32.partialorder %v1921, 0.0
      %vm2070 = vcmp.gt.f32.partialorder %v1924, 0.0
      %vm2071 = vcmp.gt.f32.partialorder %v1929, 0.0
      %vm2072 = vcmp.gt.f32.partialorder %v1932, 0.0
      %vm2073 = vcmp.gt.f32.partialorder %v1937, 0.0
      %vm2074 = vcmp.gt.f32.partialorder %v1940, 0.0
      %vm2075 = vcmp.gt.f32.partialorder %v1945, 0.0
      %vm2076 = vcmp.gt.f32.partialorder %v1948, 0.0
      %vm2077 = vcmp.gt.f32.partialorder %v1953, 0.0
      %vm2078 = vcmp.gt.f32.partialorder %v1956, 0.0
      %vm2079 = vcmp.gt.f32.partialorder %v1961, 0.0
      %vm2080 = vcmp.gt.f32.partialorder %v1964, 0.0
      %vm2081 = vcmp.gt.f32.partialorder %v1969, 0.0
      %vm2082 = vcmp.gt.f32.partialorder %v1972, 0.0
      %vm2083 = vcmp.gt.f32.partialorder %v1977, 0.0
      %vm2084 = vcmp.gt.f32.partialorder %v1980, 0.0
      %vm2085 = vcmp.gt.f32.partialorder %v1985, 0.0
      %vm2086 = vcmp.gt.f32.partialorder %v1988, 0.0
      %vm2087 = vcmp.gt.f32.partialorder %v1993, 0.0
      %vm2088 = vcmp.gt.f32.partialorder %v1996, 0.0
      %vm2089 = vcmp.gt.f32.partialorder %v2001, 0.0
      %vm2090 = vcmp.gt.f32.partialorder %v2004, 0.0
      %vm2091 = vcmp.gt.f32.partialorder %v2009, 0.0
      %vm2092 = vcmp.gt.f32.partialorder %v2012, 0.0
      %vm2093 = vcmp.gt.f32.partialorder %v2017, 0.0
      %vm2094 = vcmp.gt.f32.partialorder %v2020, 0.0
      %v2095 = vmul.f32 %v1737, 0.01
      %v2096 = vmul.f32 %v1740, 0.01
      %v2097 = vmul.f32 %v1745, 0.01
      %v2098 = vmul.f32 %v1748, 0.01
      %v2099 = vmul.f32 %v1753, 0.01
      %v2100 = vmul.f32 %v1756, 0.01
      %v2101 = vmul.f32 %v1761, 0.01
      %v2102 = vmul.f32 %v1764, 0.01
      %v2103 = vmul.f32 %v1769, 0.01
      %v2104 = vmul.f32 %v1772, 0.01
      %v2105 = vmul.f32 %v1777, 0.01
      %v2106 = vmul.f32 %v1780, 0.01
      %v2107 = vmul.f32 %v1785, 0.01
      %v2108 = vmul.f32 %v1788, 0.01
      %v2109 = vmul.f32 %v1793, 0.01
      %v2110 = vmul.f32 %v1796, 0.01
      %v2111 = vmul.f32 %v1801, 0.01
      %v2112 = vmul.f32 %v1804, 0.01
      %v2113 = vmul.f32 %v1809, 0.01
      %v2114 = vmul.f32 %v1812, 0.01
      %v2115 = vmul.f32 %v1817, 0.01
      %v2116 = vmul.f32 %v1820, 0.01
      %v2117 = vmul.f32 %v1825, 0.01
      %v2118 = vmul.f32 %v1828, 0.01
      %v2119 = vmul.f32 %v1833, 0.01
      %v2120 = vmul.f32 %v1836, 0.01
      %v2121 = vmul.f32 %v1841, 0.01
      %v2122 = vmul.f32 %v1844, 0.01
      %v2123 = vmul.f32 %v1849, 0.01
      %v2124 = vmul.f32 %v1852, 0.01
      %v2125 = vmul.f32 %v1857, 0.01
      %v2126 = vmul.f32 %v1860, 0.01
      %v2127 = vmul.f32 %v1865, 0.01
      %v2128 = vmul.f32 %v1868, 0.01
      %v2129 = vmul.f32 %v1873, 0.01
      %v2130 = vmul.f32 %v1876, 0.01
      %v2131 = vmul.f32 %v1881, 0.01
      %v2132 = vmul.f32 %v1884, 0.01
      %v2133 = vmul.f32 %v1889, 0.01
      %v2134 = vmul.f32 %v1892, 0.01
      %v2135 = vmul.f32 %v1897, 0.01
      %v2136 = vmul.f32 %v1900, 0.01
      %v2137 = vmul.f32 %v1905, 0.01
      %v2138 = vmul.f32 %v1908, 0.01
      %v2139 = vmul.f32 %v1913, 0.01
      %v2140 = vmul.f32 %v1916, 0.01
      %v2141 = vmul.f32 %v1921, 0.01
      %v2142 = vmul.f32 %v1924, 0.01
      %v2143 = vmul.f32 %v1929, 0.01
      %v2144 = vmul.f32 %v1932, 0.01
      %v2145 = vmul.f32 %v1937, 0.01
      %v2146 = vmul.f32 %v1940, 0.01
      %v2147 = vmul.f32 %v1945, 0.01
      %v2148 = vmul.f32 %v1948, 0.01
      %v2149 = vmul.f32 %v1953, 0.01
      %v2150 = vmul.f32 %v1956, 0.01
      %v2151 = vmul.f32 %v1961, 0.01
      %v2152 = vmul.f32 %v1964, 0.01
      %v2153 = vmul.f32 %v1969, 0.01
      %v2154 = vmul.f32 %v1972, 0.01
      %v2155 = vmul.f32 %v1977, 0.01
      %v2156 = vmul.f32 %v1980, 0.01
      %v2157 = vmul.f32 %v1985, 0.01
      %v2158 = vmul.f32 %v1988, 0.01
      %v2159 = vmul.f32 %v1993, 0.01
      %v2160 = vmul.f32 %v1996, 0.01
      %v2161 = vmul.f32 %v2001, 0.01
      %v2162 = vmul.f32 %v2004, 0.01
      %v2163 = vmul.f32 %v2009, 0.01
      %v2164 = vmul.f32 %v2012, 0.01
      %v2165 = vmul.f32 %v2017, 0.01
      %v2166 = vmul.f32 %v2020, 0.01
      %v2167 = vsel %vm2023, %v1737, %v2095
      %v2168 = vsel %vm2024, %v1740, %v2096
      %v2169 = vsel %vm2025, %v1745, %v2097
      %v2170 = vsel %vm2026, %v1748, %v2098
      %v2171 = vsel %vm2027, %v1753, %v2099
      %v2172 = vsel %vm2028, %v1756, %v2100
      %v2173 = vsel %vm2029, %v1761, %v2101
      %v2174 = vsel %vm2030, %v1764, %v2102
      %v2175 = vsel %vm2031, %v1769, %v2103
      %v2176 = vsel %vm2032, %v1772, %v2104
      %v2177 = vsel %vm2033, %v1777, %v2105
      %v2178 = vsel %vm2034, %v1780, %v2106
      %v2179 = vsel %vm2035, %v1785, %v2107
      %v2180 = vsel %vm2036, %v1788, %v2108
      %v2181 = vsel %vm2037, %v1793, %v2109
      %v2182 = vsel %vm2038, %v1796, %v2110
      %v2183 = vsel %vm2039, %v1801, %v2111
      %v2184 = vsel %vm2040, %v1804, %v2112
      %v2185 = vsel %vm2041, %v1809, %v2113
      %v2186 = vsel %vm2042, %v1812, %v2114
      %v2187 = vsel %vm2043, %v1817, %v2115
      %v2188 = vsel %vm2044, %v1820, %v2116
      %v2189 = vsel %vm2045, %v1825, %v2117
      %v2190 = vsel %vm2046, %v1828, %v2118
      %v2191 = vsel %vm2047, %v1833, %v2119
      %v2192 = vsel %vm2048, %v1836, %v2120
      %v2193 = vsel %vm2049, %v1841, %v2121
      %v2194 = vsel %vm2050, %v1844, %v2122
      %v2195 = vsel %vm2051, %v1849, %v2123
      %v2196 = vsel %vm2052, %v1852, %v2124
      %v2197 = vsel %vm2053, %v1857, %v2125
      %v2198 = vsel %vm2054, %v1860, %v2126
      %v2199 = vsel %vm2055, %v1865, %v2127
      %v2200 = vsel %vm2056, %v1868, %v2128
      %v2201 = vsel %vm2057, %v1873, %v2129
      %v2202 = vsel %vm2058, %v1876, %v2130
      %v2203 = vsel %vm2059, %v1881, %v2131
      %v2204 = vsel %vm2060, %v1884, %v2132
      %v2205 = vsel %vm2061, %v1889, %v2133
      %v2206 = vsel %vm2062, %v1892, %v2134
      %v2207 = vsel %vm2063, %v1897, %v2135
      %v2208 = vsel %vm2064, %v1900, %v2136
      %v2209 = vsel %vm2065, %v1905, %v2137
      %v2210 = vsel %vm2066, %v1908, %v2138
      %v2211 = vsel %vm2067, %v1913, %v2139
      %v2212 = vsel %vm2068, %v1916, %v2140
      %v2213 = vsel %vm2069, %v1921, %v2141
      %v2214 = vsel %vm2070, %v1924, %v2142
      %v2215 = vsel %vm2071, %v1929, %v2143
      %v2216 = vsel %vm2072, %v1932, %v2144
      %v2217 = vsel %vm2073, %v1937, %v2145
      %v2218 = vsel %vm2074, %v1940, %v2146
      %v2219 = vsel %vm2075, %v1945, %v2147
      %v2220 = vsel %vm2076, %v1948, %v2148
      %v2221 = vsel %vm2077, %v1953, %v2149
      %v2222 = vsel %vm2078, %v1956, %v2150
      %v2223 = vsel %vm2079, %v1961, %v2151
      %v2224 = vsel %vm2080, %v1964, %v2152
      %v2225 = vsel %vm2081, %v1969, %v2153
      %v2226 = vsel %vm2082, %v1972, %v2154
      %v2227 = vsel %vm2083, %v1977, %v2155
      %v2228 = vsel %vm2084, %v1980, %v2156
      %v2229 = vsel %vm2085, %v1985, %v2157
      %v2230 = vsel %vm2086, %v1988, %v2158
      %v2231 = vsel %vm2087, %v1993, %v2159
      %v2232 = vsel %vm2088, %v1996, %v2160
      %v2233 = vsel %vm2089, %v2001, %v2161
      %v2234 = vsel %vm2090, %v2004, %v2162
      %v2235 = vsel %vm2091, %v2009, %v2163
      %v2236 = vsel %vm2092, %v2012, %v2164
      %v2237 = vsel %vm2093, %v2017, %v2165
      %v2238 = vsel %vm2094, %v2020, %v2166
      %v2239 = vsel %vm1426, %v2167, 0.0
      %v2240 = vsel %vm1426, %v2168, 0.0
      %v2241 = vadd.f32 %v2239, %v2240
      %v2242 = vsel %vm1426, %v2169, 0.0
      %v2243 = vadd.f32 %v2241, %v2242
      %v2244 = vsel %vm1426, %v2170, 0.0
      %v2245 = vadd.f32 %v2243, %v2244
      %v2246 = vsel %vm1426, %v2171, 0.0
      %v2247 = vadd.f32 %v2245, %v2246
      %v2248 = vsel %vm1426, %v2172, 0.0
      %v2249 = vadd.f32 %v2247, %v2248
      %v2250 = vsel %vm1426, %v2173, 0.0
      %v2251 = vadd.f32 %v2249, %v2250
      %v2252 = vsel %vm1426, %v2174, 0.0
      %v2253 = vadd.f32 %v2251, %v2252
      %v2254 = vsel %vm1426, %v2175, 0.0
      %v2255 = vadd.f32 %v2253, %v2254
      %v2256 = vsel %vm1426, %v2176, 0.0
      %v2257 = vadd.f32 %v2255, %v2256
      %v2258 = vsel %vm1426, %v2177, 0.0
      %v2259 = vadd.f32 %v2257, %v2258
      %v2260 = vsel %vm1426, %v2178, 0.0
      %v2261 = vadd.f32 %v2259, %v2260
      %v2262 = vsel %vm1426, %v2179, 0.0
      %v2263 = vadd.f32 %v2261, %v2262
      %v2264 = vsel %vm1426, %v2180, 0.0
      %v2265 = vadd.f32 %v2263, %v2264
      %v2266 = vsel %vm1426, %v2181, 0.0
      %v2267 = vadd.f32 %v2265, %v2266
      %v2268 = vsel %vm1426, %v2182, 0.0
      %v2269 = vadd.f32 %v2267, %v2268
      %v2270 = vsel %vm1426, %v2183, 0.0
      %v2271 = vadd.f32 %v2269, %v2270
      %v2272 = vsel %vm1426, %v2184, 0.0
      %v2273 = vadd.f32 %v2271, %v2272
      %v2274 = vsel %vm1426, %v2185, 0.0
      %v2275 = vadd.f32 %v2273, %v2274
      %v2276 = vsel %vm1426, %v2186, 0.0
      %v2277 = vadd.f32 %v2275, %v2276
      %v2278 = vsel %vm1426, %v2187, 0.0
      %v2279 = vadd.f32 %v2277, %v2278
      %v2280 = vsel %vm1426, %v2188, 0.0
      %v2281 = vadd.f32 %v2279, %v2280
      %v2282 = vsel %vm1426, %v2189, 0.0
      %v2283 = vadd.f32 %v2281, %v2282
      %v2284 = vsel %vm1426, %v2190, 0.0
      %v2285 = vadd.f32 %v2283, %v2284
      %v2286 = vsel %vm1426, %v2191, 0.0
      %v2287 = vadd.f32 %v2285, %v2286
      %v2288 = vsel %vm1426, %v2192, 0.0
      %v2289 = vadd.f32 %v2287, %v2288
      %v2290 = vsel %vm1426, %v2193, 0.0
      %v2291 = vadd.f32 %v2289, %v2290
      %v2292 = vsel %vm1426, %v2194, 0.0
      %v2293 = vadd.f32 %v2291, %v2292
      %v2294 = vsel %vm1426, %v2195, 0.0
      %v2295 = vadd.f32 %v2293, %v2294
      %v2296 = vsel %vm1426, %v2196, 0.0
      %v2297 = vadd.f32 %v2295, %v2296
      %v2298 = vsel %vm1426, %v2197, 0.0
      %v2299 = vadd.f32 %v2297, %v2298
      %v2300 = vsel %vm1426, %v2198, 0.0
      %v2301 = vadd.f32 %v2299, %v2300
      %v2302 = vsel %vm1426, %v2199, 0.0
      %v2303 = vadd.f32 %v2301, %v2302
      %v2304 = vsel %vm1426, %v2200, 0.0
      %v2305 = vadd.f32 %v2303, %v2304
      %v2306 = vsel %vm1426, %v2201, 0.0
      %v2307 = vadd.f32 %v2305, %v2306
      %v2308 = vsel %vm1426, %v2202, 0.0
      %v2309 = vadd.f32 %v2307, %v2308
      %v2310 = vsel %vm1426, %v2203, 0.0
      %v2311 = vadd.f32 %v2309, %v2310
      %v2312 = vsel %vm1426, %v2204, 0.0
      %v2313 = vadd.f32 %v2311, %v2312
      %v2314 = vsel %vm1426, %v2205, 0.0
      %v2315 = vadd.f32 %v2313, %v2314
      %v2316 = vsel %vm1426, %v2206, 0.0
      %v2317 = vadd.f32 %v2315, %v2316
      %v2318 = vsel %vm1426, %v2207, 0.0
      %v2319 = vadd.f32 %v2317, %v2318
      %v2320 = vsel %vm1426, %v2208, 0.0
      %v2321 = vadd.f32 %v2319, %v2320
      %v2322 = vsel %vm1426, %v2209, 0.0
      %v2323 = vadd.f32 %v2321, %v2322
      %v2324 = vsel %vm1426, %v2210, 0.0
      %v2325 = vadd.f32 %v2323, %v2324
      %v2326 = vsel %vm1426, %v2211, 0.0
      %v2327 = vadd.f32 %v2325, %v2326
      %v2328 = vsel %vm1426, %v2212, 0.0
      %v2329 = vadd.f32 %v2327, %v2328
      %v2330 = vsel %vm1426, %v2213, 0.0
      %v2331 = vadd.f32 %v2329, %v2330
      %v2332 = vsel %vm1426, %v2214, 0.0
      %v2333 = vadd.f32 %v2331, %v2332
      %v2334 = vsel %vm1426, %v2215, 0.0
      %v2335 = vadd.f32 %v2333, %v2334
      %v2336 = vsel %vm1426, %v2216, 0.0
      %v2337 = vadd.f32 %v2335, %v2336
      %v2338 = vsel %vm1426, %v2217, 0.0
      %v2339 = vadd.f32 %v2337, %v2338
      %v2340 = vsel %vm1426, %v2218, 0.0
      %v2341 = vadd.f32 %v2339, %v2340
      %v2342 = vsel %vm1426, %v2219, 0.0
      %v2343 = vadd.f32 %v2341, %v2342
      %v2344 = vsel %vm1426, %v2220, 0.0
      %v2345 = vadd.f32 %v2343, %v2344
      %v2346 = vsel %vm1426, %v2221, 0.0
      %v2347 = vadd.f32 %v2345, %v2346
      %v2348 = vsel %vm1426, %v2222, 0.0
      %v2349 = vadd.f32 %v2347, %v2348
      %v2350 = vsel %vm1426, %v2223, 0.0
      %v2351 = vadd.f32 %v2349, %v2350
      %v2352 = vsel %vm1426, %v2224, 0.0
      %v2353 = vadd.f32 %v2351, %v2352
      %v2354 = vsel %vm1426, %v2225, 0.0
      %v2355 = vadd.f32 %v2353, %v2354
      %v2356 = vsel %vm1426, %v2226, 0.0
      %v2357 = vadd.f32 %v2355, %v2356
      %v2358 = vsel %vm1426, %v2227, 0.0
      %v2359 = vadd.f32 %v2357, %v2358
      %v2360 = vsel %vm1426, %v2228, 0.0
      %v2361 = vadd.f32 %v2359, %v2360
      %v2362 = vsel %vm1426, %v2229, 0.0
      %v2363 = vadd.f32 %v2361, %v2362
      %v2364 = vsel %vm1426, %v2230, 0.0
      %v2365 = vadd.f32 %v2363, %v2364
      %v2366 = vsel %vm1426, %v2231, 0.0
      %v2367 = vadd.f32 %v2365, %v2366
      %v2368 = vsel %vm1426, %v2232, 0.0
      %v2369 = vadd.f32 %v2367, %v2368
      %v2370 = vsel %vm1426, %v2233, 0.0
      %v2371 = vadd.f32 %v2369, %v2370
      %v2372 = vsel %vm1426, %v2234, 0.0
      %v2373 = vadd.f32 %v2371, %v2372
      %v2374 = vsel %vm1426, %v2235, 0.0
      %v2375 = vadd.f32 %v2373, %v2374
      %v2376 = vsel %vm1426, %v2236, 0.0
      %v2377 = vadd.f32 %v2375, %v2376
      %v2378 = vsel %vm1426, %v2237, 0.0
      %v2379 = vadd.f32 %v2377, %v2378
      %v2380 = vsel %vm1426, %v2238, 0.0
      %v2381 = vadd.f32 %v2379, %v2380
      %v2382 = vrot.slane %v2381, 4
      %v2383 = vadd.f32 %v2381, %v2382
      %v2384 = vrot.slane %v2383, 2
      %v2385 = vadd.f32 %v2383, %v2384
      %v2386 = vrot.slane %v2385, 1
      %v2387 = vadd.f32 %v2385, %v2386
      %v2388 = vmul.f32 %v2167, %v2167
      %v2389 = vmul.f32 %v2168, %v2168
      %v2390 = vmul.f32 %v2169, %v2169
      %v2391 = vmul.f32 %v2170, %v2170
      %v2392 = vmul.f32 %v2171, %v2171
      %v2393 = vmul.f32 %v2172, %v2172
      %v2394 = vmul.f32 %v2173, %v2173
      %v2395 = vmul.f32 %v2174, %v2174
      %v2396 = vmul.f32 %v2175, %v2175
      %v2397 = vmul.f32 %v2176, %v2176
      %v2398 = vmul.f32 %v2177, %v2177
      %v2399 = vmul.f32 %v2178, %v2178
      %v2400 = vmul.f32 %v2179, %v2179
      %v2401 = vmul.f32 %v2180, %v2180
      %v2402 = vmul.f32 %v2181, %v2181
      %v2403 = vmul.f32 %v2182, %v2182
      %v2404 = vmul.f32 %v2183, %v2183
      %v2405 = vmul.f32 %v2184, %v2184
      %v2406 = vmul.f32 %v2185, %v2185
      %v2407 = vmul.f32 %v2186, %v2186
      %v2408 = vmul.f32 %v2187, %v2187
      %v2409 = vmul.f32 %v2188, %v2188
      %v2410 = vmul.f32 %v2189, %v2189
      %v2411 = vmul.f32 %v2190, %v2190
      %v2412 = vmul.f32 %v2191, %v2191
      %v2413 = vmul.f32 %v2192, %v2192
      %v2414 = vmul.f32 %v2193, %v2193
      %v2415 = vmul.f32 %v2194, %v2194
      %v2416 = vmul.f32 %v2195, %v2195
      %v2417 = vmul.f32 %v2196, %v2196
      %v2418 = vmul.f32 %v2197, %v2197
      %v2419 = vmul.f32 %v2198, %v2198
      %v2420 = vmul.f32 %v2199, %v2199
      %v2421 = vmul.f32 %v2200, %v2200
      %v2422 = vmul.f32 %v2201, %v2201
      %v2423 = vmul.f32 %v2202, %v2202
      %v2424 = vmul.f32 %v2203, %v2203
      %v2425 = vmul.f32 %v2204, %v2204
      %v2426 = vmul.f32 %v2205, %v2205
      %v2427 = vmul.f32 %v2206, %v2206
      %v2428 = vmul.f32 %v2207, %v2207
      %v2429 = vmul.f32 %v2208, %v2208
      %v2430 = vmul.f32 %v2209, %v2209
      %v2431 = vmul.f32 %v2210, %v2210
      %v2432 = vmul.f32 %v2211, %v2211
      %v2433 = vmul.f32 %v2212, %v2212
      %v2434 = vmul.f32 %v2213, %v2213
      %v2435 = vmul.f32 %v2214, %v2214
      %v2436 = vmul.f32 %v2215, %v2215
      %v2437 = vmul.f32 %v2216, %v2216
      %v2438 = vmul.f32 %v2217, %v2217
      %v2439 = vmul.f32 %v2218, %v2218
      %v2440 = vmul.f32 %v2219, %v2219
      %v2441 = vmul.f32 %v2220, %v2220
      %v2442 = vmul.f32 %v2221, %v2221
      %v2443 = vmul.f32 %v2222, %v2222
      %v2444 = vmul.f32 %v2223, %v2223
      %v2445 = vmul.f32 %v2224, %v2224
      %v2446 = vmul.f32 %v2225, %v2225
      %v2447 = vmul.f32 %v2226, %v2226
      %v2448 = vmul.f32 %v2227, %v2227
      %v2449 = vmul.f32 %v2228, %v2228
      %v2450 = vmul.f32 %v2229, %v2229
      %v2451 = vmul.f32 %v2230, %v2230
      %v2452 = vmul.f32 %v2231, %v2231
      %v2453 = vmul.f32 %v2232, %v2232
      %v2454 = vmul.f32 %v2233, %v2233
      %v2455 = vmul.f32 %v2234, %v2234
      %v2456 = vmul.f32 %v2235, %v2235
      %v2457 = vmul.f32 %v2236, %v2236
      %v2458 = vmul.f32 %v2237, %v2237
      %v2459 = vmul.f32 %v2238, %v2238
      %v2460 = vsel %vm1426, %v2388, 0.0
      %v2461 = vsel %vm1426, %v2389, 0.0
      %v2462 = vadd.f32 %v2460, %v2461
      %v2463 = vsel %vm1426, %v2390, 0.0
      %v2464 = vadd.f32 %v2462, %v2463
      %v2465 = vsel %vm1426, %v2391, 0.0
      %v2466 = vadd.f32 %v2464, %v2465
      %v2467 = vsel %vm1426, %v2392, 0.0
      %v2468 = vadd.f32 %v2466, %v2467
      %v2469 = vsel %vm1426, %v2393, 0.0
      %v2470 = vadd.f32 %v2468, %v2469
      %v2471 = vsel %vm1426, %v2394, 0.0
      %v2472 = vadd.f32 %v2470, %v2471
      %v2473 = vsel %vm1426, %v2395, 0.0
      %v2474 = vadd.f32 %v2472, %v2473
      %v2475 = vsel %vm1426, %v2396, 0.0
      %v2476 = vadd.f32 %v2474, %v2475
      %v2477 = vsel %vm1426, %v2397, 0.0
      %v2478 = vadd.f32 %v2476, %v2477
      %v2479 = vsel %vm1426, %v2398, 0.0
      %v2480 = vadd.f32 %v2478, %v2479
      %v2481 = vsel %vm1426, %v2399, 0.0
      %v2482 = vadd.f32 %v2480, %v2481
      %v2483 = vsel %vm1426, %v2400, 0.0
      %v2484 = vadd.f32 %v2482, %v2483
      %v2485 = vsel %vm1426, %v2401, 0.0
      %v2486 = vadd.f32 %v2484, %v2485
      %v2487 = vsel %vm1426, %v2402, 0.0
      %v2488 = vadd.f32 %v2486, %v2487
      %v2489 = vsel %vm1426, %v2403, 0.0
      %v2490 = vadd.f32 %v2488, %v2489
      %v2491 = vsel %vm1426, %v2404, 0.0
      %v2492 = vadd.f32 %v2490, %v2491
      %v2493 = vsel %vm1426, %v2405, 0.0
      %v2494 = vadd.f32 %v2492, %v2493
      %v2495 = vsel %vm1426, %v2406, 0.0
      %v2496 = vadd.f32 %v2494, %v2495
      %v2497 = vsel %vm1426, %v2407, 0.0
      %v2498 = vadd.f32 %v2496, %v2497
      %v2499 = vsel %vm1426, %v2408, 0.0
      %v2500 = vadd.f32 %v2498, %v2499
      %v2501 = vsel %vm1426, %v2409, 0.0
      %v2502 = vadd.f32 %v2500, %v2501
      %v2503 = vsel %vm1426, %v2410, 0.0
      %v2504 = vadd.f32 %v2502, %v2503
      %v2505 = vsel %vm1426, %v2411, 0.0
      %v2506 = vadd.f32 %v2504, %v2505
      %v2507 = vsel %vm1426, %v2412, 0.0
      %v2508 = vadd.f32 %v2506, %v2507
      %v2509 = vsel %vm1426, %v2413, 0.0
      %v2510 = vadd.f32 %v2508, %v2509
      %v2511 = vsel %vm1426, %v2414, 0.0
      %v2512 = vadd.f32 %v2510, %v2511
      %v2513 = vsel %vm1426, %v2415, 0.0
      %v2514 = vadd.f32 %v2512, %v2513
      %v2515 = vsel %vm1426, %v2416, 0.0
      %v2516 = vadd.f32 %v2514, %v2515
      %v2517 = vsel %vm1426, %v2417, 0.0
      %v2518 = vadd.f32 %v2516, %v2517
      %v2519 = vsel %vm1426, %v2418, 0.0
      %v2520 = vadd.f32 %v2518, %v2519
      %v2521 = vsel %vm1426, %v2419, 0.0
      %v2522 = vadd.f32 %v2520, %v2521
      %v2523 = vsel %vm1426, %v2420, 0.0
      %v2524 = vadd.f32 %v2522, %v2523
      %v2525 = vsel %vm1426, %v2421, 0.0
      %v2526 = vadd.f32 %v2524, %v2525
      %v2527 = vsel %vm1426, %v2422, 0.0
      %v2528 = vadd.f32 %v2526, %v2527
      %v2529 = vsel %vm1426, %v2423, 0.0
      %v2530 = vadd.f32 %v2528, %v2529
      %v2531 = vsel %vm1426, %v2424, 0.0
      %v2532 = vadd.f32 %v2530, %v2531
      %v2533 = vsel %vm1426, %v2425, 0.0
      %v2534 = vadd.f32 %v2532, %v2533
      %v2535 = vsel %vm1426, %v2426, 0.0
      %v2536 = vadd.f32 %v2534, %v2535
      %v2537 = vsel %vm1426, %v2427, 0.0
      %v2538 = vadd.f32 %v2536, %v2537
      %v2539 = vsel %vm1426, %v2428, 0.0
      %v2540 = vadd.f32 %v2538, %v2539
      %v2541 = vsel %vm1426, %v2429, 0.0
      %v2542 = vadd.f32 %v2540, %v2541
      %v2543 = vsel %vm1426, %v2430, 0.0
      %v2544 = vadd.f32 %v2542, %v2543
      %v2545 = vsel %vm1426, %v2431, 0.0
      %v2546 = vadd.f32 %v2544, %v2545
      %v2547 = vsel %vm1426, %v2432, 0.0
      %v2548 = vadd.f32 %v2546, %v2547
      %v2549 = vsel %vm1426, %v2433, 0.0
      %v2550 = vadd.f32 %v2548, %v2549
      %v2551 = vsel %vm1426, %v2434, 0.0
      %v2552 = vadd.f32 %v2550, %v2551
      %v2553 = vsel %vm1426, %v2435, 0.0
      %v2554 = vadd.f32 %v2552, %v2553
      %v2555 = vsel %vm1426, %v2436, 0.0
      %v2556 = vadd.f32 %v2554, %v2555
      %v2557 = vsel %vm1426, %v2437, 0.0
      %v2558 = vadd.f32 %v2556, %v2557
      %v2559 = vsel %vm1426, %v2438, 0.0
      %v2560 = vadd.f32 %v2558, %v2559
      %v2561 = vsel %vm1426, %v2439, 0.0
      %v2562 = vadd.f32 %v2560, %v2561
      %v2563 = vsel %vm1426, %v2440, 0.0
      %v2564 = vadd.f32 %v2562, %v2563
      %v2565 = vsel %vm1426, %v2441, 0.0
      %v2566 = vadd.f32 %v2564, %v2565
      %v2567 = vsel %vm1426, %v2442, 0.0
      %v2568 = vadd.f32 %v2566, %v2567
      %v2569 = vsel %vm1426, %v2443, 0.0
      %v2570 = vadd.f32 %v2568, %v2569
      %v2571 = vsel %vm1426, %v2444, 0.0
      %v2572 = vadd.f32 %v2570, %v2571
      %v2573 = vsel %vm1426, %v2445, 0.0
      %v2574 = vadd.f32 %v2572, %v2573
      %v2575 = vsel %vm1426, %v2446, 0.0
      %v2576 = vadd.f32 %v2574, %v2575
      %v2577 = vsel %vm1426, %v2447, 0.0
      %v2578 = vadd.f32 %v2576, %v2577
      %v2579 = vsel %vm1426, %v2448, 0.0
      %v2580 = vadd.f32 %v2578, %v2579
      %v2581 = vsel %vm1426, %v2449, 0.0
      %v2582 = vadd.f32 %v2580, %v2581
      %v2583 = vsel %vm1426, %v2450, 0.0
      %v2584 = vadd.f32 %v2582, %v2583
      %v2585 = vsel %vm1426, %v2451, 0.0
      %v2586 = vadd.f32 %v2584, %v2585
      %v2587 = vsel %vm1426, %v2452, 0.0
      %v2588 = vadd.f32 %v2586, %v2587
      %v2589 = vsel %vm1426, %v2453, 0.0
      %v2590 = vadd.f32 %v2588, %v2589
      %v2591 = vsel %vm1426, %v2454, 0.0
      %v2592 = vadd.f32 %v2590, %v2591
      %v2593 = vsel %vm1426, %v2455, 0.0
      %v2594 = vadd.f32 %v2592, %v2593
      %v2595 = vsel %vm1426, %v2456, 0.0
      %v2596 = vadd.f32 %v2594, %v2595
      %v2597 = vsel %vm1426, %v2457, 0.0
      %v2598 = vadd.f32 %v2596, %v2597
      %v2599 = vsel %vm1426, %v2458, 0.0
      %v2600 = vadd.f32 %v2598, %v2599
      %v2601 = vsel %vm1426, %v2459, 0.0
      %v2602 = vadd.f32 %v2600, %v2601
      %v2603 = vrot.slane %v2602, 4
      %v2604 = vadd.f32 %v2602, %v2603
      %v2605 = vrot.slane %v2604, 2
      %v2606 = vadd.f32 %v2604, %v2605
      %v2607 = vrot.slane %v2606, 1
      %v2608 = vadd.f32 %v2606, %v2607
      %v2609 = vmul.f32 %v2387, 0.0017361111
      %v2610 = vmul.f32 %v2608, 0.0017361111
      %v2611 = vmul.f32 %v2609, %v2609
      %v2612 = vsub.f32 %v2610, %v2611
      %v2613 = vmax.f32 %v2612, 0.0
      %v2614 = vsub.f32 %v2167, %v2609
      %v2615 = vsub.f32 %v2168, %v2609
      %v2616 = vsub.f32 %v2169, %v2609
      %v2617 = vsub.f32 %v2170, %v2609
      %v2618 = vsub.f32 %v2171, %v2609
      %v2619 = vsub.f32 %v2172, %v2609
      %v2620 = vsub.f32 %v2173, %v2609
      %v2621 = vsub.f32 %v2174, %v2609
      %v2622 = vsub.f32 %v2175, %v2609
      %v2623 = vsub.f32 %v2176, %v2609
      %v2624 = vsub.f32 %v2177, %v2609
      %v2625 = vsub.f32 %v2178, %v2609
      %v2626 = vsub.f32 %v2179, %v2609
      %v2627 = vsub.f32 %v2180, %v2609
      %v2628 = vsub.f32 %v2181, %v2609
      %v2629 = vsub.f32 %v2182, %v2609
      %v2630 = vsub.f32 %v2183, %v2609
      %v2631 = vsub.f32 %v2184, %v2609
      %v2632 = vsub.f32 %v2185, %v2609
      %v2633 = vsub.f32 %v2186, %v2609
      %v2634 = vsub.f32 %v2187, %v2609
      %v2635 = vsub.f32 %v2188, %v2609
      %v2636 = vsub.f32 %v2189, %v2609
      %v2637 = vsub.f32 %v2190, %v2609
      %v2638 = vsub.f32 %v2191, %v2609
      %v2639 = vsub.f32 %v2192, %v2609
      %v2640 = vsub.f32 %v2193, %v2609
      %v2641 = vsub.f32 %v2194, %v2609
      %v2642 = vsub.f32 %v2195, %v2609
      %v2643 = vsub.f32 %v2196, %v2609
      %v2644 = vsub.f32 %v2197, %v2609
      %v2645 = vsub.f32 %v2198, %v2609
      %v2646 = vsub.f32 %v2199, %v2609
      %v2647 = vsub.f32 %v2200, %v2609
      %v2648 = vsub.f32 %v2201, %v2609
      %v2649 = vsub.f32 %v2202, %v2609
      %v2650 = vsub.f32 %v2203, %v2609
      %v2651 = vsub.f32 %v2204, %v2609
      %v2652 = vsub.f32 %v2205, %v2609
      %v2653 = vsub.f32 %v2206, %v2609
      %v2654 = vsub.f32 %v2207, %v2609
      %v2655 = vsub.f32 %v2208, %v2609
      %v2656 = vsub.f32 %v2209, %v2609
      %v2657 = vsub.f32 %v2210, %v2609
      %v2658 = vsub.f32 %v2211, %v2609
      %v2659 = vsub.f32 %v2212, %v2609
      %v2660 = vsub.f32 %v2213, %v2609
      %v2661 = vsub.f32 %v2214, %v2609
      %v2662 = vsub.f32 %v2215, %v2609
      %v2663 = vsub.f32 %v2216, %v2609
      %v2664 = vsub.f32 %v2217, %v2609
      %v2665 = vsub.f32 %v2218, %v2609
      %v2666 = vsub.f32 %v2219, %v2609
      %v2667 = vsub.f32 %v2220, %v2609
      %v2668 = vsub.f32 %v2221, %v2609
      %v2669 = vsub.f32 %v2222, %v2609
      %v2670 = vsub.f32 %v2223, %v2609
      %v2671 = vsub.f32 %v2224, %v2609
      %v2672 = vsub.f32 %v2225, %v2609
      %v2673 = vsub.f32 %v2226, %v2609
      %v2674 = vsub.f32 %v2227, %v2609
      %v2675 = vsub.f32 %v2228, %v2609
      %v2676 = vsub.f32 %v2229, %v2609
      %v2677 = vsub.f32 %v2230, %v2609
      %v2678 = vsub.f32 %v2231, %v2609
      %v2679 = vsub.f32 %v2232, %v2609
      %v2680 = vsub.f32 %v2233, %v2609
      %v2681 = vsub.f32 %v2234, %v2609
      %v2682 = vsub.f32 %v2235, %v2609
      %v2683 = vsub.f32 %v2236, %v2609
      %v2684 = vsub.f32 %v2237, %v2609
      %v2685 = vsub.f32 %v2238, %v2609
      %v2686 = vadd.f32 %v2613, 1e-05
      %v2687 = vrsqrt.pop %v2686
      %v2688 = vmul.f32 %v2614, %v2687
      %v2689 = vmul.f32 %v2615, %v2687
      %v2690 = vmul.f32 %v2616, %v2687
      %v2691 = vmul.f32 %v2617, %v2687
      %v2692 = vmul.f32 %v2618, %v2687
      %v2693 = vmul.f32 %v2619, %v2687
      %v2694 = vmul.f32 %v2620, %v2687
      %v2695 = vmul.f32 %v2621, %v2687
      %v2696 = vmul.f32 %v2622, %v2687
      %v2697 = vmul.f32 %v2623, %v2687
      %v2698 = vmul.f32 %v2624, %v2687
      %v2699 = vmul.f32 %v2625, %v2687
      %v2700 = vmul.f32 %v2626, %v2687
      %v2701 = vmul.f32 %v2627, %v2687
      %v2702 = vmul.f32 %v2628, %v2687
      %v2703 = vmul.f32 %v2629, %v2687
      %v2704 = vmul.f32 %v2630, %v2687
      %v2705 = vmul.f32 %v2631, %v2687
      %v2706 = vmul.f32 %v2632, %v2687
      %v2707 = vmul.f32 %v2633, %v2687
      %v2708 = vmul.f32 %v2634, %v2687
      %v2709 = vmul.f32 %v2635, %v2687
      %v2710 = vmul.f32 %v2636, %v2687
      %v2711 = vmul.f32 %v2637, %v2687
      %v2712 = vmul.f32 %v2638, %v2687
      %v2713 = vmul.f32 %v2639, %v2687
      %v2714 = vmul.f32 %v2640, %v2687
      %v2715 = vmul.f32 %v2641, %v2687
      %v2716 = vmul.f32 %v2642, %v2687
      %v2717 = vmul.f32 %v2643, %v2687
      %v2718 = vmul.f32 %v2644, %v2687
      %v2719 = vmul.f32 %v2645, %v2687
      %v2720 = vmul.f32 %v2646, %v2687
      %v2721 = vmul.f32 %v2647, %v2687
      %v2722 = vmul.f32 %v2648, %v2687
      %v2723 = vmul.f32 %v2649, %v2687
      %v2724 = vmul.f32 %v2650, %v2687
      %v2725 = vmul.f32 %v2651, %v2687
      %v2726 = vmul.f32 %v2652, %v2687
      %v2727 = vmul.f32 %v2653, %v2687
      %v2728 = vmul.f32 %v2654, %v2687
      %v2729 = vmul.f32 %v2655, %v2687
      %v2730 = vmul.f32 %v2656, %v2687
      %v2731 = vmul.f32 %v2657, %v2687
      %v2732 = vmul.f32 %v2658, %v2687
      %v2733 = vmul.f32 %v2659, %v2687
      %v2734 = vmul.f32 %v2660, %v2687
      %v2735 = vmul.f32 %v2661, %v2687
      %v2736 = vmul.f32 %v2662, %v2687
      %v2737 = vmul.f32 %v2663, %v2687
      %v2738 = vmul.f32 %v2664, %v2687
      %v2739 = vmul.f32 %v2665, %v2687
      %v2740 = vmul.f32 %v2666, %v2687
      %v2741 = vmul.f32 %v2667, %v2687
      %v2742 = vmul.f32 %v2668, %v2687
      %v2743 = vmul.f32 %v2669, %v2687
      %v2744 = vmul.f32 %v2670, %v2687
      %v2745 = vmul.f32 %v2671, %v2687
      %v2746 = vmul.f32 %v2672, %v2687
      %v2747 = vmul.f32 %v2673, %v2687
      %v2748 = vmul.f32 %v2674, %v2687
      %v2749 = vmul.f32 %v2675, %v2687
      %v2750 = vmul.f32 %v2676, %v2687
      %v2751 = vmul.f32 %v2677, %v2687
      %v2752 = vmul.f32 %v2678, %v2687
      %v2753 = vmul.f32 %v2679, %v2687
      %v2754 = vmul.f32 %v2680, %v2687
      %v2755 = vmul.f32 %v2681, %v2687
      %v2756 = vmul.f32 %v2682, %v2687
      %v2757 = vmul.f32 %v2683, %v2687
      %v2758 = vmul.f32 %v2684, %v2687
      %v2759 = vmul.f32 %v2685, %v2687
      %v2760 = vpack.c.bf16 %v2689, %v2688
      %v2761 = vpack.c.bf16 %v2691, %v2690
      %v2762 = vpack.c.bf16 %v2693, %v2692
      %v2763 = vpack.c.bf16 %v2695, %v2694
      %v2764 = vpack.c.bf16 %v2697, %v2696
      %v2765 = vpack.c.bf16 %v2699, %v2698
      %v2766 = vpack.c.bf16 %v2701, %v2700
      %v2767 = vpack.c.bf16 %v2703, %v2702
      %v2768 = vpack.c.bf16 %v2705, %v2704
      %v2769 = vpack.c.bf16 %v2707, %v2706
      %v2770 = vpack.c.bf16 %v2709, %v2708
      %v2771 = vpack.c.bf16 %v2711, %v2710
      %v2772 = vpack.c.bf16 %v2713, %v2712
      %v2773 = vpack.c.bf16 %v2715, %v2714
      %v2774 = vpack.c.bf16 %v2717, %v2716
      %v2775 = vpack.c.bf16 %v2719, %v2718
      %v2776 = vpack.c.bf16 %v2721, %v2720
      %v2777 = vpack.c.bf16 %v2723, %v2722
      %v2778 = vpack.c.bf16 %v2725, %v2724
      %v2779 = vpack.c.bf16 %v2727, %v2726
      %v2780 = vpack.c.bf16 %v2729, %v2728
      %v2781 = vpack.c.bf16 %v2731, %v2730
      %v2782 = vpack.c.bf16 %v2733, %v2732
      %v2783 = vpack.c.bf16 %v2735, %v2734
      %v2784 = vpack.c.bf16 %v2737, %v2736
      %v2785 = vpack.c.bf16 %v2739, %v2738
      %v2786 = vpack.c.bf16 %v2741, %v2740
      %v2787 = vpack.c.bf16 %v2743, %v2742
      %v2788 = vpack.c.bf16 %v2745, %v2744
      %v2789 = vpack.c.bf16 %v2747, %v2746
      %v2790 = vpack.c.bf16 %v2749, %v2748
      %v2791 = vpack.c.bf16 %v2751, %v2750
      %v2792 = vpack.c.bf16 %v2753, %v2752
      %v2793 = vpack.c.bf16 %v2755, %v2754
      %v2794 = vpack.c.bf16 %v2757, %v2756
      %v2795 = vpack.c.bf16 %v2759, %v2758
      %v2796 = vld [vmem:[%s5] sm:$0xf]
      %v2797 = vld [vmem:[%s5 + $0x4] sm:$0xf]
      %v2798 = vld [vmem:[%s5 + $0x8] sm:$0xf]
      %v2799 = vld [vmem:[%s5 + $0xc] sm:$0xf]
      %v2800 = vld [vmem:[%s5 + $0x10] sm:$0xf]
      %v2801 = vld [vmem:[%s5 + $0x14] sm:$0xf]
      %v2802 = vld [vmem:[%s5 + $0x18] sm:$0xf]
      %v2803 = vld [vmem:[%s5 + $0x1c] sm:$0xf]
      %s2804 = scalar_lea.vmem %s5, 32
      %v2805 = vld [vmem:[%s2804] sm:$0xf]
      %v2806 = vld [vmem:[%s2804 + $0x4] sm:$0xf]
      %v2807 = vld [vmem:[%s2804 + $0x8] sm:$0xf]
      %v2808 = vld [vmem:[%s2804 + $0xc] sm:$0xf]
      %v2809 = vld [vmem:[%s2804 + $0x10] sm:$0xf]
      %v2810 = vld [vmem:[%s2804 + $0x14] sm:$0xf]
      %v2811 = vld [vmem:[%s2804 + $0x18] sm:$0xf]
      %v2812 = vld [vmem:[%s2804 + $0x1c] sm:$0xf]
      %v2821 = vunpack.c.l.b16 %v2805
      %v2822 = vunpack.c.l.b16 %v2806
      %v2823 = vunpack.c.l.b16 %v2807
      %v2824 = vunpack.c.l.b16 %v2808
      %v2825 = vunpack.c.l.b16 %v2809
      %v2826 = vunpack.c.l.b16 %v2810
      %v2827 = vunpack.c.l.b16 %v2811
      %v2828 = vunpack.c.l.b16 %v2812
      %v2829 = vpack.c.b16 %v2822, %v2821
      %v2830 = vpack.c.b16 %v2824, %v2823
      %v2831 = vpack.c.b16 %v2826, %v2825
      %v2832 = vpack.c.b16 %v2828, %v2827
      %v2838 = vsel %vm1426, %v2769, 0
      %v2841 = vsel %vm1426, %v2770, 0
      %v2844 = vsel %vm1426, %v2771, 0
      %v2847 = vsel %vm1426, %v2772, 0
      %v2850 = vsel %vm1426, %v2773, 0
      %v2853 = vsel %vm1426, %v2774, 0
      %v2856 = vsel %vm1426, %v2775, 0
      %v2859 = vsel %vm1426, %v2776, 0
      %v2862 = vsel %vm1426, %v2777, 0
      %2864 = vmatprep.subr.bf16.mxu0 0
      %2865 = vmatpush1.bf16.msra.mxu0 %v2829
      %2866 = vmatprep.subr.bf16.mxu0 0
      %2867 = vmatpush1.bf16.msra.mxu0 %v2830
      %2868 = vmatprep.subr.bf16.mxu0 0
      %2869 = vmatpush1.bf16.msra.mxu0 %v2831
      %2870 = vmatprep.subr.bf16.mxu0 0
      %2871 = vmatpush1.bf16.msra.mxu0 %v2832
      %2872 = vmatprep.subr.bf16.mxu0 0
      %2873 = vmatpush1.bf16.msra.mxu0 0
      %2874 = vmatprep.subr.bf16.mxu0 0
      %2875 = vmatpush1.bf16.msra.mxu0 0
      %2876 = vmatprep.subr.bf16.mxu0 0
      %2877 = vmatpush1.bf16.msra.mxu0 0
      %2878 = vmatprep.subr.bf16.mxu0 0
      %2879 = vmatpush1.bf16.msra.mxu0 0
      %2880 = vmatprep.subr.bf16.mxu0 0
      %2881 = vmatpush1.bf16.msra.mxu0 0
      %2882 = vmatprep.subr.bf16.mxu0 0
      %2883 = vmatpush1.bf16.msra.mxu0 0
      %2884 = vmatprep.subr.bf16.mxu0 0
      %2885 = vmatpush1.bf16.msra.mxu0 0
      %2886 = vmatprep.subr.bf16.mxu0 0
      %2887 = vmatpush1.bf16.msra.mxu0 0
      %2888 = vmatprep.subr.bf16.mxu0 0
      %2889 = vmatpush1.bf16.msra.mxu0 0
      %2890 = vmatprep.subr.bf16.mxu0 0
      %2891 = vmatpush1.bf16.msra.mxu0 0
      %2892 = vmatprep.subr.bf16.mxu0 0
      %2893 = vmatpush1.bf16.msra.mxu0 0
      %2894 = vmatprep.subr.bf16.mxu0 0
      %2895 = vmatpush1.bf16.msra.mxu0 0
      %2896 = vmatprep.mubr.bf16.mxu0 0
      %2897 = vmatmul.mubr.bf16.gmra.mrb[0].mxu0 %v2838
      %v2898 = vpop.f32.mrb[0].mxu0
      %v2899 = vadd.f32 0.0, %v2898
      %v2900 = vpop.f32.mrb[0].mxu0
      %v2901 = vpop.f32.mrb[0].mxu0
      %v2902 = vadd.f32 0.0, %v2901
      %v2903 = vpop.f32.mrb[0].mxu0
      %2904 = vmatprep.mubr.bf16.mxu0 0
      %2905 = vmatmul.mubr.bf16.gmra.mrb[0].mxu0 %v2841
      %v2906 = vpop.f32.mrb[0].mxu0
      %v2907 = vadd.f32 0.0, %v2906
      %v2908 = vpop.f32.mrb[0].mxu0
      %v2909 = vpop.f32.mrb[0].mxu0
      %v2910 = vadd.f32 0.0, %v2909
      %v2911 = vpop.f32.mrb[0].mxu0
      %2912 = vmatprep.mubr.bf16.mxu0 0
      %2913 = vmatmul.mubr.bf16.gmra.mrb[0].mxu0 %v2844
      %v2914 = vpop.f32.mrb[0].mxu0
      %v2915 = vadd.f32 0.0, %v2914
      %v2916 = vpop.f32.mrb[0].mxu0
      %v2917 = vpop.f32.mrb[0].mxu0
      %v2918 = vadd.f32 0.0, %v2917
      %v2919 = vpop.f32.mrb[0].mxu0
      %2920 = vmatprep.mubr.bf16.mxu0 0
      %2921 = vmatmul.mubr.bf16.gmra.mrb[0].mxu0 %v2847
      %v2922 = vpop.f32.mrb[0].mxu0
      %v2923 = vadd.f32 0.0, %v2922
      %v2924 = vpop.f32.mrb[0].mxu0
      %v2925 = vpop.f32.mrb[0].mxu0
      %v2926 = vadd.f32 0.0, %v2925
      %v2927 = vpop.f32.mrb[0].mxu0
      %2928 = vmatprep.mubr.bf16.mxu0 0
      %2929 = vmatmul.mubr.bf16.gmra.mrb[0].mxu0 %v2850
      %v2930 = vpop.f32.mrb[0].mxu0
      %v2931 = vadd.f32 0.0, %v2930
      %v2932 = vpop.f32.mrb[0].mxu0
      %v2933 = vpop.f32.mrb[0].mxu0
      %v2934 = vadd.f32 0.0, %v2933
      %v2935 = vpop.f32.mrb[0].mxu0
      %2936 = vmatprep.mubr.bf16.mxu0 0
      %2937 = vmatmul.mubr.bf16.gmra.mrb[0].mxu0 %v2853
      %v2938 = vpop.f32.mrb[0].mxu0
      %v2939 = vadd.f32 0.0, %v2938
      %v2940 = vpop.f32.mrb[0].mxu0
      %v2941 = vpop.f32.mrb[0].mxu0
      %v2942 = vadd.f32 0.0, %v2941
      %v2943 = vpop.f32.mrb[0].mxu0
      %2944 = vmatprep.mubr.bf16.mxu0 0
      %2945 = vmatmul.mubr.bf16.gmra.mrb[0].mxu0 %v2856
      %v2946 = vpop.f32.mrb[0].mxu0
      %v2947 = vadd.f32 0.0, %v2946
      %v2948 = vpop.f32.mrb[0].mxu0
      %v2949 = vpop.f32.mrb[0].mxu0
      %v2950 = vadd.f32 0.0, %v2949
      %v2951 = vpop.f32.mrb[0].mxu0
      %2952 = vmatprep.mubr.bf16.mxu0 0
      %2953 = vmatmul.mubr.bf16.gmra.mrb[0].mxu0 %v2859
      %v2954 = vpop.f32.mrb[0].mxu0
      %v2955 = vadd.f32 0.0, %v2954
      %v2956 = vpop.f32.mrb[0].mxu0
      %v2957 = vpop.f32.mrb[0].mxu0
      %v2958 = vadd.f32 0.0, %v2957
      %v2959 = vpop.f32.mrb[0].mxu0
      %2960 = vmatprep.mubr.bf16.mxu0 0
      %2961 = vmatmul.mubr.bf16.gmra.mrb[0].mxu0 %v2862
      %v2962 = vpop.f32.mrb[0].mxu0
      %v2963 = vadd.f32 0.0, %v2962
      %v2964 = vpop.f32.mrb[0].mxu0
      %v2965 = vpop.f32.mrb[0].mxu0
      %v2966 = vadd.f32 0.0, %v2965
      %v2967 = vpop.f32.mrb[0].mxu0
      %2968 = vdwg.mxu0
      %v2977 = vunpack.c.l.b16 %v2796
      %v2978 = vunpack.c.l.b16 %v2797
      %v2979 = vunpack.c.l.b16 %v2798
      %v2980 = vunpack.c.l.b16 %v2799
      %v2981 = vunpack.c.l.b16 %v2800
      %v2982 = vunpack.c.l.b16 %v2801
      %v2983 = vunpack.c.l.b16 %v2802
      %v2984 = vunpack.c.l.b16 %v2803
      %v2985 = vpack.c.b16 %v2978, %v2977
      %v2986 = vpack.c.b16 %v2980, %v2979
      %v2987 = vpack.c.b16 %v2982, %v2981
      %v2988 = vpack.c.b16 %v2984, %v2983
      %v2994 = vsel %vm1426, %v2760, 0
      %v2997 = vsel %vm1426, %v2761, 0
      %v3000 = vsel %vm1426, %v2762, 0
      %v3003 = vsel %vm1426, %v2763, 0
      %v3006 = vsel %vm1426, %v2764, 0
      %v3009 = vsel %vm1426, %v2765, 0
      %v3012 = vsel %vm1426, %v2766, 0
      %v3015 = vsel %vm1426, %v2767, 0
      %v3018 = vsel %vm1426, %v2768, 0
      %3020 = vmatprep.subr.bf16.mxu0 0
      %3021 = vmatpush1.bf16.msra.mxu0 %v2985
      %3022 = vmatprep.subr.bf16.mxu0 0
      %3023 = vmatpush1.bf16.msra.mxu0 %v2986
      %3024 = vmatprep.subr.bf16.mxu0 0
      %3025 = vmatpush1.bf16.msra.mxu0 %v2987
      %3026 = vmatprep.subr.bf16.mxu0 0
      %3027 = vmatpush1.bf16.msra.mxu0 %v2988
      %3028 = vmatprep.subr.bf16.mxu0 0
      %3029 = vmatpush1.bf16.msra.mxu0 0
      %3030 = vmatprep.subr.bf16.mxu0 0
      %3031 = vmatpush1.bf16.msra.mxu0 0
      %3032 = vmatprep.subr.bf16.mxu0 0
      %3033 = vmatpush1.bf16.msra.mxu0 0
      %3034 = vmatprep.subr.bf16.mxu0 0
      %3035 = vmatpush1.bf16.msra.mxu0 0
      %3036 = vmatprep.subr.bf16.mxu0 0
      %3037 = vmatpush1.bf16.msra.mxu0 0
      %3038 = vmatprep.subr.bf16.mxu0 0
      %3039 = vmatpush1.bf16.msra.mxu0 0
      %3040 = vmatprep.subr.bf16.mxu0 0
      %3041 = vmatpush1.bf16.msra.mxu0 0
      %3042 = vmatprep.subr.bf16.mxu0 0
      %3043 = vmatpush1.bf16.msra.mxu0 0
      %3044 = vmatprep.subr.bf16.mxu0 0
      %3045 = vmatpush1.bf16.msra.mxu0 0
      %3046 = vmatprep.subr.bf16.mxu0 0
      %3047 = vmatpush1.bf16.msra.mxu0 0
      %3048 = vmatprep.subr.bf16.mxu0 0
      %3049 = vmatpush1.bf16.msra.mxu0 0
      %3050 = vmatprep.subr.bf16.mxu0 0
      %3051 = vmatpush1.bf16.msra.mxu0 0
      %3052 = vmatprep.mubr.bf16.mxu0 0
      %3053 = vmatmul.mubr.bf16.gmra.mrb[0].mxu0 %v2994
      %v3054 = vpop.f32.mrb[0].mxu0
      %v3055 = vadd.f32 %v2899, %v3054
      %v3056 = vpop.f32.mrb[0].mxu0
      %v3057 = vpop.f32.mrb[0].mxu0
      %v3058 = vadd.f32 %v2902, %v3057
      %v3059 = vpop.f32.mrb[0].mxu0
      %3060 = vmatprep.mubr.bf16.mxu0 0
      %3061 = vmatmul.mubr.bf16.gmra.mrb[0].mxu0 %v2997
      %v3062 = vpop.f32.mrb[0].mxu0
      %v3063 = vadd.f32 %v2907, %v3062
      %v3064 = vpop.f32.mrb[0].mxu0
      %v3065 = vpop.f32.mrb[0].mxu0
      %v3066 = vadd.f32 %v2910, %v3065
      %v3067 = vpop.f32.mrb[0].mxu0
      %3068 = vmatprep.mubr.bf16.mxu0 0
      %3069 = vmatmul.mubr.bf16.gmra.mrb[0].mxu0 %v3000
      %v3070 = vpop.f32.mrb[0].mxu0
      %v3071 = vadd.f32 %v2915, %v3070
      %v3072 = vpop.f32.mrb[0].mxu0
      %v3073 = vpop.f32.mrb[0].mxu0
      %v3074 = vadd.f32 %v2918, %v3073
      %v3075 = vpop.f32.mrb[0].mxu0
      %3076 = vmatprep.mubr.bf16.mxu0 0
      %3077 = vmatmul.mubr.bf16.gmra.mrb[0].mxu0 %v3003
      %v3078 = vpop.f32.mrb[0].mxu0
      %v3079 = vadd.f32 %v2923, %v3078
      %v3080 = vpop.f32.mrb[0].mxu0
      %v3081 = vpop.f32.mrb[0].mxu0
      %v3082 = vadd.f32 %v2926, %v3081
      %v3083 = vpop.f32.mrb[0].mxu0
      %3084 = vmatprep.mubr.bf16.mxu0 0
      %3085 = vmatmul.mubr.bf16.gmra.mrb[0].mxu0 %v3006
      %v3086 = vpop.f32.mrb[0].mxu0
      %v3087 = vadd.f32 %v2931, %v3086
      %v3088 = vpop.f32.mrb[0].mxu0
      %v3089 = vpop.f32.mrb[0].mxu0
      %v3090 = vadd.f32 %v2934, %v3089
      %v3091 = vpop.f32.mrb[0].mxu0
      %3092 = vmatprep.mubr.bf16.mxu0 0
      %3093 = vmatmul.mubr.bf16.gmra.mrb[0].mxu0 %v3009
      %v3094 = vpop.f32.mrb[0].mxu0
      %v3095 = vadd.f32 %v2939, %v3094
      %v3096 = vpop.f32.mrb[0].mxu0
      %v3097 = vpop.f32.mrb[0].mxu0
      %v3098 = vadd.f32 %v2942, %v3097
      %v3099 = vpop.f32.mrb[0].mxu0
      %3100 = vmatprep.mubr.bf16.mxu0 0
      %3101 = vmatmul.mubr.bf16.gmra.mrb[0].mxu0 %v3012
      %v3102 = vpop.f32.mrb[0].mxu0
      %v3103 = vadd.f32 %v2947, %v3102
      %v3104 = vpop.f32.mrb[0].mxu0
      %v3105 = vpop.f32.mrb[0].mxu0
      %v3106 = vadd.f32 %v2950, %v3105
      %v3107 = vpop.f32.mrb[0].mxu0
      %3108 = vmatprep.mubr.bf16.mxu0 0
      %3109 = vmatmul.mubr.bf16.gmra.mrb[0].mxu0 %v3015
      %v3110 = vpop.f32.mrb[0].mxu0
      %v3111 = vadd.f32 %v2955, %v3110
      %v3112 = vpop.f32.mrb[0].mxu0
      %v3113 = vpop.f32.mrb[0].mxu0
      %v3114 = vadd.f32 %v2958, %v3113
      %v3115 = vpop.f32.mrb[0].mxu0
      %3116 = vmatprep.mubr.bf16.mxu0 0
      %3117 = vmatmul.mubr.bf16.gmra.mrb[0].mxu0 %v3018
      %v3118 = vpop.f32.mrb[0].mxu0
      %v3119 = vadd.f32 %v2963, %v3118
      %v3120 = vpop.f32.mrb[0].mxu0
      %v3121 = vpop.f32.mrb[0].mxu0
      %v3122 = vadd.f32 %v2966, %v3121
      %v3123 = vpop.f32.mrb[0].mxu0
      %3124 = vdwg.mxu0
      %s3125 = scalar_lea.vmem %s5, 64
      %v3126 = vld [vmem:[%s3125] sm:$0xf]
      %v3127 = vld [vmem:[%s3125 + $0x4] sm:$0xf]
      %v3128 = vld [vmem:[%s3125 + $0x8] sm:$0xf]
      %v3129 = vld [vmem:[%s3125 + $0xc] sm:$0xf]
      %v3130 = vld [vmem:[%s3125 + $0x10] sm:$0xf]
      %v3131 = vld [vmem:[%s3125 + $0x14] sm:$0xf]
      %v3132 = vld [vmem:[%s3125 + $0x18] sm:$0xf]
      %v3133 = vld [vmem:[%s3125 + $0x1c] sm:$0xf]
      %v3142 = vunpack.c.l.b16 %v3126
      %v3143 = vunpack.c.l.b16 %v3127
      %v3144 = vunpack.c.l.b16 %v3128
      %v3145 = vunpack.c.l.b16 %v3129
      %v3146 = vunpack.c.l.b16 %v3130
      %v3147 = vunpack.c.l.b16 %v3131
      %v3148 = vunpack.c.l.b16 %v3132
      %v3149 = vunpack.c.l.b16 %v3133
      %v3150 = vpack.c.b16 %v3143, %v3142
      %v3151 = vpack.c.b16 %v3145, %v3144
      %v3152 = vpack.c.b16 %v3147, %v3146
      %v3153 = vpack.c.b16 %v3149, %v3148
      %v3159 = vsel %vm1426, %v2778, 0
      %v3162 = vsel %vm1426, %v2779, 0
      %v3165 = vsel %vm1426, %v2780, 0
      %v3168 = vsel %vm1426, %v2781, 0
      %v3171 = vsel %vm1426, %v2782, 0
      %v3174 = vsel %vm1426, %v2783, 0
      %v3177 = vsel %vm1426, %v2784, 0
      %v3180 = vsel %vm1426, %v2785, 0
      %v3183 = vsel %vm1426, %v2786, 0
      %3185 = vmatprep.subr.bf16.mxu0 0
      %3186 = vmatpush1.bf16.msra.mxu0 %v3150
      %3187 = vmatprep.subr.bf16.mxu0 0
      %3188 = vmatpush1.bf16.msra.mxu0 %v3151
      %3189 = vmatprep.subr.bf16.mxu0 0
      %3190 = vmatpush1.bf16.msra.mxu0 %v3152
      %3191 = vmatprep.subr.bf16.mxu0 0
      %3192 = vmatpush1.bf16.msra.mxu0 %v3153
      %3193 = vmatprep.subr.bf16.mxu0 0
      %3194 = vmatpush1.bf16.msra.mxu0 0
      %3195 = vmatprep.subr.bf16.mxu0 0
      %3196 = vmatpush1.bf16.msra.mxu0 0
      %3197 = vmatprep.subr.bf16.mxu0 0
      %3198 = vmatpush1.bf16.msra.mxu0 0
      %3199 = vmatprep.subr.bf16.mxu0 0
      %3200 = vmatpush1.bf16.msra.mxu0 0
      %3201 = vmatprep.subr.bf16.mxu0 0
      %3202 = vmatpush1.bf16.msra.mxu0 0
      %3203 = vmatprep.subr.bf16.mxu0 0
      %3204 = vmatpush1.bf16.msra.mxu0 0
      %3205 = vmatprep.subr.bf16.mxu0 0
      %3206 = vmatpush1.bf16.msra.mxu0 0
      %3207 = vmatprep.subr.bf16.mxu0 0
      %3208 = vmatpush1.bf16.msra.mxu0 0
      %3209 = vmatprep.subr.bf16.mxu0 0
      %3210 = vmatpush1.bf16.msra.mxu0 0
      %3211 = vmatprep.subr.bf16.mxu0 0
      %3212 = vmatpush1.bf16.msra.mxu0 0
      %3213 = vmatprep.subr.bf16.mxu0 0
      %3214 = vmatpush1.bf16.msra.mxu0 0
      %3215 = vmatprep.subr.bf16.mxu0 0
      %3216 = vmatpush1.bf16.msra.mxu0 0
      %3217 = vmatprep.mubr.bf16.mxu0 0
      %3218 = vmatmul.mubr.bf16.gmra.mrb[0].mxu0 %v3159
      %v3219 = vpop.f32.mrb[0].mxu0
      %v3220 = vadd.f32 0.0, %v3219
      %v3221 = vpop.f32.mrb[0].mxu0
      %v3222 = vpop.f32.mrb[0].mxu0
      %v3223 = vadd.f32 0.0, %v3222
      %v3224 = vpop.f32.mrb[0].mxu0
      %3225 = vmatprep.mubr.bf16.mxu0 0
      %3226 = vmatmul.mubr.bf16.gmra.mrb[0].mxu0 %v3162
      %v3227 = vpop.f32.mrb[0].mxu0
      %v3228 = vadd.f32 0.0, %v3227
      %v3229 = vpop.f32.mrb[0].mxu0
      %v3230 = vpop.f32.mrb[0].mxu0
      %v3231 = vadd.f32 0.0, %v3230
      %v3232 = vpop.f32.mrb[0].mxu0
      %3233 = vmatprep.mubr.bf16.mxu0 0
      %3234 = vmatmul.mubr.bf16.gmra.mrb[0].mxu0 %v3165
      %v3235 = vpop.f32.mrb[0].mxu0
      %v3236 = vadd.f32 0.0, %v3235
      %v3237 = vpop.f32.mrb[0].mxu0
      %v3238 = vpop.f32.mrb[0].mxu0
      %v3239 = vadd.f32 0.0, %v3238
      %v3240 = vpop.f32.mrb[0].mxu0
      %3241 = vmatprep.mubr.bf16.mxu0 0
      %3242 = vmatmul.mubr.bf16.gmra.mrb[0].mxu0 %v3168
      %v3243 = vpop.f32.mrb[0].mxu0
      %v3244 = vadd.f32 0.0, %v3243
      %v3245 = vpop.f32.mrb[0].mxu0
      %v3246 = vpop.f32.mrb[0].mxu0
      %v3247 = vadd.f32 0.0, %v3246
      %v3248 = vpop.f32.mrb[0].mxu0
      %3249 = vmatprep.mubr.bf16.mxu0 0
      %3250 = vmatmul.mubr.bf16.gmra.mrb[0].mxu0 %v3171
      %v3251 = vpop.f32.mrb[0].mxu0
      %v3252 = vadd.f32 0.0, %v3251
      %v3253 = vpop.f32.mrb[0].mxu0
      %v3254 = vpop.f32.mrb[0].mxu0
      %v3255 = vadd.f32 0.0, %v3254
      %v3256 = vpop.f32.mrb[0].mxu0
      %3257 = vmatprep.mubr.bf16.mxu0 0
      %3258 = vmatmul.mubr.bf16.gmra.mrb[0].mxu0 %v3174
      %v3259 = vpop.f32.mrb[0].mxu0
      %v3260 = vadd.f32 0.0, %v3259
      %v3261 = vpop.f32.mrb[0].mxu0
      %v3262 = vpop.f32.mrb[0].mxu0
      %v3263 = vadd.f32 0.0, %v3262
      %v3264 = vpop.f32.mrb[0].mxu0
      %3265 = vmatprep.mubr.bf16.mxu0 0
      %3266 = vmatmul.mubr.bf16.gmra.mrb[0].mxu0 %v3177
      %v3267 = vpop.f32.mrb[0].mxu0
      %v3268 = vadd.f32 0.0, %v3267
      %v3269 = vpop.f32.mrb[0].mxu0
      %v3270 = vpop.f32.mrb[0].mxu0
      %v3271 = vadd.f32 0.0, %v3270
      %v3272 = vpop.f32.mrb[0].mxu0
      %3273 = vmatprep.mubr.bf16.mxu0 0
      %3274 = vmatmul.mubr.bf16.gmra.mrb[0].mxu0 %v3180
      %v3275 = vpop.f32.mrb[0].mxu0
      %v3276 = vadd.f32 0.0, %v3275
      %v3277 = vpop.f32.mrb[0].mxu0
      %v3278 = vpop.f32.mrb[0].mxu0
      %v3279 = vadd.f32 0.0, %v3278
      %v3280 = vpop.f32.mrb[0].mxu0
      %3281 = vmatprep.mubr.bf16.mxu0 0
      %3282 = vmatmul.mubr.bf16.gmra.mrb[0].mxu0 %v3183
      %v3283 = vpop.f32.mrb[0].mxu0
      %v3284 = vadd.f32 0.0, %v3283
      %v3285 = vpop.f32.mrb[0].mxu0
      %v3286 = vpop.f32.mrb[0].mxu0
      %v3287 = vadd.f32 0.0, %v3286
      %v3288 = vpop.f32.mrb[0].mxu0
      %3289 = vdwg.mxu0
      %v3290 = vadd.f32 %v3055, %v3220
      %v3291 = vadd.f32 %v3058, %v3223
      %v3292 = vadd.f32 %v3063, %v3228
      %v3293 = vadd.f32 %v3066, %v3231
      %v3294 = vadd.f32 %v3071, %v3236
      %v3295 = vadd.f32 %v3074, %v3239
      %v3296 = vadd.f32 %v3079, %v3244
      %v3297 = vadd.f32 %v3082, %v3247
      %v3298 = vadd.f32 %v3087, %v3252
      %v3299 = vadd.f32 %v3090, %v3255
      %v3300 = vadd.f32 %v3095, %v3260
      %v3301 = vadd.f32 %v3098, %v3263
      %v3302 = vadd.f32 %v3103, %v3268
      %v3303 = vadd.f32 %v3106, %v3271
      %v3304 = vadd.f32 %v3111, %v3276
      %v3305 = vadd.f32 %v3114, %v3279
      %v3306 = vadd.f32 %v3119, %v3284
      %v3307 = vadd.f32 %v3122, %v3287
      %s3308 = scalar_lea.vmem %s5, 96
      %v3309 = vld [vmem:[%s3308] sm:$0xf]
      %v3310 = vld [vmem:[%s3308 + $0x4] sm:$0xf]
      %v3311 = vld [vmem:[%s3308 + $0x8] sm:$0xf]
      %v3312 = vld [vmem:[%s3308 + $0xc] sm:$0xf]
      %v3313 = vld [vmem:[%s3308 + $0x10] sm:$0xf]
      %v3314 = vld [vmem:[%s3308 + $0x14] sm:$0xf]
      %v3315 = vld [vmem:[%s3308 + $0x18] sm:$0xf]
      %v3316 = vld [vmem:[%s3308 + $0x1c] sm:$0xf]
      %v3325 = vunpack.c.l.b16 %v3309
      %v3326 = vunpack.c.l.b16 %v3310
      %v3327 = vunpack.c.l.b16 %v3311
      %v3328 = vunpack.c.l.b16 %v3312
      %v3329 = vunpack.c.l.b16 %v3313
      %v3330 = vunpack.c.l.b16 %v3314
      %v3331 = vunpack.c.l.b16 %v3315
      %v3332 = vunpack.c.l.b16 %v3316
      %v3333 = vpack.c.b16 %v3326, %v3325
      %v3334 = vpack.c.b16 %v3328, %v3327
      %v3335 = vpack.c.b16 %v3330, %v3329
      %v3336 = vpack.c.b16 %v3332, %v3331
      %v3342 = vsel %vm1426, %v2787, 0
      %v3345 = vsel %vm1426, %v2788, 0
      %v3348 = vsel %vm1426, %v2789, 0
      %v3351 = vsel %vm1426, %v2790, 0
      %v3354 = vsel %vm1426, %v2791, 0
      %v3357 = vsel %vm1426, %v2792, 0
      %v3360 = vsel %vm1426, %v2793, 0
      %v3363 = vsel %vm1426, %v2794, 0
      %v3366 = vsel %vm1426, %v2795, 0
      %3368 = vmatprep.subr.bf16.mxu0 0
      %3369 = vmatpush1.bf16.msra.mxu0 %v3333
      %3370 = vmatprep.subr.bf16.mxu0 0
      %3371 = vmatpush1.bf16.msra.mxu0 %v3334
      %3372 = vmatprep.subr.bf16.mxu0 0
      %3373 = vmatpush1.bf16.msra.mxu0 %v3335
      %3374 = vmatprep.subr.bf16.mxu0 0
      %3375 = vmatpush1.bf16.msra.mxu0 %v3336
      %3376 = vmatprep.subr.bf16.mxu0 0
      %3377 = vmatpush1.bf16.msra.mxu0 0
      %3378 = vmatprep.subr.bf16.mxu0 0
      %3379 = vmatpush1.bf16.msra.mxu0 0
      %3380 = vmatprep.subr.bf16.mxu0 0
      %3381 = vmatpush1.bf16.msra.mxu0 0
      %3382 = vmatprep.subr.bf16.mxu0 0
      %3383 = vmatpush1.bf16.msra.mxu0 0
      %3384 = vmatprep.subr.bf16.mxu0 0
      %3385 = vmatpush1.bf16.msra.mxu0 0
      %3386 = vmatprep.subr.bf16.mxu0 0
      %3387 = vmatpush1.bf16.msra.mxu0 0
      %3388 = vmatprep.subr.bf16.mxu0 0
      %3389 = vmatpush1.bf16.msra.mxu0 0
      %3390 = vmatprep.subr.bf16.mxu0 0
      %3391 = vmatpush1.bf16.msra.mxu0 0
      %3392 = vmatprep.subr.bf16.mxu0 0
      %3393 = vmatpush1.bf16.msra.mxu0 0
      %3394 = vmatprep.subr.bf16.mxu0 0
      %3395 = vmatpush1.bf16.msra.mxu0 0
      %3396 = vmatprep.subr.bf16.mxu0 0
      %3397 = vmatpush1.bf16.msra.mxu0 0
      %3398 = vmatprep.subr.bf16.mxu0 0
      %3399 = vmatpush1.bf16.msra.mxu0 0
      %3400 = vmatprep.mubr.bf16.mxu0 0
      %3401 = vmatmul.mubr.bf16.gmra.mrb[0].mxu0 %v3342
      %v3402 = vpop.f32.mrb[0].mxu0
      %v3403 = vadd.f32 0.0, %v3402
      %v3404 = vpop.f32.mrb[0].mxu0
      %v3405 = vpop.f32.mrb[0].mxu0
      %v3406 = vadd.f32 0.0, %v3405
      %v3407 = vpop.f32.mrb[0].mxu0
      %3408 = vmatprep.mubr.bf16.mxu0 0
      %3409 = vmatmul.mubr.bf16.gmra.mrb[0].mxu0 %v3345
      %v3410 = vpop.f32.mrb[0].mxu0
      %v3411 = vadd.f32 0.0, %v3410
      %v3412 = vpop.f32.mrb[0].mxu0
      %v3413 = vpop.f32.mrb[0].mxu0
      %v3414 = vadd.f32 0.0, %v3413
      %v3415 = vpop.f32.mrb[0].mxu0
      %3416 = vmatprep.mubr.bf16.mxu0 0
      %3417 = vmatmul.mubr.bf16.gmra.mrb[0].mxu0 %v3348
      %v3418 = vpop.f32.mrb[0].mxu0
      %v3419 = vadd.f32 0.0, %v3418
      %v3420 = vpop.f32.mrb[0].mxu0
      %v3421 = vpop.f32.mrb[0].mxu0
      %v3422 = vadd.f32 0.0, %v3421
      %v3423 = vpop.f32.mrb[0].mxu0
      %3424 = vmatprep.mubr.bf16.mxu0 0
      %3425 = vmatmul.mubr.bf16.gmra.mrb[0].mxu0 %v3351
      %v3426 = vpop.f32.mrb[0].mxu0
      %v3427 = vadd.f32 0.0, %v3426
      %v3428 = vpop.f32.mrb[0].mxu0
      %v3429 = vpop.f32.mrb[0].mxu0
      %v3430 = vadd.f32 0.0, %v3429
      %v3431 = vpop.f32.mrb[0].mxu0
      %3432 = vmatprep.mubr.bf16.mxu0 0
      %3433 = vmatmul.mubr.bf16.gmra.mrb[0].mxu0 %v3354
      %v3434 = vpop.f32.mrb[0].mxu0
      %v3435 = vadd.f32 0.0, %v3434
      %v3436 = vpop.f32.mrb[0].mxu0
      %v3437 = vpop.f32.mrb[0].mxu0
      %v3438 = vadd.f32 0.0, %v3437
      %v3439 = vpop.f32.mrb[0].mxu0
      %3440 = vmatprep.mubr.bf16.mxu0 0
      %3441 = vmatmul.mubr.bf16.gmra.mrb[0].mxu0 %v3357
      %v3442 = vpop.f32.mrb[0].mxu0
      %v3443 = vadd.f32 0.0, %v3442
      %v3444 = vpop.f32.mrb[0].mxu0
      %v3445 = vpop.f32.mrb[0].mxu0
      %v3446 = vadd.f32 0.0, %v3445
      %v3447 = vpop.f32.mrb[0].mxu0
      %3448 = vmatprep.mubr.bf16.mxu0 0
      %3449 = vmatmul.mubr.bf16.gmra.mrb[0].mxu0 %v3360
      %v3450 = vpop.f32.mrb[0].mxu0
      %v3451 = vadd.f32 0.0, %v3450
      %v3452 = vpop.f32.mrb[0].mxu0
      %v3453 = vpop.f32.mrb[0].mxu0
      %v3454 = vadd.f32 0.0, %v3453
      %v3455 = vpop.f32.mrb[0].mxu0
      %3456 = vmatprep.mubr.bf16.mxu0 0
      %3457 = vmatmul.mubr.bf16.gmra.mrb[0].mxu0 %v3363
      %v3458 = vpop.f32.mrb[0].mxu0
      %v3459 = vadd.f32 0.0, %v3458
      %v3460 = vpop.f32.mrb[0].mxu0
      %v3461 = vpop.f32.mrb[0].mxu0
      %v3462 = vadd.f32 0.0, %v3461
      %v3463 = vpop.f32.mrb[0].mxu0
      %3464 = vmatprep.mubr.bf16.mxu0 0
      %3465 = vmatmul.mubr.bf16.gmra.mrb[0].mxu0 %v3366
      %v3466 = vpop.f32.mrb[0].mxu0
      %v3467 = vadd.f32 0.0, %v3466
      %v3468 = vpop.f32.mrb[0].mxu0
      %v3469 = vpop.f32.mrb[0].mxu0
      %v3470 = vadd.f32 0.0, %v3469
      %v3471 = vpop.f32.mrb[0].mxu0
      %3472 = vdwg.mxu0
      %v3473 = vadd.f32 %v3290, %v3403
      %v3474 = vadd.f32 %v3291, %v3406
      %v3475 = vadd.f32 %v3292, %v3411
      %v3476 = vadd.f32 %v3293, %v3414
      %v3477 = vadd.f32 %v3294, %v3419
      %v3478 = vadd.f32 %v3295, %v3422
      %v3479 = vadd.f32 %v3296, %v3427
      %v3480 = vadd.f32 %v3297, %v3430
      %v3481 = vadd.f32 %v3298, %v3435
      %v3482 = vadd.f32 %v3299, %v3438
      %v3483 = vadd.f32 %v3300, %v3443
      %v3484 = vadd.f32 %v3301, %v3446
      %v3485 = vadd.f32 %v3302, %v3451
      %v3486 = vadd.f32 %v3303, %v3454
      %v3487 = vadd.f32 %v3304, %v3459
      %v3488 = vadd.f32 %v3305, %v3462
      %v3489 = vadd.f32 %v3306, %v3467
      %v3490 = vadd.f32 %v3307, %v3470
      %v3491 = vld [vmem:[%s6] sm:$0x1]
      %v3493 = vlaneseq
      %v3494 = vshrl.u32 %v3493, 7
      %v3495 = vsub.s32 0, %v3494
      %v3496 = vrot.slane %v3491, %v3495
      %v3498 = vadd.f32 %v3473, %v3496
      %v3499 = vadd.f32 %v3474, %v3496
      %v3500 = vadd.f32 %v3475, %v3496
      %v3501 = vadd.f32 %v3476, %v3496
      %v3502 = vadd.f32 %v3477, %v3496
      %v3503 = vadd.f32 %v3478, %v3496
      %v3504 = vadd.f32 %v3479, %v3496
      %v3505 = vadd.f32 %v3480, %v3496
      %v3506 = vadd.f32 %v3481, %v3496
      %v3507 = vadd.f32 %v3482, %v3496
      %v3508 = vadd.f32 %v3483, %v3496
      %v3509 = vadd.f32 %v3484, %v3496
      %v3510 = vadd.f32 %v3485, %v3496
      %v3511 = vadd.f32 %v3486, %v3496
      %v3512 = vadd.f32 %v3487, %v3496
      %v3513 = vadd.f32 %v3488, %v3496
      %v3514 = vadd.f32 %v3489, %v3496
      %v3515 = vadd.f32 %v3490, %v3496
      %vm3516 = vcmp.gt.f32.partialorder %v3498, 0.0
      %vm3517 = vcmp.gt.f32.partialorder %v3499, 0.0
      %vm3518 = vcmp.gt.f32.partialorder %v3500, 0.0
      %vm3519 = vcmp.gt.f32.partialorder %v3501, 0.0
      %vm3520 = vcmp.gt.f32.partialorder %v3502, 0.0
      %vm3521 = vcmp.gt.f32.partialorder %v3503, 0.0
      %vm3522 = vcmp.gt.f32.partialorder %v3504, 0.0
      %vm3523 = vcmp.gt.f32.partialorder %v3505, 0.0
      %vm3524 = vcmp.gt.f32.partialorder %v3506, 0.0
      %vm3525 = vcmp.gt.f32.partialorder %v3507, 0.0
      %vm3526 = vcmp.gt.f32.partialorder %v3508, 0.0
      %vm3527 = vcmp.gt.f32.partialorder %v3509, 0.0
      %vm3528 = vcmp.gt.f32.partialorder %v3510, 0.0
      %vm3529 = vcmp.gt.f32.partialorder %v3511, 0.0
      %vm3530 = vcmp.gt.f32.partialorder %v3512, 0.0
      %vm3531 = vcmp.gt.f32.partialorder %v3513, 0.0
      %vm3532 = vcmp.gt.f32.partialorder %v3514, 0.0
      %vm3533 = vcmp.gt.f32.partialorder %v3515, 0.0
      %v3534 = vmul.f32 %v3498, 0.01
      %v3535 = vmul.f32 %v3499, 0.01
      %v3536 = vmul.f32 %v3500, 0.01
      %v3537 = vmul.f32 %v3501, 0.01
      %v3538 = vmul.f32 %v3502, 0.01
      %v3539 = vmul.f32 %v3503, 0.01
      %v3540 = vmul.f32 %v3504, 0.01
      %v3541 = vmul.f32 %v3505, 0.01
      %v3542 = vmul.f32 %v3506, 0.01
      %v3543 = vmul.f32 %v3507, 0.01
      %v3544 = vmul.f32 %v3508, 0.01
      %v3545 = vmul.f32 %v3509, 0.01
      %v3546 = vmul.f32 %v3510, 0.01
      %v3547 = vmul.f32 %v3511, 0.01
      %v3548 = vmul.f32 %v3512, 0.01
      %v3549 = vmul.f32 %v3513, 0.01
      %v3550 = vmul.f32 %v3514, 0.01
      %v3551 = vmul.f32 %v3515, 0.01
      %v3552 = vsel %vm3516, %v3498, %v3534
      %v3553 = vsel %vm3517, %v3499, %v3535
      %v3554 = vsel %vm3518, %v3500, %v3536
      %v3555 = vsel %vm3519, %v3501, %v3537
      %v3556 = vsel %vm3520, %v3502, %v3538
      %v3557 = vsel %vm3521, %v3503, %v3539
      %v3558 = vsel %vm3522, %v3504, %v3540
      %v3559 = vsel %vm3523, %v3505, %v3541
      %v3560 = vsel %vm3524, %v3506, %v3542
      %v3561 = vsel %vm3525, %v3507, %v3543
      %v3562 = vsel %vm3526, %v3508, %v3544
      %v3563 = vsel %vm3527, %v3509, %v3545
      %v3564 = vsel %vm3528, %v3510, %v3546
      %v3565 = vsel %vm3529, %v3511, %v3547
      %v3566 = vsel %vm3530, %v3512, %v3548
      %v3567 = vsel %vm3531, %v3513, %v3549
      %v3568 = vsel %vm3532, %v3514, %v3550
      %v3569 = vsel %vm3533, %v3515, %v3551
      %v3570 = vadd.f32 %v3552, %v3553
      %v3571 = vadd.f32 %v3570, %v3554
      %v3572 = vadd.f32 %v3571, %v3555
      %v3573 = vadd.f32 %v3572, %v3556
      %v3574 = vadd.f32 %v3573, %v3557
      %v3575 = vadd.f32 %v3574, %v3558
      %v3576 = vadd.f32 %v3575, %v3559
      %v3577 = vadd.f32 %v3576, %v3560
      %v3578 = vadd.f32 %v3577, %v3561
      %v3579 = vadd.f32 %v3578, %v3562
      %v3580 = vadd.f32 %v3579, %v3563
      %v3581 = vadd.f32 %v3580, %v3564
      %v3582 = vadd.f32 %v3581, %v3565
      %v3583 = vadd.f32 %v3582, %v3566
      %v3584 = vadd.f32 %v3583, %v3567
      %v3585 = vadd.f32 %v3584, %v3568
      %v3586 = vadd.f32 %v3585, %v3569
      %v3587 = vrot.slane %v3586, 4
      %v3588 = vadd.f32 %v3586, %v3587
      %v3589 = vrot.slane %v3588, 2
      %v3590 = vadd.f32 %v3588, %v3589
      %v3591 = vrot.slane %v3590, 1
      %v3592 = vadd.f32 %v3590, %v3591
      %v3593 = vmul.f32 %v3552, %v3552
      %v3594 = vmul.f32 %v3553, %v3553
      %v3595 = vmul.f32 %v3554, %v3554
      %v3596 = vmul.f32 %v3555, %v3555
      %v3597 = vmul.f32 %v3556, %v3556
      %v3598 = vmul.f32 %v3557, %v3557
      %v3599 = vmul.f32 %v3558, %v3558
      %v3600 = vmul.f32 %v3559, %v3559
      %v3601 = vmul.f32 %v3560, %v3560
      %v3602 = vmul.f32 %v3561, %v3561
      %v3603 = vmul.f32 %v3562, %v3562
      %v3604 = vmul.f32 %v3563, %v3563
      %v3605 = vmul.f32 %v3564, %v3564
      %v3606 = vmul.f32 %v3565, %v3565
      %v3607 = vmul.f32 %v3566, %v3566
      %v3608 = vmul.f32 %v3567, %v3567
      %v3609 = vmul.f32 %v3568, %v3568
      %v3610 = vmul.f32 %v3569, %v3569
      %v3611 = vadd.f32 %v3593, %v3594
      %v3612 = vadd.f32 %v3611, %v3595
      %v3613 = vadd.f32 %v3612, %v3596
      %v3614 = vadd.f32 %v3613, %v3597
      %v3615 = vadd.f32 %v3614, %v3598
      %v3616 = vadd.f32 %v3615, %v3599
      %v3617 = vadd.f32 %v3616, %v3600
      %v3618 = vadd.f32 %v3617, %v3601
      %v3619 = vadd.f32 %v3618, %v3602
      %v3620 = vadd.f32 %v3619, %v3603
      %v3621 = vadd.f32 %v3620, %v3604
      %v3622 = vadd.f32 %v3621, %v3605
      %v3623 = vadd.f32 %v3622, %v3606
      %v3624 = vadd.f32 %v3623, %v3607
      %v3625 = vadd.f32 %v3624, %v3608
      %v3626 = vadd.f32 %v3625, %v3609
      %v3627 = vadd.f32 %v3626, %v3610
      %v3628 = vrot.slane %v3627, 4
      %v3629 = vadd.f32 %v3627, %v3628
      %v3630 = vrot.slane %v3629, 2
      %v3631 = vadd.f32 %v3629, %v3630
      %v3632 = vrot.slane %v3631, 1
      %v3633 = vadd.f32 %v3631, %v3632
      %v3634 = vmul.f32 %v3592, 0.0069444445
      %v3635 = vmul.f32 %v3633, 0.0069444445
      %v3636 = vmul.f32 %v3634, %v3634
      %v3637 = vsub.f32 %v3635, %v3636
      %v3638 = vmax.f32 %v3637, 0.0
      %v3639 = vsub.f32 %v3552, %v3634
      %v3640 = vsub.f32 %v3553, %v3634
      %v3641 = vsub.f32 %v3554, %v3634
      %v3642 = vsub.f32 %v3555, %v3634
      %v3643 = vsub.f32 %v3556, %v3634
      %v3644 = vsub.f32 %v3557, %v3634
      %v3645 = vsub.f32 %v3558, %v3634
      %v3646 = vsub.f32 %v3559, %v3634
      %v3647 = vsub.f32 %v3560, %v3634
      %v3648 = vsub.f32 %v3561, %v3634
      %v3649 = vsub.f32 %v3562, %v3634
      %v3650 = vsub.f32 %v3563, %v3634
      %v3651 = vsub.f32 %v3564, %v3634
      %v3652 = vsub.f32 %v3565, %v3634
      %v3653 = vsub.f32 %v3566, %v3634
      %v3654 = vsub.f32 %v3567, %v3634
      %v3655 = vsub.f32 %v3568, %v3634
      %v3656 = vsub.f32 %v3569, %v3634
      %v3657 = vadd.f32 %v3638, 1e-05
      %v3658 = vrsqrt.pop %v3657
      %v3659 = vmul.f32 %v3639, %v3658
      %v3660 = vmul.f32 %v3640, %v3658
      %v3661 = vmul.f32 %v3641, %v3658
      %v3662 = vmul.f32 %v3642, %v3658
      %v3663 = vmul.f32 %v3643, %v3658
      %v3664 = vmul.f32 %v3644, %v3658
      %v3665 = vmul.f32 %v3645, %v3658
      %v3666 = vmul.f32 %v3646, %v3658
      %v3667 = vmul.f32 %v3647, %v3658
      %v3668 = vmul.f32 %v3648, %v3658
      %v3669 = vmul.f32 %v3649, %v3658
      %v3670 = vmul.f32 %v3650, %v3658
      %v3671 = vmul.f32 %v3651, %v3658
      %v3672 = vmul.f32 %v3652, %v3658
      %v3673 = vmul.f32 %v3653, %v3658
      %v3674 = vmul.f32 %v3654, %v3658
      %v3675 = vmul.f32 %v3655, %v3658
      %v3676 = vmul.f32 %v3656, %v3658
      %v3677 = vpack.c.bf16 %v3660, %v3659
      %v3678 = vpack.c.bf16 %v3662, %v3661
      %v3679 = vpack.c.bf16 %v3664, %v3663
      %v3680 = vpack.c.bf16 %v3666, %v3665
      %v3681 = vpack.c.bf16 %v3668, %v3667
      %v3682 = vpack.c.bf16 %v3670, %v3669
      %v3683 = vpack.c.bf16 %v3672, %v3671
      %v3684 = vpack.c.bf16 %v3674, %v3673
      %v3685 = vpack.c.bf16 %v3676, %v3675
      %v3686 = vld [vmem:[%s7] sm:$0xff]
      %v3687 = vld [vmem:[%s7 + $0x8] sm:$0xff]
      %v3688 = vld [vmem:[%s7 + $0x10] sm:$0xff]
      %v3689 = vld [vmem:[%s7 + $0x18] sm:$0xff]
      %v3690 = vld [vmem:[%s7 + $0x20] sm:$0xff]
      %v3691 = vld [vmem:[%s7 + $0x28] sm:$0xff]
      %v3692 = vld [vmem:[%s7 + $0x30] sm:$0xff]
      %v3693 = vld [vmem:[%s7 + $0x38] sm:$0xff]
      %v3694 = vld [vmem:[%s7 + $0x40] sm:$0xff]
      %v3695 = vld [vmem:[%s7 + $0x48] sm:$0xff]
      %v3696 = vld [vmem:[%s7 + $0x50] sm:$0xff]
      %v3697 = vld [vmem:[%s7 + $0x58] sm:$0xff]
      %v3698 = vld [vmem:[%s7 + $0x60] sm:$0xff]
      %v3699 = vld [vmem:[%s7 + $0x68] sm:$0xff]
      %v3700 = vld [vmem:[%s7 + $0x70] sm:$0xff]
      %v3701 = vld [vmem:[%s7 + $0x78] sm:$0xff]
      %s3702 = scalar_lea.vmem %s7, 128
      %v3703 = vld [vmem:[%s3702] sm:$0xff]
      %v3704 = vld [vmem:[%s3702 + $0x8] sm:$0xff]
      %v3705 = vld [vmem:[%s3702 + $0x10] sm:$0xff]
      %v3706 = vld [vmem:[%s3702 + $0x18] sm:$0xff]
      %v3707 = vld [vmem:[%s3702 + $0x20] sm:$0xff]
      %v3708 = vld [vmem:[%s3702 + $0x28] sm:$0xff]
      %v3709 = vld [vmem:[%s3702 + $0x30] sm:$0xff]
      %v3710 = vld [vmem:[%s3702 + $0x38] sm:$0xff]
      %v3711 = vld [vmem:[%s3702 + $0x40] sm:$0xff]
      %v3712 = vld [vmem:[%s3702 + $0x48] sm:$0xff]
      %v3713 = vld [vmem:[%s3702 + $0x50] sm:$0xff]
      %v3714 = vld [vmem:[%s3702 + $0x58] sm:$0xff]
      %v3715 = vld [vmem:[%s3702 + $0x60] sm:$0xff]
      %v3716 = vld [vmem:[%s3702 + $0x68] sm:$0xff]
      %v3717 = vld [vmem:[%s3702 + $0x70] sm:$0xff]
      %v3718 = vld [vmem:[%s3702 + $0x78] sm:$0xff]
      %vm3722 = vcmask 1045504
      %v3723 = vrot.slane %v3679, 2
      %v3724 = vrot.slane %v3680, 2
      %v3725 = vsel %vm3722, %v3723, %v3724
      %v3726 = vrot.slane %v3681, 2
      %v3727 = vsel %vm3722, %v3724, %v3726
      %v3747 = vunpack.c.l.b16 %v3703
      %v3748 = vunpack.c.h.b16 %v3703
      %v3749 = vunpack.c.l.b16 %v3704
      %v3750 = vunpack.c.h.b16 %v3704
      %v3751 = vunpack.c.l.b16 %v3705
      %v3752 = vunpack.c.h.b16 %v3705
      %v3753 = vunpack.c.l.b16 %v3706
      %v3754 = vunpack.c.h.b16 %v3706
      %v3755 = vunpack.c.l.b16 %v3707
      %v3756 = vunpack.c.h.b16 %v3707
      %v3757 = vunpack.c.l.b16 %v3708
      %v3758 = vunpack.c.h.b16 %v3708
      %v3759 = vunpack.c.l.b16 %v3709
      %v3760 = vunpack.c.h.b16 %v3709
      %v3761 = vunpack.c.l.b16 %v3710
      %v3762 = vunpack.c.h.b16 %v3710
      %v3763 = vunpack.c.l.b16 %v3711
      %v3764 = vunpack.c.h.b16 %v3711
      %v3765 = vunpack.c.l.b16 %v3712
      %v3766 = vunpack.c.h.b16 %v3712
      %v3767 = vunpack.c.l.b16 %v3713
      %v3768 = vunpack.c.h.b16 %v3713
      %v3769 = vunpack.c.l.b16 %v3714
      %v3770 = vunpack.c.h.b16 %v3714
      %v3771 = vunpack.c.l.b16 %v3715
      %v3772 = vunpack.c.h.b16 %v3715
      %v3773 = vunpack.c.l.b16 %v3716
      %v3774 = vunpack.c.h.b16 %v3716
      %v3775 = vunpack.c.l.b16 %v3717
      %v3776 = vunpack.c.h.b16 %v3717
      %v3777 = vunpack.c.l.b16 %v3718
      %v3778 = vunpack.c.h.b16 %v3718
      %v3779 = vpack.c.b16 %v3749, %v3747
      %v3780 = vpack.c.b16 %v3750, %v3748
      %v3781 = vpack.c.b16 %v3753, %v3751
      %v3782 = vpack.c.b16 %v3754, %v3752
      %v3783 = vpack.c.b16 %v3757, %v3755
      %v3784 = vpack.c.b16 %v3758, %v3756
      %v3785 = vpack.c.b16 %v3761, %v3759
      %v3786 = vpack.c.b16 %v3762, %v3760
      %v3787 = vpack.c.b16 %v3765, %v3763
      %v3788 = vpack.c.b16 %v3766, %v3764
      %v3789 = vpack.c.b16 %v3769, %v3767
      %v3790 = vpack.c.b16 %v3770, %v3768
      %v3791 = vpack.c.b16 %v3773, %v3771
      %v3792 = vpack.c.b16 %v3774, %v3772
      %v3793 = vpack.c.b16 %v3777, %v3775
      %v3794 = vpack.c.b16 %v3778, %v3776
      %3811 = vmatprep.subr.bf16.mxu0 %v3780
      %3812 = vmatpush1.bf16.msra.mxu0 %v3779
      %3813 = vmatprep.subr.bf16.mxu0 %v3782
      %3814 = vmatpush1.bf16.msra.mxu0 %v3781
      %3815 = vmatprep.subr.bf16.mxu0 %v3784
      %3816 = vmatpush1.bf16.msra.mxu0 %v3783
      %3817 = vmatprep.subr.bf16.mxu0 %v3786
      %3818 = vmatpush1.bf16.msra.mxu0 %v3785
      %3819 = vmatprep.subr.bf16.mxu0 %v3788
      %3820 = vmatpush1.bf16.msra.mxu0 %v3787
      %3821 = vmatprep.subr.bf16.mxu0 %v3790
      %3822 = vmatpush1.bf16.msra.mxu0 %v3789
      %3823 = vmatprep.subr.bf16.mxu0 %v3792
      %3824 = vmatpush1.bf16.msra.mxu0 %v3791
      %3825 = vmatprep.subr.bf16.mxu0 %v3794
      %3826 = vmatpush1.bf16.msra.mxu0 %v3793
      %3827 = vmatprep.subr.bf16.mxu0 0
      %3828 = vmatpush1.bf16.msra.mxu0 0
      %3829 = vmatprep.subr.bf16.mxu0 0
      %3830 = vmatpush1.bf16.msra.mxu0 0
      %3831 = vmatprep.subr.bf16.mxu0 0
      %3832 = vmatpush1.bf16.msra.mxu0 0
      %3833 = vmatprep.subr.bf16.mxu0 0
      %3834 = vmatpush1.bf16.msra.mxu0 0
      %3835 = vmatprep.subr.bf16.mxu0 0
      %3836 = vmatpush1.bf16.msra.mxu0 0
      %3837 = vmatprep.subr.bf16.mxu0 0
      %3838 = vmatpush1.bf16.msra.mxu0 0
      %3839 = vmatprep.subr.bf16.mxu0 0
      %3840 = vmatpush1.bf16.msra.mxu0 0
      %3841 = vmatprep.subr.bf16.mxu0 0
      %3842 = vmatpush1.bf16.msra.mxu0 0
      %3843 = vmatprep.mubr.bf16.mxu0 0
      %3844 = vmatmul.mubr.bf16.gmra.mrb[0].mxu0 %v3725
      %v3845 = vpop.f32.mrb[0].mxu0
      %v3846 = vadd.f32 0.0, %v3845
      %v3847 = vpop.f32.mrb[0].mxu0
      %v3848 = vadd.f32 0.0, %v3847
      %v3849 = vpop.f32.mrb[0].mxu0
      %v3850 = vadd.f32 0.0, %v3849
      %v3851 = vpop.f32.mrb[0].mxu0
      %v3852 = vadd.f32 0.0, %v3851
      %3853 = vmatprep.mubr.bf16.mxu0 0
      %3854 = vmatmul.mubr.bf16.gmra.mrb[0].mxu0 %v3727
      %v3855 = vpop.f32.mrb[0].mxu0
      %v3856 = vadd.f32 0.0, %v3855
      %v3857 = vpop.f32.mrb[0].mxu0
      %v3858 = vadd.f32 0.0, %v3857
      %v3859 = vpop.f32.mrb[0].mxu0
      %v3860 = vadd.f32 0.0, %v3859
      %v3861 = vpop.f32.mrb[0].mxu0
      %v3862 = vadd.f32 0.0, %v3861
      %3863 = vmatprep.mubr.bf16.mxu0 0
      %3864 = vmatmul.mubr.bf16.gmra.mrb[0].mxu0 %v3726
      %v3865 = vpop.f32.mrb[0].mxu0
      %v3866 = vadd.f32 0.0, %v3865
      %v3867 = vpop.f32.mrb[0].mxu0
      %v3868 = vadd.f32 0.0, %v3867
      %v3869 = vpop.f32.mrb[0].mxu0
      %v3870 = vpop.f32.mrb[0].mxu0
      %3871 = vdwg.mxu0
      %v3888 = vunpack.c.l.b16 %v3686
      %v3889 = vunpack.c.h.b16 %v3686
      %v3890 = vunpack.c.l.b16 %v3687
      %v3891 = vunpack.c.h.b16 %v3687
      %v3892 = vunpack.c.l.b16 %v3688
      %v3893 = vunpack.c.h.b16 %v3688
      %v3894 = vunpack.c.l.b16 %v3689
      %v3895 = vunpack.c.h.b16 %v3689
      %v3896 = vunpack.c.l.b16 %v3690
      %v3897 = vunpack.c.h.b16 %v3690
      %v3898 = vunpack.c.l.b16 %v3691
      %v3899 = vunpack.c.h.b16 %v3691
      %v3900 = vunpack.c.l.b16 %v3692
      %v3901 = vunpack.c.h.b16 %v3692
      %v3902 = vunpack.c.l.b16 %v3693
      %v3903 = vunpack.c.h.b16 %v3693
      %v3904 = vunpack.c.l.b16 %v3694
      %v3905 = vunpack.c.h.b16 %v3694
      %v3906 = vunpack.c.l.b16 %v3695
      %v3907 = vunpack.c.h.b16 %v3695
      %v3908 = vunpack.c.l.b16 %v3696
      %v3909 = vunpack.c.h.b16 %v3696
      %v3910 = vunpack.c.l.b16 %v3697
      %v3911 = vunpack.c.h.b16 %v3697
      %v3912 = vunpack.c.l.b16 %v3698
      %v3913 = vunpack.c.h.b16 %v3698
      %v3914 = vunpack.c.l.b16 %v3699
      %v3915 = vunpack.c.h.b16 %v3699
      %v3916 = vunpack.c.l.b16 %v3700
      %v3917 = vunpack.c.h.b16 %v3700
      %v3918 = vunpack.c.l.b16 %v3701
      %v3919 = vunpack.c.h.b16 %v3701
      %v3920 = vpack.c.b16 %v3890, %v3888
      %v3921 = vpack.c.b16 %v3891, %v3889
      %v3922 = vpack.c.b16 %v3894, %v3892
      %v3923 = vpack.c.b16 %v3895, %v3893
      %v3924 = vpack.c.b16 %v3898, %v3896
      %v3925 = vpack.c.b16 %v3899, %v3897
      %v3926 = vpack.c.b16 %v3902, %v3900
      %v3927 = vpack.c.b16 %v3903, %v3901
      %v3928 = vpack.c.b16 %v3906, %v3904
      %v3929 = vpack.c.b16 %v3907, %v3905
      %v3930 = vpack.c.b16 %v3910, %v3908
      %v3931 = vpack.c.b16 %v3911, %v3909
      %v3932 = vpack.c.b16 %v3914, %v3912
      %v3933 = vpack.c.b16 %v3915, %v3913
      %v3934 = vpack.c.b16 %v3918, %v3916
      %v3935 = vpack.c.b16 %v3919, %v3917
      %3952 = vmatprep.subr.bf16.mxu0 %v3921
      %3953 = vmatpush1.bf16.msra.mxu0 %v3920
      %3954 = vmatprep.subr.bf16.mxu0 %v3923
      %3955 = vmatpush1.bf16.msra.mxu0 %v3922
      %3956 = vmatprep.subr.bf16.mxu0 %v3925
      %3957 = vmatpush1.bf16.msra.mxu0 %v3924
      %3958 = vmatprep.subr.bf16.mxu0 %v3927
      %3959 = vmatpush1.bf16.msra.mxu0 %v3926
      %3960 = vmatprep.subr.bf16.mxu0 %v3929
      %3961 = vmatpush1.bf16.msra.mxu0 %v3928
      %3962 = vmatprep.subr.bf16.mxu0 %v3931
      %3963 = vmatpush1.bf16.msra.mxu0 %v3930
      %3964 = vmatprep.subr.bf16.mxu0 %v3933
      %3965 = vmatpush1.bf16.msra.mxu0 %v3932
      %3966 = vmatprep.subr.bf16.mxu0 %v3935
      %3967 = vmatpush1.bf16.msra.mxu0 %v3934
      %3968 = vmatprep.subr.bf16.mxu0 0
      %3969 = vmatpush1.bf16.msra.mxu0 0
      %3970 = vmatprep.subr.bf16.mxu0 0
      %3971 = vmatpush1.bf16.msra.mxu0 0
      %3972 = vmatprep.subr.bf16.mxu0 0
      %3973 = vmatpush1.bf16.msra.mxu0 0
      %3974 = vmatprep.subr.bf16.mxu0 0
      %3975 = vmatpush1.bf16.msra.mxu0 0
      %3976 = vmatprep.subr.bf16.mxu0 0
      %3977 = vmatpush1.bf16.msra.mxu0 0
      %3978 = vmatprep.subr.bf16.mxu0 0
      %3979 = vmatpush1.bf16.msra.mxu0 0
      %3980 = vmatprep.subr.bf16.mxu0 0
      %3981 = vmatpush1.bf16.msra.mxu0 0
      %3982 = vmatprep.subr.bf16.mxu0 0
      %3983 = vmatpush1.bf16.msra.mxu0 0
      %3984 = vmatprep.mubr.bf16.mxu0 0
      %3985 = vmatmul.mubr.bf16.gmra.mrb[0].mxu0 %v3677
      %v3986 = vpop.f32.mrb[0].mxu0
      %v3987 = vadd.f32 %v3846, %v3986
      %v3988 = vpop.f32.mrb[0].mxu0
      %v3989 = vadd.f32 %v3848, %v3988
      %v3990 = vpop.f32.mrb[0].mxu0
      %v3991 = vadd.f32 %v3850, %v3990
      %v3992 = vpop.f32.mrb[0].mxu0
      %v3993 = vadd.f32 %v3852, %v3992
      %3994 = vmatprep.mubr.bf16.mxu0 0
      %3995 = vmatmul.mubr.bf16.gmra.mrb[0].mxu0 %v3678
      %v3996 = vpop.f32.mrb[0].mxu0
      %v3997 = vadd.f32 %v3856, %v3996
      %v3998 = vpop.f32.mrb[0].mxu0
      %v3999 = vadd.f32 %v3858, %v3998
      %v4000 = vpop.f32.mrb[0].mxu0
      %v4001 = vadd.f32 %v3860, %v4000
      %v4002 = vpop.f32.mrb[0].mxu0
      %v4003 = vadd.f32 %v3862, %v4002
      %4004 = vmatprep.mubr.bf16.mxu0 0
      %4005 = vmatmul.mubr.bf16.gmra.mrb[0].mxu0 %v3679
      %v4006 = vpop.f32.mrb[0].mxu0
      %v4007 = vadd.f32 %v3866, %v4006
      %v4008 = vpop.f32.mrb[0].mxu0
      %v4009 = vadd.f32 %v3868, %v4008
      %v4010 = vpop.f32.mrb[0].mxu0
      %v4011 = vpop.f32.mrb[0].mxu0
      %4012 = vdwg.mxu0
      %s4013 = scalar_lea.vmem %s7, 256
      %v4014 = vld [vmem:[%s4013] sm:$0xff]
      %v4015 = vld [vmem:[%s4013 + $0x8] sm:$0xff]
      %v4016 = vld [vmem:[%s4013 + $0x10] sm:$0xff]
      %v4017 = vld [vmem:[%s4013 + $0x18] sm:$0xff]
      %v4018 = vld [vmem:[%s4013 + $0x20] sm:$0xff]
      %v4019 = vld [vmem:[%s4013 + $0x28] sm:$0xff]
      %v4020 = vld [vmem:[%s4013 + $0x30] sm:$0xff]
      %v4021 = vld [vmem:[%s4013 + $0x38] sm:$0xff]
      %v4022 = vld [vmem:[%s4013 + $0x40] sm:$0xff]
      %v4023 = vld [vmem:[%s4013 + $0x48] sm:$0xff]
      %v4024 = vld [vmem:[%s4013 + $0x50] sm:$0xff]
      %v4025 = vld [vmem:[%s4013 + $0x58] sm:$0xff]
      %v4026 = vld [vmem:[%s4013 + $0x60] sm:$0xff]
      %v4027 = vld [vmem:[%s4013 + $0x68] sm:$0xff]
      %v4028 = vld [vmem:[%s4013 + $0x70] sm:$0xff]
      %v4029 = vld [vmem:[%s4013 + $0x78] sm:$0xff]
      %vm4032 = vcmask 1043456
      %v4033 = vrot.slane %v3681, 4
      %v4034 = vrot.slane %v3682, 4
      %v4035 = vsel %vm4032, %v4033, %v4034
      %v4036 = vrot.slane %v3683, 4
      %v4037 = vsel %vm4032, %v4034, %v4036
      %v4057 = vunpack.c.l.b16 %v4014
      %v4058 = vunpack.c.h.b16 %v4014
      %v4059 = vunpack.c.l.b16 %v4015
      %v4060 = vunpack.c.h.b16 %v4015
      %v4061 = vunpack.c.l.b16 %v4016
      %v4062 = vunpack.c.h.b16 %v4016
      %v4063 = vunpack.c.l.b16 %v4017
      %v4064 = vunpack.c.h.b16 %v4017
      %v4065 = vunpack.c.l.b16 %v4018
      %v4066 = vunpack.c.h.b16 %v4018
      %v4067 = vunpack.c.l.b16 %v4019
      %v4068 = vunpack.c.h.b16 %v4019
      %v4069 = vunpack.c.l.b16 %v4020
      %v4070 = vunpack.c.h.b16 %v4020
      %v4071 = vunpack.c.l.b16 %v4021
      %v4072 = vunpack.c.h.b16 %v4021
      %v4073 = vunpack.c.l.b16 %v4022
      %v4074 = vunpack.c.h.b16 %v4022
      %v4075 = vunpack.c.l.b16 %v4023
      %v4076 = vunpack.c.h.b16 %v4023
      %v4077 = vunpack.c.l.b16 %v4024
      %v4078 = vunpack.c.h.b16 %v4024
      %v4079 = vunpack.c.l.b16 %v4025
      %v4080 = vunpack.c.h.b16 %v4025
      %v4081 = vunpack.c.l.b16 %v4026
      %v4082 = vunpack.c.h.b16 %v4026
      %v4083 = vunpack.c.l.b16 %v4027
      %v4084 = vunpack.c.h.b16 %v4027
      %v4085 = vunpack.c.l.b16 %v4028
      %v4086 = vunpack.c.h.b16 %v4028
      %v4087 = vunpack.c.l.b16 %v4029
      %v4088 = vunpack.c.h.b16 %v4029
      %v4089 = vpack.c.b16 %v4059, %v4057
      %v4090 = vpack.c.b16 %v4060, %v4058
      %v4091 = vpack.c.b16 %v4063, %v4061
      %v4092 = vpack.c.b16 %v4064, %v4062
      %v4093 = vpack.c.b16 %v4067, %v4065
      %v4094 = vpack.c.b16 %v4068, %v4066
      %v4095 = vpack.c.b16 %v4071, %v4069
      %v4096 = vpack.c.b16 %v4072, %v4070
      %v4097 = vpack.c.b16 %v4075, %v4073
      %v4098 = vpack.c.b16 %v4076, %v4074
      %v4099 = vpack.c.b16 %v4079, %v4077
      %v4100 = vpack.c.b16 %v4080, %v4078
      %v4101 = vpack.c.b16 %v4083, %v4081
      %v4102 = vpack.c.b16 %v4084, %v4082
      %v4103 = vpack.c.b16 %v4087, %v4085
      %v4104 = vpack.c.b16 %v4088, %v4086
      %4121 = vmatprep.subr.bf16.mxu0 %v4090
      %4122 = vmatpush1.bf16.msra.mxu0 %v4089
      %4123 = vmatprep.subr.bf16.mxu0 %v4092
      %4124 = vmatpush1.bf16.msra.mxu0 %v4091
      %4125 = vmatprep.subr.bf16.mxu0 %v4094
      %4126 = vmatpush1.bf16.msra.mxu0 %v4093
      %4127 = vmatprep.subr.bf16.mxu0 %v4096
      %4128 = vmatpush1.bf16.msra.mxu0 %v4095
      %4129 = vmatprep.subr.bf16.mxu0 %v4098
      %4130 = vmatpush1.bf16.msra.mxu0 %v4097
      %4131 = vmatprep.subr.bf16.mxu0 %v4100
      %4132 = vmatpush1.bf16.msra.mxu0 %v4099
      %4133 = vmatprep.subr.bf16.mxu0 %v4102
      %4134 = vmatpush1.bf16.msra.mxu0 %v4101
      %4135 = vmatprep.subr.bf16.mxu0 %v4104
      %4136 = vmatpush1.bf16.msra.mxu0 %v4103
      %4137 = vmatprep.subr.bf16.mxu0 0
      %4138 = vmatpush1.bf16.msra.mxu0 0
      %4139 = vmatprep.subr.bf16.mxu0 0
      %4140 = vmatpush1.bf16.msra.mxu0 0
      %4141 = vmatprep.subr.bf16.mxu0 0
      %4142 = vmatpush1.bf16.msra.mxu0 0
      %4143 = vmatprep.subr.bf16.mxu0 0
      %4144 = vmatpush1.bf16.msra.mxu0 0
      %4145 = vmatprep.subr.bf16.mxu0 0
      %4146 = vmatpush1.bf16.msra.mxu0 0
      %4147 = vmatprep.subr.bf16.mxu0 0
      %4148 = vmatpush1.bf16.msra.mxu0 0
      %4149 = vmatprep.subr.bf16.mxu0 0
      %4150 = vmatpush1.bf16.msra.mxu0 0
      %4151 = vmatprep.subr.bf16.mxu0 0
      %4152 = vmatpush1.bf16.msra.mxu0 0
      %4153 = vmatprep.mubr.bf16.mxu0 0
      %4154 = vmatmul.mubr.bf16.gmra.mrb[0].mxu0 %v4035
      %v4155 = vpop.f32.mrb[0].mxu0
      %v4156 = vadd.f32 0.0, %v4155
      %v4157 = vpop.f32.mrb[0].mxu0
      %v4158 = vadd.f32 0.0, %v4157
      %v4159 = vpop.f32.mrb[0].mxu0
      %v4160 = vadd.f32 0.0, %v4159
      %v4161 = vpop.f32.mrb[0].mxu0
      %v4162 = vadd.f32 0.0, %v4161
      %4163 = vmatprep.mubr.bf16.mxu0 0
      %4164 = vmatmul.mubr.bf16.gmra.mrb[0].mxu0 %v4037
      %v4165 = vpop.f32.mrb[0].mxu0
      %v4166 = vadd.f32 0.0, %v4165
      %v4167 = vpop.f32.mrb[0].mxu0
      %v4168 = vadd.f32 0.0, %v4167
      %v4169 = vpop.f32.mrb[0].mxu0
      %v4170 = vadd.f32 0.0, %v4169
      %v4171 = vpop.f32.mrb[0].mxu0
      %v4172 = vadd.f32 0.0, %v4171
      %4173 = vmatprep.mubr.bf16.mxu0 0
      %4174 = vmatmul.mubr.bf16.gmra.mrb[0].mxu0 %v4036
      %v4175 = vpop.f32.mrb[0].mxu0
      %v4176 = vadd.f32 0.0, %v4175
      %v4177 = vpop.f32.mrb[0].mxu0
      %v4178 = vadd.f32 0.0, %v4177
      %v4179 = vpop.f32.mrb[0].mxu0
      %v4180 = vpop.f32.mrb[0].mxu0
      %4181 = vdwg.mxu0
      %v4182 = vadd.f32 %v3987, %v4156
      %v4183 = vadd.f32 %v3989, %v4158
      %v4184 = vadd.f32 %v3991, %v4160
      %v4185 = vadd.f32 %v3993, %v4162
      %v4186 = vadd.f32 %v3997, %v4166
      %v4187 = vadd.f32 %v3999, %v4168
      %v4188 = vadd.f32 %v4001, %v4170
      %v4189 = vadd.f32 %v4003, %v4172
      %v4190 = vadd.f32 %v4007, %v4176
      %v4191 = vadd.f32 %v4009, %v4178
      %s4192 = scalar_lea.vmem %s7, 384
      %v4193 = vld [vmem:[%s4192] sm:$0xff]
      %v4194 = vld [vmem:[%s4192 + $0x8] sm:$0xff]
      %v4195 = vld [vmem:[%s4192 + $0x10] sm:$0xff]
      %v4196 = vld [vmem:[%s4192 + $0x18] sm:$0xff]
      %v4197 = vld [vmem:[%s4192 + $0x20] sm:$0xff]
      %v4198 = vld [vmem:[%s4192 + $0x28] sm:$0xff]
      %v4199 = vld [vmem:[%s4192 + $0x30] sm:$0xff]
      %v4200 = vld [vmem:[%s4192 + $0x38] sm:$0xff]
      %v4201 = vld [vmem:[%s4192 + $0x40] sm:$0xff]
      %v4202 = vld [vmem:[%s4192 + $0x48] sm:$0xff]
      %v4203 = vld [vmem:[%s4192 + $0x50] sm:$0xff]
      %v4204 = vld [vmem:[%s4192 + $0x58] sm:$0xff]
      %v4205 = vld [vmem:[%s4192 + $0x60] sm:$0xff]
      %v4206 = vld [vmem:[%s4192 + $0x68] sm:$0xff]
      %v4207 = vld [vmem:[%s4192 + $0x70] sm:$0xff]
      %v4208 = vld [vmem:[%s4192 + $0x78] sm:$0xff]
      %vm4211 = vcmask 1041408
      %v4212 = vrot.slane %v3683, 6
      %v4213 = vrot.slane %v3684, 6
      %v4214 = vsel %vm4211, %v4212, %v4213
      %v4215 = vrot.slane %v3685, 6
      %v4216 = vsel %vm4211, %v4213, %v4215
      %v4236 = vunpack.c.l.b16 %v4193
      %v4237 = vunpack.c.h.b16 %v4193
      %v4238 = vunpack.c.l.b16 %v4194
      %v4239 = vunpack.c.h.b16 %v4194
      %v4240 = vunpack.c.l.b16 %v4195
      %v4241 = vunpack.c.h.b16 %v4195
      %v4242 = vunpack.c.l.b16 %v4196
      %v4243 = vunpack.c.h.b16 %v4196
      %v4244 = vunpack.c.l.b16 %v4197
      %v4245 = vunpack.c.h.b16 %v4197
      %v4246 = vunpack.c.l.b16 %v4198
      %v4247 = vunpack.c.h.b16 %v4198
      %v4248 = vunpack.c.l.b16 %v4199
      %v4249 = vunpack.c.h.b16 %v4199
      %v4250 = vunpack.c.l.b16 %v4200
      %v4251 = vunpack.c.h.b16 %v4200
      %v4252 = vunpack.c.l.b16 %v4201
      %v4253 = vunpack.c.h.b16 %v4201
      %v4254 = vunpack.c.l.b16 %v4202
      %v4255 = vunpack.c.h.b16 %v4202
      %v4256 = vunpack.c.l.b16 %v4203
      %v4257 = vunpack.c.h.b16 %v4203
      %v4258 = vunpack.c.l.b16 %v4204
      %v4259 = vunpack.c.h.b16 %v4204
      %v4260 = vunpack.c.l.b16 %v4205
      %v4261 = vunpack.c.h.b16 %v4205
      %v4262 = vunpack.c.l.b16 %v4206
      %v4263 = vunpack.c.h.b16 %v4206
      %v4264 = vunpack.c.l.b16 %v4207
      %v4265 = vunpack.c.h.b16 %v4207
      %v4266 = vunpack.c.l.b16 %v4208
      %v4267 = vunpack.c.h.b16 %v4208
      %v4268 = vpack.c.b16 %v4238, %v4236
      %v4269 = vpack.c.b16 %v4239, %v4237
      %v4270 = vpack.c.b16 %v4242, %v4240
      %v4271 = vpack.c.b16 %v4243, %v4241
      %v4272 = vpack.c.b16 %v4246, %v4244
      %v4273 = vpack.c.b16 %v4247, %v4245
      %v4274 = vpack.c.b16 %v4250, %v4248
      %v4275 = vpack.c.b16 %v4251, %v4249
      %v4276 = vpack.c.b16 %v4254, %v4252
      %v4277 = vpack.c.b16 %v4255, %v4253
      %v4278 = vpack.c.b16 %v4258, %v4256
      %v4279 = vpack.c.b16 %v4259, %v4257
      %v4280 = vpack.c.b16 %v4262, %v4260
      %v4281 = vpack.c.b16 %v4263, %v4261
      %v4282 = vpack.c.b16 %v4266, %v4264
      %v4283 = vpack.c.b16 %v4267, %v4265
      %4300 = vmatprep.subr.bf16.mxu0 %v4269
      %4301 = vmatpush1.bf16.msra.mxu0 %v4268
      %4302 = vmatprep.subr.bf16.mxu0 %v4271
      %4303 = vmatpush1.bf16.msra.mxu0 %v4270
      %4304 = vmatprep.subr.bf16.mxu0 %v4273
      %4305 = vmatpush1.bf16.msra.mxu0 %v4272
      %4306 = vmatprep.subr.bf16.mxu0 %v4275
      %4307 = vmatpush1.bf16.msra.mxu0 %v4274
      %4308 = vmatprep.subr.bf16.mxu0 %v4277
      %4309 = vmatpush1.bf16.msra.mxu0 %v4276
      %4310 = vmatprep.subr.bf16.mxu0 %v4279
      %4311 = vmatpush1.bf16.msra.mxu0 %v4278
      %4312 = vmatprep.subr.bf16.mxu0 %v4281
      %4313 = vmatpush1.bf16.msra.mxu0 %v4280
      %4314 = vmatprep.subr.bf16.mxu0 %v4283
      %4315 = vmatpush1.bf16.msra.mxu0 %v4282
      %4316 = vmatprep.subr.bf16.mxu0 0
      %4317 = vmatpush1.bf16.msra.mxu0 0
      %4318 = vmatprep.subr.bf16.mxu0 0
      %4319 = vmatpush1.bf16.msra.mxu0 0
      %4320 = vmatprep.subr.bf16.mxu0 0
      %4321 = vmatpush1.bf16.msra.mxu0 0
      %4322 = vmatprep.subr.bf16.mxu0 0
      %4323 = vmatpush1.bf16.msra.mxu0 0
      %4324 = vmatprep.subr.bf16.mxu0 0
      %4325 = vmatpush1.bf16.msra.mxu0 0
      %4326 = vmatprep.subr.bf16.mxu0 0
      %4327 = vmatpush1.bf16.msra.mxu0 0
      %4328 = vmatprep.subr.bf16.mxu0 0
      %4329 = vmatpush1.bf16.msra.mxu0 0
      %4330 = vmatprep.subr.bf16.mxu0 0
      %4331 = vmatpush1.bf16.msra.mxu0 0
      %4332 = vmatprep.mubr.bf16.mxu0 0
      %4333 = vmatmul.mubr.bf16.gmra.mrb[0].mxu0 %v4214
      %v4334 = vpop.f32.mrb[0].mxu0
      %v4335 = vadd.f32 0.0, %v4334
      %v4336 = vpop.f32.mrb[0].mxu0
      %v4337 = vadd.f32 0.0, %v4336
      %v4338 = vpop.f32.mrb[0].mxu0
      %v4339 = vadd.f32 0.0, %v4338
      %v4340 = vpop.f32.mrb[0].mxu0
      %v4341 = vadd.f32 0.0, %v4340
      %4342 = vmatprep.mubr.bf16.mxu0 0
      %4343 = vmatmul.mubr.bf16.gmra.mrb[0].mxu0 %v4216
      %v4344 = vpop.f32.mrb[0].mxu0
      %v4345 = vadd.f32 0.0, %v4344
      %v4346 = vpop.f32.mrb[0].mxu0
      %v4347 = vadd.f32 0.0, %v4346
      %v4348 = vpop.f32.mrb[0].mxu0
      %v4349 = vadd.f32 0.0, %v4348
      %v4350 = vpop.f32.mrb[0].mxu0
      %v4351 = vadd.f32 0.0, %v4350
      %4352 = vmatprep.mubr.bf16.mxu0 0
      %4353 = vmatmul.mubr.bf16.gmra.mrb[0].mxu0 %v4215
      %v4354 = vpop.f32.mrb[0].mxu0
      %v4355 = vadd.f32 0.0, %v4354
      %v4356 = vpop.f32.mrb[0].mxu0
      %v4357 = vadd.f32 0.0, %v4356
      %v4358 = vpop.f32.mrb[0].mxu0
      %v4359 = vpop.f32.mrb[0].mxu0
      %4360 = vdwg.mxu0
      %v4361 = vadd.f32 %v4182, %v4335
      %v4362 = vadd.f32 %v4183, %v4337
      %v4363 = vadd.f32 %v4184, %v4339
      %v4364 = vadd.f32 %v4185, %v4341
      %v4365 = vadd.f32 %v4186, %v4345
      %v4366 = vadd.f32 %v4187, %v4347
      %v4367 = vadd.f32 %v4188, %v4349
      %v4368 = vadd.f32 %v4189, %v4351
      %v4369 = vadd.f32 %v4190, %v4355
      %v4370 = vadd.f32 %v4191, %v4357
      %v4371 = vld [vmem:[%s8] sm:$0x3]
      %v4373 = vlaneseq
      %v4374 = vshrl.u32 %v4373, 7
      %v4375 = vsub.s32 0, %v4374
      %v4376 = vrot.slane %v4371, %v4375
      %v4377 = vlaneseq
      %v4378 = vshrl.u32 %v4377, 7
      %v4379 = vsub.s32 1, %v4378
      %v4380 = vrot.slane %v4371, %v4379
      %v4383 = vadd.f32 %v4361, %v4376
      %v4384 = vadd.f32 %v4362, %v4380
      %v4385 = vadd.f32 %v4363, %v4376
      %v4386 = vadd.f32 %v4364, %v4380
      %v4387 = vadd.f32 %v4365, %v4376
      %v4388 = vadd.f32 %v4366, %v4380
      %v4389 = vadd.f32 %v4367, %v4376
      %v4390 = vadd.f32 %v4368, %v4380
      %v4391 = vadd.f32 %v4369, %v4376
      %v4392 = vadd.f32 %v4370, %v4380
      %vm4393 = vcmp.gt.f32.partialorder %v4383, 0.0
      %vm4394 = vcmp.gt.f32.partialorder %v4384, 0.0
      %vm4395 = vcmp.gt.f32.partialorder %v4385, 0.0
      %vm4396 = vcmp.gt.f32.partialorder %v4386, 0.0
      %vm4397 = vcmp.gt.f32.partialorder %v4387, 0.0
      %vm4398 = vcmp.gt.f32.partialorder %v4388, 0.0
      %vm4399 = vcmp.gt.f32.partialorder %v4389, 0.0
      %vm4400 = vcmp.gt.f32.partialorder %v4390, 0.0
      %vm4401 = vcmp.gt.f32.partialorder %v4391, 0.0
      %vm4402 = vcmp.gt.f32.partialorder %v4392, 0.0
      %v4403 = vmul.f32 %v4383, 0.01
      %v4404 = vmul.f32 %v4384, 0.01
      %v4405 = vmul.f32 %v4385, 0.01
      %v4406 = vmul.f32 %v4386, 0.01
      %v4407 = vmul.f32 %v4387, 0.01
      %v4408 = vmul.f32 %v4388, 0.01
      %v4409 = vmul.f32 %v4389, 0.01
      %v4410 = vmul.f32 %v4390, 0.01
      %v4411 = vmul.f32 %v4391, 0.01
      %v4412 = vmul.f32 %v4392, 0.01
      %v4413 = vsel %vm4393, %v4383, %v4403
      %v4414 = vsel %vm4394, %v4384, %v4404
      %v4415 = vsel %vm4395, %v4385, %v4405
      %v4416 = vsel %vm4396, %v4386, %v4406
      %v4417 = vsel %vm4397, %v4387, %v4407
      %v4418 = vsel %vm4398, %v4388, %v4408
      %v4419 = vsel %vm4399, %v4389, %v4409
      %v4420 = vsel %vm4400, %v4390, %v4410
      %v4421 = vsel %vm4401, %v4391, %v4411
      %v4422 = vsel %vm4402, %v4392, %v4412
      %v4423 = vadd.f32 %v4413, %v4415
      %v4424 = vadd.f32 %v4423, %v4417
      %v4425 = vadd.f32 %v4424, %v4419
      %vm4426 = vcmask 1043456
      %v4427 = vsel %vm4426, %v4421, 0.0
      %v4428 = vadd.f32 %v4425, %v4427
      %v4429 = vrot.slane %v4428, 4
      %v4430 = vadd.f32 %v4428, %v4429
      %v4431 = vrot.slane %v4430, 2
      %v4432 = vadd.f32 %v4430, %v4431
      %v4433 = vrot.slane %v4432, 1
      %v4434 = vadd.f32 %v4432, %v4433
      %v4435 = vadd.f32 %v4414, %v4416
      %v4436 = vadd.f32 %v4435, %v4418
      %v4437 = vadd.f32 %v4436, %v4420
      %v4438 = vsel %vm4426, %v4422, 0.0
      %v4439 = vadd.f32 %v4437, %v4438
      %v4440 = vrot.slane %v4439, 4
      %v4441 = vadd.f32 %v4439, %v4440
      %v4442 = vrot.slane %v4441, 2
      %v4443 = vadd.f32 %v4441, %v4442
      %v4444 = vrot.slane %v4443, 1
      %v4445 = vadd.f32 %v4443, %v4444
      %v4446 = vmul.f32 %v4413, %v4413
      %v4447 = vmul.f32 %v4414, %v4414
      %v4448 = vmul.f32 %v4415, %v4415
      %v4449 = vmul.f32 %v4416, %v4416
      %v4450 = vmul.f32 %v4417, %v4417
      %v4451 = vmul.f32 %v4418, %v4418
      %v4452 = vmul.f32 %v4419, %v4419
      %v4453 = vmul.f32 %v4420, %v4420
      %v4454 = vmul.f32 %v4421, %v4421
      %v4455 = vmul.f32 %v4422, %v4422
      %v4456 = vadd.f32 %v4446, %v4448
      %v4457 = vadd.f32 %v4456, %v4450
      %v4458 = vadd.f32 %v4457, %v4452
      %v4459 = vsel %vm4426, %v4454, 0.0
      %v4460 = vadd.f32 %v4458, %v4459
      %v4461 = vrot.slane %v4460, 4
      %v4462 = vadd.f32 %v4460, %v4461
      %v4463 = vrot.slane %v4462, 2
      %v4464 = vadd.f32 %v4462, %v4463
      %v4465 = vrot.slane %v4464, 1
      %v4466 = vadd.f32 %v4464, %v4465
      %v4467 = vadd.f32 %v4447, %v4449
      %v4468 = vadd.f32 %v4467, %v4451
      %v4469 = vadd.f32 %v4468, %v4453
      %v4470 = vsel %vm4426, %v4455, 0.0
      %v4471 = vadd.f32 %v4469, %v4470
      %v4472 = vrot.slane %v4471, 4
      %v4473 = vadd.f32 %v4471, %v4472
      %v4474 = vrot.slane %v4473, 2
      %v4475 = vadd.f32 %v4473, %v4474
      %v4476 = vrot.slane %v4475, 1
      %v4477 = vadd.f32 %v4475, %v4476
      %v4478 = vmul.f32 %v4434, 0.027777778
      %v4479 = vmul.f32 %v4445, 0.027777778
      %v4480 = vmul.f32 %v4466, 0.027777778
      %v4481 = vmul.f32 %v4477, 0.027777778
      %v4482 = vmul.f32 %v4478, %v4478
      %v4483 = vmul.f32 %v4479, %v4479
      %v4484 = vsub.f32 %v4480, %v4482
      %v4485 = vsub.f32 %v4481, %v4483
      %v4486 = vmax.f32 %v4484, 0.0
      %v4487 = vmax.f32 %v4485, 0.0
      %v4488 = vsub.f32 %v4413, %v4478
      %v4489 = vsub.f32 %v4414, %v4479
      %v4490 = vsub.f32 %v4415, %v4478
      %v4491 = vsub.f32 %v4416, %v4479
      %v4492 = vsub.f32 %v4417, %v4478
      %v4493 = vsub.f32 %v4418, %v4479
      %v4494 = vsub.f32 %v4419, %v4478
      %v4495 = vsub.f32 %v4420, %v4479
      %v4496 = vsub.f32 %v4421, %v4478
      %v4497 = vsub.f32 %v4422, %v4479
      %v4498 = vadd.f32 %v4486, 1e-05
      %v4499 = vadd.f32 %v4487, 1e-05
      %v4500 = vrsqrt.pop %v4498
      %v4501 = vrsqrt.pop %v4499
      %v4502 = vmul.f32 %v4488, %v4500
      %v4503 = vmul.f32 %v4489, %v4501
      %v4504 = vmul.f32 %v4490, %v4500
      %v4505 = vmul.f32 %v4491, %v4501
      %v4506 = vmul.f32 %v4492, %v4500
      %v4507 = vmul.f32 %v4493, %v4501
      %v4508 = vmul.f32 %v4494, %v4500
      %v4509 = vmul.f32 %v4495, %v4501
      %v4510 = vmul.f32 %v4496, %v4500
      %v4511 = vmul.f32 %v4497, %v4501
      %v4512 = vld [vmem:[%s9] sm:$0xff]
      %v4513 = vld [vmem:[%s9 + $0x8] sm:$0xff]
      %v4514 = vld [vmem:[%s9 + $0x10] sm:$0xff]
      %v4515 = vld [vmem:[%s9 + $0x18] sm:$0xff]
      %v4516 = vld [vmem:[%s9 + $0x20] sm:$0xff]
      %v4517 = vld [vmem:[%s9 + $0x28] sm:$0xff]
      %v4518 = vld [vmem:[%s9 + $0x30] sm:$0xff]
      %v4519 = vld [vmem:[%s9 + $0x38] sm:$0xff]
      %v4520 = vld [vmem:[%s9 + $0x40] sm:$0xf]
      %v4521 = vld [vmem:[%s9 + $0x48] sm:$0xf]
      %v4522 = vmul.f32 %v4502, %v4512
      %v4523 = vmul.f32 %v4503, %v4513
      %v4524 = vmul.f32 %v4504, %v4514
      %v4525 = vmul.f32 %v4505, %v4515
      %v4526 = vmul.f32 %v4506, %v4516
      %v4527 = vmul.f32 %v4507, %v4517
      %v4528 = vmul.f32 %v4508, %v4518
      %v4529 = vmul.f32 %v4509, %v4519
      %v4530 = vmul.f32 %v4510, %v4520
      %v4531 = vmul.f32 %v4511, %v4521
      %v4532 = vadd.f32 %v4522, %v4524
      %v4533 = vadd.f32 %v4532, %v4526
      %v4534 = vadd.f32 %v4533, %v4528
      %v4535 = vsel %vm4426, %v4530, 0.0
      %v4536 = vadd.f32 %v4534, %v4535
      %v4537 = vrot.slane %v4536, 4
      %v4538 = vadd.f32 %v4536, %v4537
      %v4539 = vrot.slane %v4538, 2
      %v4540 = vadd.f32 %v4538, %v4539
      %v4541 = vrot.slane %v4540, 1
      %v4542 = vadd.f32 %v4540, %v4541
      %v4543 = vadd.f32 %v4523, %v4525
      %v4544 = vadd.f32 %v4543, %v4527
      %v4545 = vadd.f32 %v4544, %v4529
      %v4546 = vsel %vm4426, %v4531, 0.0
      %v4547 = vadd.f32 %v4545, %v4546
      %v4548 = vrot.slane %v4547, 4
      %v4549 = vadd.f32 %v4547, %v4548
      %v4550 = vrot.slane %v4549, 2
      %v4551 = vadd.f32 %v4549, %v4550
      %v4552 = vrot.slane %v4551, 1
      %v4553 = vadd.f32 %v4551, %v4552
      %v4554 = vadd.f32 %v4542, %v4553
      %4555 = vadd.xlane.f32.xlu0 %v4554
      %v4556 = vpop.xlane.xlu0 %4555
      %v4557 = vld [vmem:[#allocation2] sm:$0x1]
      %v4558 = vadd.f32 %v4556, %v4557
      %v4559 = vxor.u32 %v4558, 2147483648
      %v4560 = vmul.f32 %v4559, 1.442695
      %v4561 = vpow.pop %v4560
      %v4562 = vadd.f32 %v4561, 1.0
      %v4563 = vrcp.pop %v4562
      %v4564 = vmul.f32 1.0, %v4563
      %vm4565 = vcmask 0
      %4566 = vst.msk [vmem:[%s384] sm:$0x1] %vm4565, %v4564
      %p4567 = scmp.lt.s32.totalorder %s24, 1
      %s4568 = scalar_select %p4567, %s24, 1
      %s4569 = scalar_lea.vmem %s11, %s4568
      // Predicated region
      $region65: #{discriminator_forward.1} parent=63 // pred_check
        %p4570 = pneg %p278
      $region66: #{discriminator_forward.1} parent=63 // pred_check_branch
        %4572 = sbr.rel (%p4570) target = $region68
      $region67: #{discriminator_forward.1} parent=63 // pred_region
        _
      $region68: #{discriminator_forward.1} parent=63 // pred_fallthru
        _
    $region64: #{discriminator_forward.1} parent=5 // pred_fallthru
      _
    %p4573 = scmp.le.s32.totalorder 2, %s19
    // Predicated region
    $region69: #{discriminator_forward.1} parent=5 // pred_check
      %p4574 = pneg %p4573
    $region70: #{discriminator_forward.1} parent=5 // pred_check_branch
      %4576 = sbr.rel (%p4574) target = $region72
    $region71: #{discriminator_forward.1} parent=5 // pred_region
      %s4577 = ssub.s32 %s19, 2
      // Predicated region
      $region73: #{discriminator_forward.1} parent=71 // pred_check
        %p4578 = pneg %p284
      $region74: #{discriminator_forward.1} parent=71 // pred_check_branch
        %4580 = sbr.rel (%p4578) target = $region76
      $region75: #{discriminator_forward.1} parent=71 // pred_region
        %p4581 = scmp.lt.s32.totalorder %s25, 1
        %s4582 = scalar_select %p4581, %s25, 1
        %s4583 = scalar_lea.vmem %s11, %s4582
      $region76: #{discriminator_forward.1} parent=71 // pred_fallthru
        _
    $region72: #{discriminator_forward.1} parent=5 // pred_fallthru
      _
  $region6: #{discriminator_forward.1} parent=0 // loop_footer
    %s23 = sadd.s32 1, %s19
  $region7: #{discriminator_forward.1} parent=0 // loop_footer_branch
    %18 = sbr.rel target = $region3
  $region8: #{discriminator_forward.1} parent=0 // loop_exit
    _

</llo_original>
